<compile_context>
chip_gen: v7x
topology: tpu7x:2x2x1
jax: 0.10.0
libtpu: 0.0.40
codegen_flags: <defaults>
</compile_context>

<pallas_src>
import numpy as np
import jax
import jax.numpy as jnp
from jax.experimental import pallas as pl
from jax.experimental.pallas import tpu as pltpu


# ----------------------------------------------------------------------------- kernel
def rnn_forward_kernel(
    x_ref, m_ref, tid_ref,
    wh_ref, bh_ref, wc_ref, bc_ref,
    memwih_ref, bgate_ref, embproj_ref, whh_ref,
    trep_w_ref, trep_b_ref,
    mrep_w_ref, mrep_b_ref,
    repr_w_ref, repr_b_ref,
    memout_w_ref, memout_b_ref,
    textout_w_ref, textout_b_ref,
    om_val_ref, ot_ref,
    om_scr, ot_scr,
):
    f32 = jnp.float32
    H = om_scr.shape[1]          # hidden size (per chain)
    ML = om_scr.shape[0]         # mem_len
    TL = ot_scr.shape[0]         # text_len
    maxL = m_ref.shape[0]        # fused trip count = max(ML, TL)

    # ---- fused prologue: initial state for BOTH chains in one (1, 2H) row ----
    # lanes [0:H] = mem chain (enc∘init folded in wrapper), [H:2H] = text chain (zeros).
    h_cat = jnp.dot(x_ref[...], wh_ref[...], preferred_element_type=f32) + bh_ref[...]
    c_cat = jnp.dot(x_ref[...], wc_ref[...], preferred_element_type=f32) + bc_ref[...]

    # ---- batched input projection for the mem chain, already in stacked-gate layout ----
    # columns: [i_m, i_t, f_m, f_t, g_m, g_t, o_m, o_t]; text positions here hold only
    # the text bias (text input contributions are gathered per step from embproj_ref).
    pre_all = (jnp.dot(m_ref[...], memwih_ref[...], preferred_element_type=f32)
               + bgate_ref[...])                                              # (maxL, 8H)

    whh = whh_ref[...]                                                        # (2H, 8H) block-diag

    # ---- fused recurrence: one stacked LSTM step per iteration (mem + text chains) ----
    for s in range(maxL):                                # tiny static trip count -> unrolled
        pre_row = pre_all[s:s + 1, :]
        if s < TL:
            tid = tid_ref[s]
            # gathered row = emb(T[s]) @ txt_wih (pre-projected in wrapper); its mem-gate
            # columns are zero so the add only contributes to the text positions.
            pre_row = pre_row + embproj_ref[pl.ds(tid, 1), :]
        gates = pre_row + jnp.dot(h_cat, whh, preferred_element_type=f32)    # (1, 8H)
        sg = jax.nn.sigmoid(gates)              # one EUP pass covers all i/f/o lanes
        gg = jnp.tanh(gates[:, 4 * H:6 * H])    # one EUP pass covers both g blocks
        i_ = sg[:, 0 * H:2 * H]
        f_ = sg[:, 2 * H:4 * H]
        o_ = sg[:, 6 * H:8 * H]
        c_cat = f_ * c_cat + i_ * gg
        h_cat = o_ * jnp.tanh(c_cat)
        if s < ML:
            om_scr[s:s + 1, :] = h_cat[:, 0:H]          # mem chain hidden state
        if s < TL:
            ot_scr[s:s + 1, :] = h_cat[:, H:2 * H]      # text chain hidden state

    # ---- attention (_attention_fast, B=1, old-torch keepdim semantics) ----
    om = om_scr[...]
    t_rep = jnp.dot(ot_scr[...], trep_w_ref[...], preferred_element_type=f32) + trep_b_ref[...]  # (TL,H)
    m_rep = jnp.dot(om, mrep_w_ref[...], preferred_element_type=f32) + mrep_b_ref[...]           # (ML,H)
    u = jnp.tanh(t_rep[:, None, :] + m_rep[None, :, :])                       # (TL, ML, H)
    scores = jnp.sum(u * repr_w_ref[...][None, :, :], axis=-1) + repr_b_ref[...]  # (TL, ML)
    scores = scores - jnp.max(scores, axis=1, keepdims=True)                  # softmax over mem axis
    e = jnp.exp(scores)
    attn = e * pl.reciprocal(jnp.sum(e, axis=1, keepdims=True), approx=True)
    mt = jnp.dot(attn, m_rep, preferred_element_type=f32)                     # (TL, H)

    # --- trepr: cat(mt, mt) @ W_out  ==  mt @ (W_out[:H] + W_out[H:])  (pre-folded) ---
    ot_ref[...] = (jnp.dot(mt, textout_w_ref[...], preferred_element_type=f32)
                   + textout_b_ref[...])

    # --- mem_out(om) ---
    om_val_ref[...] = (jnp.dot(om, memout_w_ref[...], preferred_element_type=f32)
                       + memout_b_ref[...])


# ----------------------------------------------------------------------------- wrapper
def rnn_forward(X, M, T, p):
    """X: (1,F) f32; M: (1,ML,mem) f32; T: (1,TL) int; params dict (pre-transposed)."""
    ML = M.shape[1]
    TL = T.shape[1]
    H = p["trep_w"].shape[0]
    mem_size = p["memout_w"].shape[1]
    vocab = p["textout_b"].shape[1]
    n_tokens = p["emb_w"].shape[0]
    maxL = max(ML, TL)
    hp = jax.lax.Precision.HIGHEST

    M2 = M[0]                                                       # (ML, mem_size)
    if maxL > ML:                                                   # pad so the fused loop covers TL
        M2 = jnp.concatenate(
            [M2, jnp.zeros((maxL - ML, mem_size), M2.dtype)], axis=0)
    Tid = jnp.clip(T[0].astype(jnp.int32), 0, n_tokens - 1)         # clamp -> no OOB VMEM gather

    def interleave(mem_m, txt_m):
        # (..., 4H) x (..., 4H) -> (..., 8H) with columns [i_m,i_t,f_m,f_t,g_m,g_t,o_m,o_t]
        parts = []
        for k in range(4):
            parts.append(mem_m[..., k * H:(k + 1) * H])
            parts.append(txt_m[..., k * H:(k + 1) * H])
        return jnp.concatenate(parts, axis=-1)

    # --- fold enc∘init_h / enc∘init_c; zero-pad the text half of the stacked state ---
    wh = jnp.dot(p["enc_w"], p["inith_w"], precision=hp)                      # (F, H)
    bh = jnp.dot(p["enc_b"], p["inith_w"], precision=hp) + p["inith_b"]       # (1, H)
    wc = jnp.dot(p["enc_w"], p["initc_w"], precision=hp)
    bc = jnp.dot(p["enc_b"], p["initc_w"], precision=hp) + p["initc_b"]
    zF = jnp.zeros_like(wh)
    z1 = jnp.zeros_like(bh)
    wh_cat = jnp.concatenate([wh, zF], axis=1)                                # (F, 2H)
    bh_cat = jnp.concatenate([bh, z1], axis=1)                                # (1, 2H)
    wc_cat = jnp.concatenate([wc, zF], axis=1)
    bc_cat = jnp.concatenate([bc, z1], axis=1)

    # --- stacked-gate (block-diagonal) LSTM weights ---
    mem_wih_pad = interleave(p["mem_wih"], jnp.zeros_like(p["mem_wih"]))      # (mem_size, 8H)
    b_cat = interleave(p["mem_b"], p["txt_b"])                                # (1, 8H)
    emb_proj = jnp.dot(p["emb_w"], p["txt_wih"], precision=hp)                # (vocab, 4H)
    emb_proj_pad = interleave(jnp.zeros_like(emb_proj), emb_proj)             # (vocab, 8H)
    zH = jnp.zeros((H, 4 * H), jnp.float32)
    whh_cat = jnp.concatenate([interleave(p["mem_whh"], zH),                  # rows 0:H  (mem h)
                               interleave(zH, p["txt_whh"])], axis=0)         # rows H:2H (txt h)

    # Fold cat(mt, mt) @ W into mt @ (W_top + W_bot): distributivity over identical operands.
    textout_w_folded = p["textout_w"][:H, :] + p["textout_w"][H:, :]          # (H, vocab)

    args = (
        X, M2, Tid,
        wh_cat, bh_cat, wc_cat, bc_cat,
        mem_wih_pad, b_cat, emb_proj_pad, whh_cat,
        p["trep_w"], p["trep_b"],
        p["mrep_w"], p["mrep_b"],
        p["repr_w"], p["repr_b"],
        p["memout_w"], p["memout_b"],
        textout_w_folded, p["textout_b"],
    )

    vmem_spec = pl.BlockSpec(memory_space=pltpu.MemorySpace.VMEM)
    smem_spec = pl.BlockSpec(memory_space=pltpu.MemorySpace.SMEM)
    in_specs = [vmem_spec, vmem_spec, smem_spec] + [vmem_spec] * (len(args) - 3)

    out_shape = (
        jax.ShapeDtypeStruct((ML, mem_size), jnp.float32),   # om_val
        jax.ShapeDtypeStruct((TL, vocab), jnp.float32),      # ot
    )

    return pl.pallas_call(
        rnn_forward_kernel,
        out_shape=out_shape,
        in_specs=in_specs,
        out_specs=(vmem_spec, vmem_spec),
        scratch_shapes=[pltpu.VMEM((ML, H), jnp.float32),    # om (mem_rnn hidden states)
                        pltpu.VMEM((TL, H), jnp.float32)],   # ot (text_rnn hidden states)
    )(*args)


# ----------------------------------------------------------------------------- params
def init_params(key, nb_features, emb_size, mem_size, hidden, vocab):
    ks = jax.random.split(key, 12)

    def linear(k, fan_in, fan_out):
        lim = 1.0 / np.sqrt(fan_in)
        kw, kb = jax.random.split(k)
        w = jax.random.uniform(kw, (fan_in, fan_out), jnp.float32, -lim, lim)  # (in,out)
        b = jax.random.uniform(kb, (1, fan_out), jnp.float32, -lim, lim)
        return w, b

    def lstm(k, in_sz, H):
        lim = 1.0 / np.sqrt(H)
        k1, k2, k3, k4 = jax.random.split(k, 4)
        wih = jax.random.uniform(k1, (in_sz, 4 * H), jnp.float32, -lim, lim)   # (in, 4H), gates i,f,g,o
        whh = jax.random.uniform(k2, (H, 4 * H), jnp.float32, -lim, lim)
        b = (jax.random.uniform(k3, (1, 4 * H), jnp.float32, -lim, lim)
             + jax.random.uniform(k4, (1, 4 * H), jnp.float32, -lim, lim))     # b_ih + b_hh
        return wih, whh, b

    p = {}
    p["emb_w"] = jax.random.normal(ks[0], (vocab, emb_size), jnp.float32)
    p["enc_w"], p["enc_b"] = linear(ks[1], nb_features, emb_size)
    p["inith_w"], p["inith_b"] = linear(ks[2], emb_size, hidden)
    p["initc_w"], p["initc_b"] = linear(ks[3], emb_size, hidden)
    p["trep_w"], p["trep_b"] = linear(ks[4], hidden, hidden)
    p["mrep_w"], p["mrep_b"] = linear(ks[5], hidden, hidden)
    lim = 1.0 / np.sqrt(hidden)
    p["repr_w"] = jax.random.uniform(ks[6], (1, hidden), jnp.float32, -lim, lim)  # nn.Linear(H,1).weight
    p["repr_b"] = jax.random.uniform(ks[7], (1, 1), jnp.float32, -lim, lim)
    p["memout_w"], p["memout_b"] = linear(ks[8], hidden, mem_size)
    p["textout_w"], p["textout_b"] = linear(ks[9], 2 * hidden, vocab)
    p["mem_wih"], p["mem_whh"], p["mem_b"] = lstm(ks[10], mem_size, hidden)
    p["txt_wih"], p["txt_whh"], p["txt_b"] = lstm(ks[11], emb_size, hidden)
    return p


# ----------------------------------------------------------------------------- pure-JAX reference
def forward_reference(p, X, M2, Tid):
    H = p["trep_w"].shape[0]
    ML, TL = M2.shape[0], Tid.shape[0]
    V = p["emb_w"].shape[0]

    def lstm_step(x_t, h, c, wih, whh, b):
        g = x_t @ wih + h @ whh + b
        i, f, gg, o = (jax.nn.sigmoid(g[:, :H]), jax.nn.sigmoid(g[:, H:2 * H]),
                       jnp.tanh(g[:, 2 * H:3 * H]), jax.nn.sigmoid(g[:, 3 * H:]))
        c = f * c + i * gg
        return o * jnp.tanh(c), c

    xe = X @ p["enc_w"] + p["enc_b"]
    h, c = xe @ p["inith_w"] + p["inith_b"], xe @ p["initc_w"] + p["initc_b"]
    om = []
    for s in range(ML):
        h, c = lstm_step(M2[s:s + 1], h, c, p["mem_wih"], p["mem_whh"], p["mem_b"])
        om.append(h)
    om = jnp.concatenate(om, 0)

    onehot = (Tid == jnp.arange(V)[None, :]).astype(jnp.float32)
    t_emb = onehot @ p["emb_w"]
    ht = jnp.zeros((1, H)); ct = jnp.zeros((1, H)); ot = []
    for s in range(TL):
        ht, ct = lstm_step(t_emb[s:s + 1], ht, ct, p["txt_wih"], p["txt_whh"], p["txt_b"])
        ot.append(ht)
    ot = jnp.concatenate(ot, 0)

    t_rep = ot @ p["trep_w"] + p["trep_b"]
    m_rep = om @ p["mrep_w"] + p["mrep_b"]
    u = jnp.tanh(t_rep[:, None, :] + m_rep[None, :, :])
    scores = jnp.sum(u * p["repr_w"][None, :, :], axis=-1) + p["repr_b"]
    attn = jax.nn.softmax(scores, axis=1)
    mt = attn @ m_rep
    ot_out = jnp.concatenate([mt, mt], 1) @ p["textout_w"] + p["textout_b"]
    om_val = om @ p["memout_w"] + p["memout_b"]
    return om_val, ot_out


# ----------------------------------------------------------------------------- main
if __name__ == "__main__":
    nb_features, emb_size, mem_size, hidden, vocab = 2, 50, 30, 32, 10
    ML, TL = 10, 8   # mem_len, text_len (batch = 1)

    key = jax.random.PRNGKey(0)
    kp, kx, km, kt = jax.random.split(key, 4)
    params = init_params(kp, nb_features, emb_size, mem_size, hidden, vocab)

    X = jax.random.normal(kx, (1, nb_features), jnp.float32)
    M = jax.random.normal(km, (1, ML, mem_size), jnp.float32)
    T = jax.random.randint(kt, (1, TL), 0, vocab, jnp.int32)

    om_val, ot = jax.block_until_ready(rnn_forward(X, M, T, params))

    om_ref, ot_ref = forward_reference(params, X, M[0], T[0].reshape(TL, 1))
    np.testing.assert_allclose(np.asarray(om_val), np.asarray(om_ref), rtol=2e-3, atol=2e-3)
    # ot goes through the approx-reciprocal softmax + folded weights -> slightly looser.
    np.testing.assert_allclose(np.asarray(ot), np.asarray(ot_ref), rtol=5e-3, atol=5e-3)

    print("KERNEL_OK")
</pallas_src>

<mosaic_0001>
module attributes {stable_mosaic.version = 11 : i64} {
  func.func @rnn_forward_kernel(%arg0: memref<1x2xf32, #tpu.memory_space<vmem>>, %arg1: memref<10x30xf32, #tpu.memory_space<vmem>>, %arg2: memref<8xi32, #tpu.memory_space<smem>>, %arg3: memref<2x64xf32, #tpu.memory_space<vmem>>, %arg4: memref<1x64xf32, #tpu.memory_space<vmem>>, %arg5: memref<2x64xf32, #tpu.memory_space<vmem>>, %arg6: memref<1x64xf32, #tpu.memory_space<vmem>>, %arg7: memref<30x256xf32, #tpu.memory_space<vmem>>, %arg8: memref<1x256xf32, #tpu.memory_space<vmem>>, %arg9: memref<10x256xf32, #tpu.memory_space<vmem>>, %arg10: memref<64x256xf32, #tpu.memory_space<vmem>>, %arg11: memref<32x32xf32, #tpu.memory_space<vmem>>, %arg12: memref<1x32xf32, #tpu.memory_space<vmem>>, %arg13: memref<32x32xf32, #tpu.memory_space<vmem>>, %arg14: memref<1x32xf32, #tpu.memory_space<vmem>>, %arg15: memref<1x32xf32, #tpu.memory_space<vmem>>, %arg16: memref<1x1xf32, #tpu.memory_space<vmem>>, %arg17: memref<32x30xf32, #tpu.memory_space<vmem>>, %arg18: memref<1x30xf32, #tpu.memory_space<vmem>>, %arg19: memref<32x10xf32, #tpu.memory_space<vmem>>, %arg20: memref<1x10xf32, #tpu.memory_space<vmem>>, %arg21: memref<10x30xf32, #tpu.memory_space<vmem>>, %arg22: memref<8x10xf32, #tpu.memory_space<vmem>>, %arg23: memref<10x32xf32, #tpu.memory_space<vmem>>, %arg24: memref<8x32xf32, #tpu.memory_space<vmem>>) attributes {dimension_semantics = [], scalar_prefetch = 0 : i64, scratch_operands = 2 : i64, tpu.core_type = #tpu.core_type<tc>} {
    %c0 = arith.constant 0 : index
    %c0_0 = arith.constant 0 : index
    %0 = vector.load %arg0[%c0, %c0_0] : memref<1x2xf32, #tpu.memory_space<vmem>>, vector<1x2xf32>
    %c0_1 = arith.constant 0 : index
    %c0_2 = arith.constant 0 : index
    %1 = vector.load %arg3[%c0_1, %c0_2] : memref<2x64xf32, #tpu.memory_space<vmem>>, vector<2x64xf32>
    %cst = arith.constant dense<0.000000e+00> : vector<1x64xf32>
    %2 = tpu.matmul %0, %1, %cst {dimension_numbers = #tpu.dot_dimension_numbers<[1], [0], [0], [1], [0, 0, 1, 1], [], []>} : vector<1x2xf32>, vector<2x64xf32>, vector<1x64xf32> -> vector<1x64xf32>
    %c0_3 = arith.constant 0 : index
    %c0_4 = arith.constant 0 : index
    %3 = vector.load %arg4[%c0_3, %c0_4] : memref<1x64xf32, #tpu.memory_space<vmem>>, vector<1x64xf32>
    %4 = arith.addf %2, %3 : vector<1x64xf32>
    %c0_5 = arith.constant 0 : index
    %c0_6 = arith.constant 0 : index
    %5 = vector.load %arg0[%c0_5, %c0_6] : memref<1x2xf32, #tpu.memory_space<vmem>>, vector<1x2xf32>
    %c0_7 = arith.constant 0 : index
    %c0_8 = arith.constant 0 : index
    %6 = vector.load %arg5[%c0_7, %c0_8] : memref<2x64xf32, #tpu.memory_space<vmem>>, vector<2x64xf32>
    %cst_9 = arith.constant dense<0.000000e+00> : vector<1x64xf32>
    %7 = tpu.matmul %5, %6, %cst_9 {dimension_numbers = #tpu.dot_dimension_numbers<[1], [0], [0], [1], [0, 0, 1, 1], [], []>} : vector<1x2xf32>, vector<2x64xf32>, vector<1x64xf32> -> vector<1x64xf32>
    %c0_10 = arith.constant 0 : index
    %c0_11 = arith.constant 0 : index
    %8 = vector.load %arg6[%c0_10, %c0_11] : memref<1x64xf32, #tpu.memory_space<vmem>>, vector<1x64xf32>
    %9 = arith.addf %7, %8 : vector<1x64xf32>
    %c0_12 = arith.constant 0 : index
    %c0_13 = arith.constant 0 : index
    %10 = vector.load %arg1[%c0_12, %c0_13] : memref<10x30xf32, #tpu.memory_space<vmem>>, vector<10x30xf32>
    %c0_14 = arith.constant 0 : index
    %c0_15 = arith.constant 0 : index
    %11 = vector.load %arg7[%c0_14, %c0_15] : memref<30x256xf32, #tpu.memory_space<vmem>>, vector<30x256xf32>
    %cst_16 = arith.constant dense<0.000000e+00> : vector<10x256xf32>
    %12 = tpu.matmul %10, %11, %cst_16 {dimension_numbers = #tpu.dot_dimension_numbers<[1], [0], [0], [1], [0, 0, 1, 1], [], []>} : vector<10x30xf32>, vector<30x256xf32>, vector<10x256xf32> -> vector<10x256xf32>
    %c0_17 = arith.constant 0 : index
    %c0_18 = arith.constant 0 : index
    %13 = vector.load %arg8[%c0_17, %c0_18] : memref<1x256xf32, #tpu.memory_space<vmem>>, vector<1x256xf32>
    %14 = vector.broadcast %13 : vector<1x256xf32> to vector<10x256xf32>
    %15 = arith.addf %12, %14 : vector<10x256xf32>
    %c0_19 = arith.constant 0 : index
    %c0_20 = arith.constant 0 : index
    %16 = vector.load %arg10[%c0_19, %c0_20] : memref<64x256xf32, #tpu.memory_space<vmem>>, vector<64x256xf32>
    %17 = vector.extract_strided_slice %15 {offsets = [0, 0], sizes = [1, 256], strides = [1, 1]} : vector<10x256xf32> to vector<1x256xf32>
    %c0_21 = arith.constant 0 : index
    %18 = memref.load %arg2[%c0_21] : memref<8xi32, #tpu.memory_space<smem>>
    %19 = arith.index_cast %18 : i32 to index
    %c0_22 = arith.constant 0 : index
    %20 = vector.load %arg9[%19, %c0_22] : memref<10x256xf32, #tpu.memory_space<vmem>>, vector<1x256xf32>
    %21 = arith.addf %17, %20 : vector<1x256xf32>
    %cst_23 = arith.constant dense<0.000000e+00> : vector<1x256xf32>
    %22 = tpu.matmul %4, %16, %cst_23 {dimension_numbers = #tpu.dot_dimension_numbers<[1], [0], [0], [1], [0, 0, 1, 1], [], []>} : vector<1x64xf32>, vector<64x256xf32>, vector<1x256xf32> -> vector<1x256xf32>
    %23 = arith.addf %21, %22 : vector<1x256xf32>
    %24 = arith.negf %23 : vector<1x256xf32>
    %25 = math.exp %24 : vector<1x256xf32>
    %cst_24 = arith.constant 1.000000e+00 : f32
    %26 = vector.broadcast %cst_24 : f32 to vector<1x256xf32>
    %27 = arith.addf %26, %25 : vector<1x256xf32>
    %28 = arith.divf %26, %27 : vector<1x256xf32>
    %29 = vector.extract_strided_slice %23 {offsets = [0, 128], sizes = [1, 64], strides = [1, 1]} : vector<1x256xf32> to vector<1x64xf32>
    %30 = math.tanh %29 : vector<1x64xf32>
    %31 = vector.extract_strided_slice %28 {offsets = [0, 0], sizes = [1, 64], strides = [1, 1]} : vector<1x256xf32> to vector<1x64xf32>
    %32 = vector.extract_strided_slice %28 {offsets = [0, 64], sizes = [1, 64], strides = [1, 1]} : vector<1x256xf32> to vector<1x64xf32>
    %33 = vector.extract_strided_slice %28 {offsets = [0, 192], sizes = [1, 64], strides = [1, 1]} : vector<1x256xf32> to vector<1x64xf32>
    %34 = arith.mulf %32, %9 : vector<1x64xf32>
    %35 = arith.mulf %31, %30 : vector<1x64xf32>
    %36 = arith.addf %34, %35 : vector<1x64xf32>
    %37 = math.tanh %36 : vector<1x64xf32>
    %38 = arith.mulf %33, %37 : vector<1x64xf32>
    %39 = vector.extract_strided_slice %38 {offsets = [0, 0], sizes = [1, 32], strides = [1, 1]} : vector<1x64xf32> to vector<1x32xf32>
    %c0_25 = arith.constant 0 : index
    %c0_26 = arith.constant 0 : index
    %40 = vector.load %arg23[%c0_25, %c0_26] : memref<10x32xf32, #tpu.memory_space<vmem>>, vector<1x32xf32>
    tpu.vector_store %arg23[%c0_25, %c0_26], %39 {strides = array<i32>} : memref<10x32xf32, #tpu.memory_space<vmem>>, vector<1x32xf32>,
    %41 = vector.extract_strided_slice %38 {offsets = [0, 32], sizes = [1, 32], strides = [1, 1]} : vector<1x64xf32> to vector<1x32xf32>
    %c0_27 = arith.constant 0 : index
    %c0_28 = arith.constant 0 : index
    %42 = vector.load %arg24[%c0_27, %c0_28] : memref<8x32xf32, #tpu.memory_space<vmem>>, vector<1x32xf32>
    tpu.vector_store %arg24[%c0_27, %c0_28], %41 {strides = array<i32>} : memref<8x32xf32, #tpu.memory_space<vmem>>, vector<1x32xf32>,
    %43 = vector.extract_strided_slice %15 {offsets = [1, 0], sizes = [1, 256], strides = [1, 1]} : vector<10x256xf32> to vector<1x256xf32>
    %c1 = arith.constant 1 : index
    %44 = memref.load %arg2[%c1] : memref<8xi32, #tpu.memory_space<smem>>
    %45 = arith.index_cast %44 : i32 to index
    %c0_29 = arith.constant 0 : index
    %46 = vector.load %arg9[%45, %c0_29] : memref<10x256xf32, #tpu.memory_space<vmem>>, vector<1x256xf32>
    %47 = arith.addf %43, %46 : vector<1x256xf32>
    %cst_30 = arith.constant dense<0.000000e+00> : vector<1x256xf32>
    %48 = tpu.matmul %38, %16, %cst_30 {dimension_numbers = #tpu.dot_dimension_numbers<[1], [0], [0], [1], [0, 0, 1, 1], [], []>} : vector<1x64xf32>, vector<64x256xf32>, vector<1x256xf32> -> vector<1x256xf32>
    %49 = arith.addf %47, %48 : vector<1x256xf32>
    %50 = arith.negf %49 : vector<1x256xf32>
    %51 = math.exp %50 : vector<1x256xf32>
    %cst_31 = arith.constant 1.000000e+00 : f32
    %52 = vector.broadcast %cst_31 : f32 to vector<1x256xf32>
    %53 = arith.addf %52, %51 : vector<1x256xf32>
    %54 = arith.divf %52, %53 : vector<1x256xf32>
    %55 = vector.extract_strided_slice %49 {offsets = [0, 128], sizes = [1, 64], strides = [1, 1]} : vector<1x256xf32> to vector<1x64xf32>
    %56 = math.tanh %55 : vector<1x64xf32>
    %57 = vector.extract_strided_slice %54 {offsets = [0, 0], sizes = [1, 64], strides = [1, 1]} : vector<1x256xf32> to vector<1x64xf32>
    %58 = vector.extract_strided_slice %54 {offsets = [0, 64], sizes = [1, 64], strides = [1, 1]} : vector<1x256xf32> to vector<1x64xf32>
    %59 = vector.extract_strided_slice %54 {offsets = [0, 192], sizes = [1, 64], strides = [1, 1]} : vector<1x256xf32> to vector<1x64xf32>
    %60 = arith.mulf %58, %36 : vector<1x64xf32>
    %61 = arith.mulf %57, %56 : vector<1x64xf32>
    %62 = arith.addf %60, %61 : vector<1x64xf32>
    %63 = math.tanh %62 : vector<1x64xf32>
    %64 = arith.mulf %59, %63 : vector<1x64xf32>
    %65 = vector.extract_strided_slice %64 {offsets = [0, 0], sizes = [1, 32], strides = [1, 1]} : vector<1x64xf32> to vector<1x32xf32>
    %c1_32 = arith.constant 1 : index
    %c0_33 = arith.constant 0 : index
    %66 = vector.load %arg23[%c1_32, %c0_33] : memref<10x32xf32, #tpu.memory_space<vmem>>, vector<1x32xf32>
    tpu.vector_store %arg23[%c1_32, %c0_33], %65 {strides = array<i32>} : memref<10x32xf32, #tpu.memory_space<vmem>>, vector<1x32xf32>,
    %67 = vector.extract_strided_slice %64 {offsets = [0, 32], sizes = [1, 32], strides = [1, 1]} : vector<1x64xf32> to vector<1x32xf32>
    %c1_34 = arith.constant 1 : index
    %c0_35 = arith.constant 0 : index
    %68 = vector.load %arg24[%c1_34, %c0_35] : memref<8x32xf32, #tpu.memory_space<vmem>>, vector<1x32xf32>
    tpu.vector_store %arg24[%c1_34, %c0_35], %67 {strides = array<i32>} : memref<8x32xf32, #tpu.memory_space<vmem>>, vector<1x32xf32>,
    %69 = vector.extract_strided_slice %15 {offsets = [2, 0], sizes = [1, 256], strides = [1, 1]} : vector<10x256xf32> to vector<1x256xf32>
    %c2 = arith.constant 2 : index
    %70 = memref.load %arg2[%c2] : memref<8xi32, #tpu.memory_space<smem>>
    %71 = arith.index_cast %70 : i32 to index
    %c0_36 = arith.constant 0 : index
    %72 = vector.load %arg9[%71, %c0_36] : memref<10x256xf32, #tpu.memory_space<vmem>>, vector<1x256xf32>
    %73 = arith.addf %69, %72 : vector<1x256xf32>
    %cst_37 = arith.constant dense<0.000000e+00> : vector<1x256xf32>
    %74 = tpu.matmul %64, %16, %cst_37 {dimension_numbers = #tpu.dot_dimension_numbers<[1], [0], [0], [1], [0, 0, 1, 1], [], []>} : vector<1x64xf32>, vector<64x256xf32>, vector<1x256xf32> -> vector<1x256xf32>
    %75 = arith.addf %73, %74 : vector<1x256xf32>
    %76 = arith.negf %75 : vector<1x256xf32>
    %77 = math.exp %76 : vector<1x256xf32>
    %cst_38 = arith.constant 1.000000e+00 : f32
    %78 = vector.broadcast %cst_38 : f32 to vector<1x256xf32>
    %79 = arith.addf %78, %77 : vector<1x256xf32>
    %80 = arith.divf %78, %79 : vector<1x256xf32>
    %81 = vector.extract_strided_slice %75 {offsets = [0, 128], sizes = [1, 64], strides = [1, 1]} : vector<1x256xf32> to vector<1x64xf32>
    %82 = math.tanh %81 : vector<1x64xf32>
    %83 = vector.extract_strided_slice %80 {offsets = [0, 0], sizes = [1, 64], strides = [1, 1]} : vector<1x256xf32> to vector<1x64xf32>
    %84 = vector.extract_strided_slice %80 {offsets = [0, 64], sizes = [1, 64], strides = [1, 1]} : vector<1x256xf32> to vector<1x64xf32>
    %85 = vector.extract_strided_slice %80 {offsets = [0, 192], sizes = [1, 64], strides = [1, 1]} : vector<1x256xf32> to vector<1x64xf32>
    %86 = arith.mulf %84, %62 : vector<1x64xf32>
    %87 = arith.mulf %83, %82 : vector<1x64xf32>
    %88 = arith.addf %86, %87 : vector<1x64xf32>
    %89 = math.tanh %88 : vector<1x64xf32>
    %90 = arith.mulf %85, %89 : vector<1x64xf32>
    %91 = vector.extract_strided_slice %90 {offsets = [0, 0], sizes = [1, 32], strides = [1, 1]} : vector<1x64xf32> to vector<1x32xf32>
    %c2_39 = arith.constant 2 : index
    %c0_40 = arith.constant 0 : index
    %92 = vector.load %arg23[%c2_39, %c0_40] : memref<10x32xf32, #tpu.memory_space<vmem>>, vector<1x32xf32>
    tpu.vector_store %arg23[%c2_39, %c0_40], %91 {strides = array<i32>} : memref<10x32xf32, #tpu.memory_space<vmem>>, vector<1x32xf32>,
    %93 = vector.extract_strided_slice %90 {offsets = [0, 32], sizes = [1, 32], strides = [1, 1]} : vector<1x64xf32> to vector<1x32xf32>
    %c2_41 = arith.constant 2 : index
    %c0_42 = arith.constant 0 : index
    %94 = vector.load %arg24[%c2_41, %c0_42] : memref<8x32xf32, #tpu.memory_space<vmem>>, vector<1x32xf32>
    tpu.vector_store %arg24[%c2_41, %c0_42], %93 {strides = array<i32>} : memref<8x32xf32, #tpu.memory_space<vmem>>, vector<1x32xf32>,
    %95 = vector.extract_strided_slice %15 {offsets = [3, 0], sizes = [1, 256], strides = [1, 1]} : vector<10x256xf32> to vector<1x256xf32>
    %c3 = arith.constant 3 : index
    %96 = memref.load %arg2[%c3] : memref<8xi32, #tpu.memory_space<smem>>
    %97 = arith.index_cast %96 : i32 to index
    %c0_43 = arith.constant 0 : index
    %98 = vector.load %arg9[%97, %c0_43] : memref<10x256xf32, #tpu.memory_space<vmem>>, vector<1x256xf32>
    %99 = arith.addf %95, %98 : vector<1x256xf32>
    %cst_44 = arith.constant dense<0.000000e+00> : vector<1x256xf32>
    %100 = tpu.matmul %90, %16, %cst_44 {dimension_numbers = #tpu.dot_dimension_numbers<[1], [0], [0], [1], [0, 0, 1, 1], [], []>} : vector<1x64xf32>, vector<64x256xf32>, vector<1x256xf32> -> vector<1x256xf32>
    %101 = arith.addf %99, %100 : vector<1x256xf32>
    %102 = arith.negf %101 : vector<1x256xf32>
    %103 = math.exp %102 : vector<1x256xf32>
    %cst_45 = arith.constant 1.000000e+00 : f32
    %104 = vector.broadcast %cst_45 : f32 to vector<1x256xf32>
    %105 = arith.addf %104, %103 : vector<1x256xf32>
    %106 = arith.divf %104, %105 : vector<1x256xf32>
    %107 = vector.extract_strided_slice %101 {offsets = [0, 128], sizes = [1, 64], strides = [1, 1]} : vector<1x256xf32> to vector<1x64xf32>
    %108 = math.tanh %107 : vector<1x64xf32>
    %109 = vector.extract_strided_slice %106 {offsets = [0, 0], sizes = [1, 64], strides = [1, 1]} : vector<1x256xf32> to vector<1x64xf32>
    %110 = vector.extract_strided_slice %106 {offsets = [0, 64], sizes = [1, 64], strides = [1, 1]} : vector<1x256xf32> to vector<1x64xf32>
    %111 = vector.extract_strided_slice %106 {offsets = [0, 192], sizes = [1, 64], strides = [1, 1]} : vector<1x256xf32> to vector<1x64xf32>
    %112 = arith.mulf %110, %88 : vector<1x64xf32>
    %113 = arith.mulf %109, %108 : vector<1x64xf32>
    %114 = arith.addf %112, %113 : vector<1x64xf32>
    %115 = math.tanh %114 : vector<1x64xf32>
    %116 = arith.mulf %111, %115 : vector<1x64xf32>
    %117 = vector.extract_strided_slice %116 {offsets = [0, 0], sizes = [1, 32], strides = [1, 1]} : vector<1x64xf32> to vector<1x32xf32>
    %c3_46 = arith.constant 3 : index
    %c0_47 = arith.constant 0 : index
    %118 = vector.load %arg23[%c3_46, %c0_47] : memref<10x32xf32, #tpu.memory_space<vmem>>, vector<1x32xf32>
    tpu.vector_store %arg23[%c3_46, %c0_47], %117 {strides = array<i32>} : memref<10x32xf32, #tpu.memory_space<vmem>>, vector<1x32xf32>,
    %119 = vector.extract_strided_slice %116 {offsets = [0, 32], sizes = [1, 32], strides = [1, 1]} : vector<1x64xf32> to vector<1x32xf32>
    %c3_48 = arith.constant 3 : index
    %c0_49 = arith.constant 0 : index
    %120 = vector.load %arg24[%c3_48, %c0_49] : memref<8x32xf32, #tpu.memory_space<vmem>>, vector<1x32xf32>
    tpu.vector_store %arg24[%c3_48, %c0_49], %119 {strides = array<i32>} : memref<8x32xf32, #tpu.memory_space<vmem>>, vector<1x32xf32>,
    %121 = vector.extract_strided_slice %15 {offsets = [4, 0], sizes = [1, 256], strides = [1, 1]} : vector<10x256xf32> to vector<1x256xf32>
    %c4 = arith.constant 4 : index
    %122 = memref.load %arg2[%c4] : memref<8xi32, #tpu.memory_space<smem>>
    %123 = arith.index_cast %122 : i32 to index
    %c0_50 = arith.constant 0 : index
    %124 = vector.load %arg9[%123, %c0_50] : memref<10x256xf32, #tpu.memory_space<vmem>>, vector<1x256xf32>
    %125 = arith.addf %121, %124 : vector<1x256xf32>
    %cst_51 = arith.constant dense<0.000000e+00> : vector<1x256xf32>
    %126 = tpu.matmul %116, %16, %cst_51 {dimension_numbers = #tpu.dot_dimension_numbers<[1], [0], [0], [1], [0, 0, 1, 1], [], []>} : vector<1x64xf32>, vector<64x256xf32>, vector<1x256xf32> -> vector<1x256xf32>
    %127 = arith.addf %125, %126 : vector<1x256xf32>
    %128 = arith.negf %127 : vector<1x256xf32>
    %129 = math.exp %128 : vector<1x256xf32>
    %cst_52 = arith.constant 1.000000e+00 : f32
    %130 = vector.broadcast %cst_52 : f32 to vector<1x256xf32>
    %131 = arith.addf %130, %129 : vector<1x256xf32>
    %132 = arith.divf %130, %131 : vector<1x256xf32>
    %133 = vector.extract_strided_slice %127 {offsets = [0, 128], sizes = [1, 64], strides = [1, 1]} : vector<1x256xf32> to vector<1x64xf32>
    %134 = math.tanh %133 : vector<1x64xf32>
    %135 = vector.extract_strided_slice %132 {offsets = [0, 0], sizes = [1, 64], strides = [1, 1]} : vector<1x256xf32> to vector<1x64xf32>
    %136 = vector.extract_strided_slice %132 {offsets = [0, 64], sizes = [1, 64], strides = [1, 1]} : vector<1x256xf32> to vector<1x64xf32>
    %137 = vector.extract_strided_slice %132 {offsets = [0, 192], sizes = [1, 64], strides = [1, 1]} : vector<1x256xf32> to vector<1x64xf32>
    %138 = arith.mulf %136, %114 : vector<1x64xf32>
    %139 = arith.mulf %135, %134 : vector<1x64xf32>
    %140 = arith.addf %138, %139 : vector<1x64xf32>
    %141 = math.tanh %140 : vector<1x64xf32>
    %142 = arith.mulf %137, %141 : vector<1x64xf32>
    %143 = vector.extract_strided_slice %142 {offsets = [0, 0], sizes = [1, 32], strides = [1, 1]} : vector<1x64xf32> to vector<1x32xf32>
    %c4_53 = arith.constant 4 : index
    %c0_54 = arith.constant 0 : index
    %144 = vector.load %arg23[%c4_53, %c0_54] : memref<10x32xf32, #tpu.memory_space<vmem>>, vector<1x32xf32>
    tpu.vector_store %arg23[%c4_53, %c0_54], %143 {strides = array<i32>} : memref<10x32xf32, #tpu.memory_space<vmem>>, vector<1x32xf32>,
    %145 = vector.extract_strided_slice %142 {offsets = [0, 32], sizes = [1, 32], strides = [1, 1]} : vector<1x64xf32> to vector<1x32xf32>
    %c4_55 = arith.constant 4 : index
    %c0_56 = arith.constant 0 : index
    %146 = vector.load %arg24[%c4_55, %c0_56] : memref<8x32xf32, #tpu.memory_space<vmem>>, vector<1x32xf32>
    tpu.vector_store %arg24[%c4_55, %c0_56], %145 {strides = array<i32>} : memref<8x32xf32, #tpu.memory_space<vmem>>, vector<1x32xf32>,
    %147 = vector.extract_strided_slice %15 {offsets = [5, 0], sizes = [1, 256], strides = [1, 1]} : vector<10x256xf32> to vector<1x256xf32>
    %c5 = arith.constant 5 : index
    %148 = memref.load %arg2[%c5] : memref<8xi32, #tpu.memory_space<smem>>
    %149 = arith.index_cast %148 : i32 to index
    %c0_57 = arith.constant 0 : index
    %150 = vector.load %arg9[%149, %c0_57] : memref<10x256xf32, #tpu.memory_space<vmem>>, vector<1x256xf32>
    %151 = arith.addf %147, %150 : vector<1x256xf32>
    %cst_58 = arith.constant dense<0.000000e+00> : vector<1x256xf32>
    %152 = tpu.matmul %142, %16, %cst_58 {dimension_numbers = #tpu.dot_dimension_numbers<[1], [0], [0], [1], [0, 0, 1, 1], [], []>} : vector<1x64xf32>, vector<64x256xf32>, vector<1x256xf32> -> vector<1x256xf32>
    %153 = arith.addf %151, %152 : vector<1x256xf32>
    %154 = arith.negf %153 : vector<1x256xf32>
    %155 = math.exp %154 : vector<1x256xf32>
    %cst_59 = arith.constant 1.000000e+00 : f32
    %156 = vector.broadcast %cst_59 : f32 to vector<1x256xf32>
    %157 = arith.addf %156, %155 : vector<1x256xf32>
    %158 = arith.divf %156, %157 : vector<1x256xf32>
    %159 = vector.extract_strided_slice %153 {offsets = [0, 128], sizes = [1, 64], strides = [1, 1]} : vector<1x256xf32> to vector<1x64xf32>
    %160 = math.tanh %159 : vector<1x64xf32>
    %161 = vector.extract_strided_slice %158 {offsets = [0, 0], sizes = [1, 64], strides = [1, 1]} : vector<1x256xf32> to vector<1x64xf32>
    %162 = vector.extract_strided_slice %158 {offsets = [0, 64], sizes = [1, 64], strides = [1, 1]} : vector<1x256xf32> to vector<1x64xf32>
    %163 = vector.extract_strided_slice %158 {offsets = [0, 192], sizes = [1, 64], strides = [1, 1]} : vector<1x256xf32> to vector<1x64xf32>
    %164 = arith.mulf %162, %140 : vector<1x64xf32>
    %165 = arith.mulf %161, %160 : vector<1x64xf32>
    %166 = arith.addf %164, %165 : vector<1x64xf32>
    %167 = math.tanh %166 : vector<1x64xf32>
    %168 = arith.mulf %163, %167 : vector<1x64xf32>
    %169 = vector.extract_strided_slice %168 {offsets = [0, 0], sizes = [1, 32], strides = [1, 1]} : vector<1x64xf32> to vector<1x32xf32>
    %c5_60 = arith.constant 5 : index
    %c0_61 = arith.constant 0 : index
    %170 = vector.load %arg23[%c5_60, %c0_61] : memref<10x32xf32, #tpu.memory_space<vmem>>, vector<1x32xf32>
    tpu.vector_store %arg23[%c5_60, %c0_61], %169 {strides = array<i32>} : memref<10x32xf32, #tpu.memory_space<vmem>>, vector<1x32xf32>,
    %171 = vector.extract_strided_slice %168 {offsets = [0, 32], sizes = [1, 32], strides = [1, 1]} : vector<1x64xf32> to vector<1x32xf32>
    %c5_62 = arith.constant 5 : index
    %c0_63 = arith.constant 0 : index
    %172 = vector.load %arg24[%c5_62, %c0_63] : memref<8x32xf32, #tpu.memory_space<vmem>>, vector<1x32xf32>
    tpu.vector_store %arg24[%c5_62, %c0_63], %171 {strides = array<i32>} : memref<8x32xf32, #tpu.memory_space<vmem>>, vector<1x32xf32>,
    %173 = vector.extract_strided_slice %15 {offsets = [6, 0], sizes = [1, 256], strides = [1, 1]} : vector<10x256xf32> to vector<1x256xf32>
    %c6 = arith.constant 6 : index
    %174 = memref.load %arg2[%c6] : memref<8xi32, #tpu.memory_space<smem>>
    %175 = arith.index_cast %174 : i32 to index
    %c0_64 = arith.constant 0 : index
    %176 = vector.load %arg9[%175, %c0_64] : memref<10x256xf32, #tpu.memory_space<vmem>>, vector<1x256xf32>
    %177 = arith.addf %173, %176 : vector<1x256xf32>
    %cst_65 = arith.constant dense<0.000000e+00> : vector<1x256xf32>
    %178 = tpu.matmul %168, %16, %cst_65 {dimension_numbers = #tpu.dot_dimension_numbers<[1], [0], [0], [1], [0, 0, 1, 1], [], []>} : vector<1x64xf32>, vector<64x256xf32>, vector<1x256xf32> -> vector<1x256xf32>
    %179 = arith.addf %177, %178 : vector<1x256xf32>
    %180 = arith.negf %179 : vector<1x256xf32>
    %181 = math.exp %180 : vector<1x256xf32>
    %cst_66 = arith.constant 1.000000e+00 : f32
    %182 = vector.broadcast %cst_66 : f32 to vector<1x256xf32>
    %183 = arith.addf %182, %181 : vector<1x256xf32>
    %184 = arith.divf %182, %183 : vector<1x256xf32>
    %185 = vector.extract_strided_slice %179 {offsets = [0, 128], sizes = [1, 64], strides = [1, 1]} : vector<1x256xf32> to vector<1x64xf32>
    %186 = math.tanh %185 : vector<1x64xf32>
    %187 = vector.extract_strided_slice %184 {offsets = [0, 0], sizes = [1, 64], strides = [1, 1]} : vector<1x256xf32> to vector<1x64xf32>
    %188 = vector.extract_strided_slice %184 {offsets = [0, 64], sizes = [1, 64], strides = [1, 1]} : vector<1x256xf32> to vector<1x64xf32>
    %189 = vector.extract_strided_slice %184 {offsets = [0, 192], sizes = [1, 64], strides = [1, 1]} : vector<1x256xf32> to vector<1x64xf32>
    %190 = arith.mulf %188, %166 : vector<1x64xf32>
    %191 = arith.mulf %187, %186 : vector<1x64xf32>
    %192 = arith.addf %190, %191 : vector<1x64xf32>
    %193 = math.tanh %192 : vector<1x64xf32>
    %194 = arith.mulf %189, %193 : vector<1x64xf32>
    %195 = vector.extract_strided_slice %194 {offsets = [0, 0], sizes = [1, 32], strides = [1, 1]} : vector<1x64xf32> to vector<1x32xf32>
    %c6_67 = arith.constant 6 : index
    %c0_68 = arith.constant 0 : index
    %196 = vector.load %arg23[%c6_67, %c0_68] : memref<10x32xf32, #tpu.memory_space<vmem>>, vector<1x32xf32>
    tpu.vector_store %arg23[%c6_67, %c0_68], %195 {strides = array<i32>} : memref<10x32xf32, #tpu.memory_space<vmem>>, vector<1x32xf32>,
    %197 = vector.extract_strided_slice %194 {offsets = [0, 32], sizes = [1, 32], strides = [1, 1]} : vector<1x64xf32> to vector<1x32xf32>
    %c6_69 = arith.constant 6 : index
    %c0_70 = arith.constant 0 : index
    %198 = vector.load %arg24[%c6_69, %c0_70] : memref<8x32xf32, #tpu.memory_space<vmem>>, vector<1x32xf32>
    tpu.vector_store %arg24[%c6_69, %c0_70], %197 {strides = array<i32>} : memref<8x32xf32, #tpu.memory_space<vmem>>, vector<1x32xf32>,
    %199 = vector.extract_strided_slice %15 {offsets = [7, 0], sizes = [1, 256], strides = [1, 1]} : vector<10x256xf32> to vector<1x256xf32>
    %c7 = arith.constant 7 : index
    %200 = memref.load %arg2[%c7] : memref<8xi32, #tpu.memory_space<smem>>
    %201 = arith.index_cast %200 : i32 to index
    %c0_71 = arith.constant 0 : index
    %202 = vector.load %arg9[%201, %c0_71] : memref<10x256xf32, #tpu.memory_space<vmem>>, vector<1x256xf32>
    %203 = arith.addf %199, %202 : vector<1x256xf32>
    %cst_72 = arith.constant dense<0.000000e+00> : vector<1x256xf32>
    %204 = tpu.matmul %194, %16, %cst_72 {dimension_numbers = #tpu.dot_dimension_numbers<[1], [0], [0], [1], [0, 0, 1, 1], [], []>} : vector<1x64xf32>, vector<64x256xf32>, vector<1x256xf32> -> vector<1x256xf32>
    %205 = arith.addf %203, %204 : vector<1x256xf32>
    %206 = arith.negf %205 : vector<1x256xf32>
    %207 = math.exp %206 : vector<1x256xf32>
    %cst_73 = arith.constant 1.000000e+00 : f32
    %208 = vector.broadcast %cst_73 : f32 to vector<1x256xf32>
    %209 = arith.addf %208, %207 : vector<1x256xf32>
    %210 = arith.divf %208, %209 : vector<1x256xf32>
    %211 = vector.extract_strided_slice %205 {offsets = [0, 128], sizes = [1, 64], strides = [1, 1]} : vector<1x256xf32> to vector<1x64xf32>
    %212 = math.tanh %211 : vector<1x64xf32>
    %213 = vector.extract_strided_slice %210 {offsets = [0, 0], sizes = [1, 64], strides = [1, 1]} : vector<1x256xf32> to vector<1x64xf32>
    %214 = vector.extract_strided_slice %210 {offsets = [0, 64], sizes = [1, 64], strides = [1, 1]} : vector<1x256xf32> to vector<1x64xf32>
    %215 = vector.extract_strided_slice %210 {offsets = [0, 192], sizes = [1, 64], strides = [1, 1]} : vector<1x256xf32> to vector<1x64xf32>
    %216 = arith.mulf %214, %192 : vector<1x64xf32>
    %217 = arith.mulf %213, %212 : vector<1x64xf32>
    %218 = arith.addf %216, %217 : vector<1x64xf32>
    %219 = math.tanh %218 : vector<1x64xf32>
    %220 = arith.mulf %215, %219 : vector<1x64xf32>
    %221 = vector.extract_strided_slice %220 {offsets = [0, 0], sizes = [1, 32], strides = [1, 1]} : vector<1x64xf32> to vector<1x32xf32>
    %c7_74 = arith.constant 7 : index
    %c0_75 = arith.constant 0 : index
    %222 = vector.load %arg23[%c7_74, %c0_75] : memref<10x32xf32, #tpu.memory_space<vmem>>, vector<1x32xf32>
    tpu.vector_store %arg23[%c7_74, %c0_75], %221 {strides = array<i32>} : memref<10x32xf32, #tpu.memory_space<vmem>>, vector<1x32xf32>,
    %223 = vector.extract_strided_slice %220 {offsets = [0, 32], sizes = [1, 32], strides = [1, 1]} : vector<1x64xf32> to vector<1x32xf32>
    %c7_76 = arith.constant 7 : index
    %c0_77 = arith.constant 0 : index
    %224 = vector.load %arg24[%c7_76, %c0_77] : memref<8x32xf32, #tpu.memory_space<vmem>>, vector<1x32xf32>
    tpu.vector_store %arg24[%c7_76, %c0_77], %223 {strides = array<i32>} : memref<8x32xf32, #tpu.memory_space<vmem>>, vector<1x32xf32>,
    %225 = vector.extract_strided_slice %15 {offsets = [8, 0], sizes = [1, 256], strides = [1, 1]} : vector<10x256xf32> to vector<1x256xf32>
    %cst_78 = arith.constant dense<0.000000e+00> : vector<1x256xf32>
    %226 = tpu.matmul %220, %16, %cst_78 {dimension_numbers = #tpu.dot_dimension_numbers<[1], [0], [0], [1], [0, 0, 1, 1], [], []>} : vector<1x64xf32>, vector<64x256xf32>, vector<1x256xf32> -> vector<1x256xf32>
    %227 = arith.addf %225, %226 : vector<1x256xf32>
    %228 = arith.negf %227 : vector<1x256xf32>
    %229 = math.exp %228 : vector<1x256xf32>
    %cst_79 = arith.constant 1.000000e+00 : f32
    %230 = vector.broadcast %cst_79 : f32 to vector<1x256xf32>
    %231 = arith.addf %230, %229 : vector<1x256xf32>
    %232 = arith.divf %230, %231 : vector<1x256xf32>
    %233 = vector.extract_strided_slice %227 {offsets = [0, 128], sizes = [1, 64], strides = [1, 1]} : vector<1x256xf32> to vector<1x64xf32>
    %234 = math.tanh %233 : vector<1x64xf32>
    %235 = vector.extract_strided_slice %232 {offsets = [0, 0], sizes = [1, 64], strides = [1, 1]} : vector<1x256xf32> to vector<1x64xf32>
    %236 = vector.extract_strided_slice %232 {offsets = [0, 64], sizes = [1, 64], strides = [1, 1]} : vector<1x256xf32> to vector<1x64xf32>
    %237 = vector.extract_strided_slice %232 {offsets = [0, 192], sizes = [1, 64], strides = [1, 1]} : vector<1x256xf32> to vector<1x64xf32>
    %238 = arith.mulf %236, %218 : vector<1x64xf32>
    %239 = arith.mulf %235, %234 : vector<1x64xf32>
    %240 = arith.addf %238, %239 : vector<1x64xf32>
    %241 = math.tanh %240 : vector<1x64xf32>
    %242 = arith.mulf %237, %241 : vector<1x64xf32>
    %243 = vector.extract_strided_slice %242 {offsets = [0, 0], sizes = [1, 32], strides = [1, 1]} : vector<1x64xf32> to vector<1x32xf32>
    %c8 = arith.constant 8 : index
    %c0_80 = arith.constant 0 : index
    %244 = vector.load %arg23[%c8, %c0_80] : memref<10x32xf32, #tpu.memory_space<vmem>>, vector<1x32xf32>
    tpu.vector_store %arg23[%c8, %c0_80], %243 {strides = array<i32>} : memref<10x32xf32, #tpu.memory_space<vmem>>, vector<1x32xf32>,
    %245 = vector.extract_strided_slice %15 {offsets = [9, 0], sizes = [1, 256], strides = [1, 1]} : vector<10x256xf32> to vector<1x256xf32>
    %cst_81 = arith.constant dense<0.000000e+00> : vector<1x256xf32>
    %246 = tpu.matmul %242, %16, %cst_81 {dimension_numbers = #tpu.dot_dimension_numbers<[1], [0], [0], [1], [0, 0, 1, 1], [], []>} : vector<1x64xf32>, vector<64x256xf32>, vector<1x256xf32> -> vector<1x256xf32>
    %247 = arith.addf %245, %246 : vector<1x256xf32>
    %248 = arith.negf %247 : vector<1x256xf32>
    %249 = math.exp %248 : vector<1x256xf32>
    %cst_82 = arith.constant 1.000000e+00 : f32
    %250 = vector.broadcast %cst_82 : f32 to vector<1x256xf32>
    %251 = arith.addf %250, %249 : vector<1x256xf32>
    %252 = arith.divf %250, %251 : vector<1x256xf32>
    %253 = vector.extract_strided_slice %247 {offsets = [0, 128], sizes = [1, 64], strides = [1, 1]} : vector<1x256xf32> to vector<1x64xf32>
    %254 = math.tanh %253 : vector<1x64xf32>
    %255 = vector.extract_strided_slice %252 {offsets = [0, 0], sizes = [1, 64], strides = [1, 1]} : vector<1x256xf32> to vector<1x64xf32>
    %256 = vector.extract_strided_slice %252 {offsets = [0, 64], sizes = [1, 64], strides = [1, 1]} : vector<1x256xf32> to vector<1x64xf32>
    %257 = vector.extract_strided_slice %252 {offsets = [0, 192], sizes = [1, 64], strides = [1, 1]} : vector<1x256xf32> to vector<1x64xf32>
    %258 = arith.mulf %256, %240 : vector<1x64xf32>
    %259 = arith.mulf %255, %254 : vector<1x64xf32>
    %260 = arith.addf %258, %259 : vector<1x64xf32>
    %261 = math.tanh %260 : vector<1x64xf32>
    %262 = arith.mulf %257, %261 : vector<1x64xf32>
    %263 = vector.extract_strided_slice %262 {offsets = [0, 0], sizes = [1, 32], strides = [1, 1]} : vector<1x64xf32> to vector<1x32xf32>
    %c9 = arith.constant 9 : index
    %c0_83 = arith.constant 0 : index
    %264 = vector.load %arg23[%c9, %c0_83] : memref<10x32xf32, #tpu.memory_space<vmem>>, vector<1x32xf32>
    tpu.vector_store %arg23[%c9, %c0_83], %263 {strides = array<i32>} : memref<10x32xf32, #tpu.memory_space<vmem>>, vector<1x32xf32>,
    %c0_84 = arith.constant 0 : index
    %c0_85 = arith.constant 0 : index
    %265 = vector.load %arg23[%c0_84, %c0_85] : memref<10x32xf32, #tpu.memory_space<vmem>>, vector<10x32xf32>
    %c0_86 = arith.constant 0 : index
    %c0_87 = arith.constant 0 : index
    %266 = vector.load %arg24[%c0_86, %c0_87] : memref<8x32xf32, #tpu.memory_space<vmem>>, vector<8x32xf32>
    %c0_88 = arith.constant 0 : index
    %c0_89 = arith.constant 0 : index
    %267 = vector.load %arg11[%c0_88, %c0_89] : memref<32x32xf32, #tpu.memory_space<vmem>>, vector<32x32xf32>
    %cst_90 = arith.constant dense<0.000000e+00> : vector<8x32xf32>
    %268 = tpu.matmul %266, %267, %cst_90 {dimension_numbers = #tpu.dot_dimension_numbers<[1], [0], [0], [1], [0, 0, 1, 1], [], []>} : vector<8x32xf32>, vector<32x32xf32>, vector<8x32xf32> -> vector<8x32xf32>
    %c0_91 = arith.constant 0 : index
    %c0_92 = arith.constant 0 : index
    %269 = vector.load %arg12[%c0_91, %c0_92] : memref<1x32xf32, #tpu.memory_space<vmem>>, vector<1x32xf32>
    %270 = vector.broadcast %269 : vector<1x32xf32> to vector<8x32xf32>
    %271 = arith.addf %268, %270 : vector<8x32xf32>
    %c0_93 = arith.constant 0 : index
    %c0_94 = arith.constant 0 : index
    %272 = vector.load %arg13[%c0_93, %c0_94] : memref<32x32xf32, #tpu.memory_space<vmem>>, vector<32x32xf32>
    %cst_95 = arith.constant dense<0.000000e+00> : vector<10x32xf32>
    %273 = tpu.matmul %265, %272, %cst_95 {dimension_numbers = #tpu.dot_dimension_numbers<[1], [0], [0], [1], [0, 0, 1, 1], [], []>} : vector<10x32xf32>, vector<32x32xf32>, vector<10x32xf32> -> vector<10x32xf32>
    %c0_96 = arith.constant 0 : index
    %c0_97 = arith.constant 0 : index
    %274 = vector.load %arg14[%c0_96, %c0_97] : memref<1x32xf32, #tpu.memory_space<vmem>>, vector<1x32xf32>
    %275 = vector.broadcast %274 : vector<1x32xf32> to vector<10x32xf32>
    %276 = arith.addf %273, %275 : vector<10x32xf32>
    %277 = vector.shape_cast %271 : vector<8x32xf32> to vector<8x1x32xf32>
    %278 = vector.shape_cast %276 : vector<10x32xf32> to vector<1x10x32xf32>
    %279 = vector.broadcast %277 : vector<8x1x32xf32> to vector<8x10x32xf32>
    %280 = vector.broadcast %278 : vector<1x10x32xf32> to vector<8x10x32xf32>
    %281 = arith.addf %279, %280 : vector<8x10x32xf32>
    %282 = math.tanh %281 : vector<8x10x32xf32>
    %c0_98 = arith.constant 0 : index
    %c0_99 = arith.constant 0 : index
    %283 = vector.load %arg15[%c0_98, %c0_99] : memref<1x32xf32, #tpu.memory_space<vmem>>, vector<1x32xf32>
    %284 = vector.shape_cast %283 : vector<1x32xf32> to vector<1x1x32xf32>
    %285 = vector.broadcast %284 : vector<1x1x32xf32> to vector<8x10x32xf32>
    %286 = arith.mulf %282, %285 : vector<8x10x32xf32>
    %cst_100 = arith.constant dense<0.000000e+00> : vector<8x10xf32>
    %287 = vector.multi_reduction <add>, %286, %cst_100 [2] : vector<8x10x32xf32> to vector<8x10xf32>
    %c0_101 = arith.constant 0 : index
    %c0_102 = arith.constant 0 : index
    %288 = vector.load %arg16[%c0_101, %c0_102] : memref<1x1xf32, #tpu.memory_space<vmem>>, vector<1x1xf32>
    %289 = vector.broadcast %288 : vector<1x1xf32> to vector<8x10xf32>
    %290 = arith.addf %287, %289 : vector<8x10xf32>
    %cst_103 = arith.constant dense<0xFF800000> : vector<8xf32>
    %291 = vector.multi_reduction <maximumf>, %290, %cst_103 [1] : vector<8x10xf32> to vector<8xf32>
    %292 = vector.shape_cast %291 : vector<8xf32> to vector<8x1xf32>
    %293 = vector.broadcast %292 : vector<8x1xf32> to vector<8x10xf32>
    %294 = arith.subf %290, %293 : vector<8x10xf32>
    %295 = math.exp %294 : vector<8x10xf32>
    %cst_104 = arith.constant dense<0.000000e+00> : vector<8xf32>
    %296 = vector.multi_reduction <add>, %295, %cst_104 [1] : vector<8x10xf32> to vector<8xf32>
    %297 = vector.shape_cast %296 : vector<8xf32> to vector<8x1xf32>
    %298 = tpu.reciprocal %297 {approx = true} : vector<8x1xf32> -> vector<8x1xf32>
    %299 = vector.broadcast %298 : vector<8x1xf32> to vector<8x10xf32>
    %300 = arith.mulf %295, %299 : vector<8x10xf32>
    %cst_105 = arith.constant dense<0.000000e+00> : vector<8x32xf32>
    %301 = tpu.matmul %300, %276, %cst_105 {dimension_numbers = #tpu.dot_dimension_numbers<[1], [0], [0], [1], [0, 0, 1, 1], [], []>} : vector<8x10xf32>, vector<10x32xf32>, vector<8x32xf32> -> vector<8x32xf32>
    %c0_106 = arith.constant 0 : index
    %c0_107 = arith.constant 0 : index
    %302 = vector.load %arg19[%c0_106, %c0_107] : memref<32x10xf32, #tpu.memory_space<vmem>>, vector<32x10xf32>
    %cst_108 = arith.constant dense<0.000000e+00> : vector<8x10xf32>
    %303 = tpu.matmul %301, %302, %cst_108 {dimension_numbers = #tpu.dot_dimension_numbers<[1], [0], [0], [1], [0, 0, 1, 1], [], []>} : vector<8x32xf32>, vector<32x10xf32>, vector<8x10xf32> -> vector<8x10xf32>
    %c0_109 = arith.constant 0 : index
    %c0_110 = arith.constant 0 : index
    %304 = vector.load %arg20[%c0_109, %c0_110] : memref<1x10xf32, #tpu.memory_space<vmem>>, vector<1x10xf32>
    %305 = vector.broadcast %304 : vector<1x10xf32> to vector<8x10xf32>
    %306 = arith.addf %303, %305 : vector<8x10xf32>
    %c0_111 = arith.constant 0 : index
    %c0_112 = arith.constant 0 : index
    %307 = vector.load %arg22[%c0_111, %c0_112] : memref<8x10xf32, #tpu.memory_space<vmem>>, vector<8x10xf32>
    tpu.vector_store %arg22[%c0_111, %c0_112], %306 {strides = array<i32>} : memref<8x10xf32, #tpu.memory_space<vmem>>, vector<8x10xf32>,
    %c0_113 = arith.constant 0 : index
    %c0_114 = arith.constant 0 : index
    %308 = vector.load %arg17[%c0_113, %c0_114] : memref<32x30xf32, #tpu.memory_space<vmem>>, vector<32x30xf32>
    %cst_115 = arith.constant dense<0.000000e+00> : vector<10x30xf32>
    %309 = tpu.matmul %265, %308, %cst_115 {dimension_numbers = #tpu.dot_dimension_numbers<[1], [0], [0], [1], [0, 0, 1, 1], [], []>} : vector<10x32xf32>, vector<32x30xf32>, vector<10x30xf32> -> vector<10x30xf32>
    %c0_116 = arith.constant 0 : index
    %c0_117 = arith.constant 0 : index
    %310 = vector.load %arg18[%c0_116, %c0_117] : memref<1x30xf32, #tpu.memory_space<vmem>>, vector<1x30xf32>
    %311 = vector.broadcast %310 : vector<1x30xf32> to vector<10x30xf32>
    %312 = arith.addf %309, %311 : vector<10x30xf32>
    %c0_118 = arith.constant 0 : index
    %c0_119 = arith.constant 0 : index
    %313 = vector.load %arg21[%c0_118, %c0_119] : memref<10x30xf32, #tpu.memory_space<vmem>>, vector<10x30xf32>
    tpu.vector_store %arg21[%c0_118, %c0_119], %312 {strides = array<i32>} : memref<10x30xf32, #tpu.memory_space<vmem>>, vector<10x30xf32>,
    return
  }
}

</mosaic_0001>

<llo_original>
// kernel: tpu_custom_call.1
$region0: #{tpu_custom_call.1}
  #allocation0 [shape = 'u32[]', space=smem, size = 0x4, offset = 0x4, fixed_abs, tag = 'smem constant byte address 0x4 - core index']
  #allocation1 [shape = 'u32[144,128]{1,0:T(1,128)}', space=vmem, size = 0x12000, scoped, tag = 'internal scratch']
  #allocation2 [shape = 'f32[10,32]{1,0:T(8,128)}', space=vmem, size = 0x2000, scoped, tag = 'scratch operand']
  #allocation3 [shape = 'f32[8,32]{1,0:T(8,128)}', space=vmem, size = 0x1000, scoped, tag = 'scratch operand']
  #allocation4 [shape = 'f32[1,1]{1,0:T(1,128)S(1)}', space=vmem, size = 0x200, scoped, tag = 'scoped memory for tpu_custom_call.1']
  %s0 = inlined_call_operand.hbm [shape: f32[1,2], index: 0, kind: input, shape index: {}]
  %s1 = inlined_call_operand.hbm [shape: f32[10,30], index: 1, kind: input, shape index: {}]
  %s2 = inlined_call_operand.hbm [shape: s32[8], index: 2, kind: input, shape index: {}]
  %s3 = inlined_call_operand.hbm [shape: f32[2,64], index: 3, kind: input, shape index: {}]
  %s4 = inlined_call_operand.hbm [shape: f32[1,64], index: 4, kind: input, shape index: {}]
  %s5 = inlined_call_operand.hbm [shape: f32[2,64], index: 5, kind: input, shape index: {}]
  %s6 = inlined_call_operand.hbm [shape: f32[1,64], index: 6, kind: input, shape index: {}]
  %s7 = inlined_call_operand.vmem [shape: f32[30,256], index: 7, kind: input, shape index: {}]
  %s8 = inlined_call_operand.hbm [shape: f32[1,256], index: 8, kind: input, shape index: {}]
  %s9 = inlined_call_operand.hbm [shape: f32[10,256], index: 9, kind: input, shape index: {}]
  %s10 = inlined_call_operand.hbm [shape: f32[64,256], index: 10, kind: input, shape index: {}]
  %s11 = inlined_call_operand.hbm [shape: f32[32,32], index: 11, kind: input, shape index: {}]
  %s12 = inlined_call_operand.hbm [shape: f32[1,32], index: 12, kind: input, shape index: {}]
  %s13 = inlined_call_operand.vmem [shape: f32[32,32], index: 13, kind: input, shape index: {}]
  %s14 = inlined_call_operand.hbm [shape: f32[1,32], index: 14, kind: input, shape index: {}]
  %s15 = inlined_call_operand.hbm [shape: f32[1,32], index: 15, kind: input, shape index: {}]
  %s16 = inlined_call_operand.<no memory space> [shape: f32[1,1], index: 16, kind: input, shape index: {}]
  %s17 = inlined_call_operand.hbm [shape: f32[32,30], index: 17, kind: input, shape index: {}]
  %s18 = inlined_call_operand.vmem [shape: f32[1,30], index: 18, kind: input, shape index: {}]
  %s19 = inlined_call_operand.vmem [shape: f32[32,10], index: 19, kind: input, shape index: {}]
  %s20 = inlined_call_operand.vmem [shape: f32[1,10], index: 20, kind: input, shape index: {}]
  %s21 = inlined_call_operand.hbm [shape: f32[10,30], index: 21, kind: output, shape index: {0}]
  %s22 = inlined_call_operand.hbm [shape: f32[8,10], index: 22, kind: output, shape index: {1}]
  %23 = xla_tuple %s21, %s22
  %s24 = sld [smem:[#allocation0]]
  $region162: #{tpu_custom_call.1} parent=0
    _
  %s26 = ssub.s32 1, %s24
  %s27 = scalar_select 0, %s26, %s24
  %v28 = vstv %s16
  %29 = vst [vmem:[#allocation4] sm:$0x1] %v28
  $region1: #{tpu_custom_call.1} parent=0
    #allocation5 [shape = 'u8[512]{0}', space=vmem, size = 0x400, scoped, tag = 'input window, operand 0, single buffered']
    #allocation6 [shape = 's32[1]{0}', space=sflag, size = 0x4, scoped, tag = 'scoped memory for tpu_custom_call.1']
    #allocation7 [shape = 's32[1]{0}', space=sflag, size = 0x4, scoped, tag = 'scoped memory for tpu_custom_call.1']
    #allocation8 [shape = 's32[1]{0}', space=sflag, size = 0x4, scoped, tag = 'scoped memory for tpu_custom_call.1']
    #allocation9 [shape = 'u8[8192]{0}', space=vmem, size = 0x2000, scoped, tag = 'input window, operand 1, single buffered']
    #allocation10 [shape = 's32[1]{0}', space=sflag, size = 0x4, scoped, tag = 'scoped memory for tpu_custom_call.1']
    #allocation11 [shape = 'u8[512]{0}', space=smem, size = 0x200, scoped, tag = 'input window, operand 2, single buffered']
    #allocation12 [shape = 'u8[1024]{0}', space=vmem, size = 0x400, scoped, tag = 'input window, operand 3, single buffered']
    #allocation13 [shape = 'u8[512]{0}', space=vmem, size = 0x400, scoped, tag = 'input window, operand 4, single buffered']
    #allocation14 [shape = 's32[1]{0}', space=sflag, size = 0x4, scoped, tag = 'scoped memory for tpu_custom_call.1']
    #allocation15 [shape = 'u8[1024]{0}', space=vmem, size = 0x400, scoped, tag = 'input window, operand 5, single buffered']
    #allocation16 [shape = 'u8[512]{0}', space=vmem, size = 0x400, scoped, tag = 'input window, operand 6, single buffered']
    #allocation17 [shape = 's32[1]{0}', space=sflag, size = 0x4, scoped, tag = 'scoped memory for tpu_custom_call.1']
    #allocation18 [shape = 'u8[1024]{0}', space=vmem, size = 0x400, scoped, tag = 'input window, operand 8, single buffered']
    #allocation19 [shape = 'u8[16384]{0}', space=vmem, size = 0x4000, scoped, tag = 'input window, operand 9, single buffered']
    #allocation20 [shape = 's32[1]{0}', space=sflag, size = 0x4, scoped, tag = 'scoped memory for tpu_custom_call.1']
    #allocation21 [shape = 'u8[65536]{0}', space=vmem, size = 0x10000, scoped, tag = 'input window, operand 10, single buffered']
    #allocation22 [shape = 'u8[16384]{0}', space=vmem, size = 0x4000, scoped, tag = 'input window, operand 11, single buffered']
    #allocation23 [shape = 's32[1]{0}', space=sflag, size = 0x4, scoped, tag = 'scoped memory for tpu_custom_call.1']
    #allocation24 [shape = 'u8[512]{0}', space=vmem, size = 0x400, scoped, tag = 'input window, operand 12, single buffered']
    #allocation25 [shape = 'u8[512]{0}', space=vmem, size = 0x400, scoped, tag = 'input window, operand 14, single buffered']
    #allocation26 [shape = 's32[1]{0}', space=sflag, size = 0x4, scoped, tag = 'scoped memory for tpu_custom_call.1']
    #allocation27 [shape = 'u8[512]{0}', space=vmem, size = 0x400, scoped, tag = 'input window, operand 15, single buffered']
    #allocation28 [shape = 'u8[16384]{0}', space=vmem, size = 0x4000, scoped, tag = 'input window, operand 17, single buffered']
    #allocation29 [shape = 's32[1]{0}', space=sflag, size = 0x4, scoped, tag = 'scoped memory for tpu_custom_call.1']
    #allocation30 [shape = 'u8[8192]{0}', space=vmem, size = 0x2000, scoped, tag = 'output window, operand 0, single buffered']
    #allocation31 [shape = 'u8[4096]{0}', space=vmem, size = 0x1000, scoped, tag = 'output window, operand 1, single buffered']
    #allocation32 [shape = 's32[1]{0}', space=sflag, size = 0x4, scoped, tag = 'scoped memory for tpu_custom_call.1']
    %30 = vsyncpa [#allocation6], 0
    %31 = vsyncpa [#allocation10], 0
    %32 = vsyncpa [#allocation8], 0
    %33 = vsyncpa [#allocation14], 0
    %34 = vsyncpa [#allocation17], 0
    %35 = vsyncpa [#allocation20], 0
    %36 = vsyncpa [#allocation23], 0
    %37 = vsyncpa [#allocation26], 0
    %38 = vsyncpa [#allocation29], 0
    %39 = vsyncpa [#allocation7], 0
    %40 = vsyncpa [#allocation32], 0
    // Predicated region
    $region2: #{tpu_custom_call.1} parent=1 // pred_check
      _
    $region3: #{tpu_custom_call.1} parent=1 // pred_check_branch
      %42 = sbr.rel (0) target = $region5
    $region4: #{tpu_custom_call.1} parent=1 // pred_region
      %s44 = ssub.s32 16, 16
      %45 = vsyncadd [#allocation6], %s44
      %s47 = sshll.u32 [#allocation5], 4
      %s48 = int_to_ptr.vmem [resolvable:$true] %s47
      %50 = dma.hbm_to_vmem [thread:$0]  %s0, 16, %s48, [#allocation6]
    $region5: #{tpu_custom_call.1} parent=1 // pred_fallthru
      _
    // Predicated region
    $region6: #{tpu_custom_call.1} parent=1 // pred_check
      _
    $region7: #{tpu_custom_call.1} parent=1 // pred_check_branch
      %52 = sbr.rel (0) target = $region9
    $region8: #{tpu_custom_call.1} parent=1 // pred_region
      %s54 = ssub.s32 256, 256
      %55 = vsyncadd [#allocation10], %s54
      %s56 = sshll.u32 [#allocation9], 4
      %s57 = int_to_ptr.vmem [resolvable:$true] %s56
      %62 = dma.hbm_to_vmem [thread:$0]  %s1, 256, %s57, [#allocation10], 128, 128, 8
    $region9: #{tpu_custom_call.1} parent=1 // pred_fallthru
      _
    // Predicated region
    $region10: #{tpu_custom_call.1} parent=1 // pred_check
      _
    $region11: #{tpu_custom_call.1} parent=1 // pred_check_branch
      %64 = sbr.rel (0) target = $region13
    $region12: #{tpu_custom_call.1} parent=1 // pred_region
      %s66 = ssub.s32 16, 16
      %67 = vsyncadd [#allocation8], %s66
      %70 = dma.hbm_to_smem %s2, 16, [#allocation11], [#allocation8]
    $region13: #{tpu_custom_call.1} parent=1 // pred_fallthru
      _
    // Predicated region
    $region14: #{tpu_custom_call.1} parent=1 // pred_check
      _
    $region15: #{tpu_custom_call.1} parent=1 // pred_check_branch
      %72 = sbr.rel (0) target = $region17
    $region16: #{tpu_custom_call.1} parent=1 // pred_region
      %s74 = ssub.s32 32, 32
      %75 = vsyncadd [#allocation10], %s74
      %s77 = sshll.u32 [#allocation12], 4
      %s78 = int_to_ptr.vmem [resolvable:$true] %s77
      %80 = dma.hbm_to_vmem [thread:$0]  %s3, 32, %s78, [#allocation10]
    $region17: #{tpu_custom_call.1} parent=1 // pred_fallthru
      _
    // Predicated region
    $region18: #{tpu_custom_call.1} parent=1 // pred_check
      _
    $region19: #{tpu_custom_call.1} parent=1 // pred_check_branch
      %82 = sbr.rel (0) target = $region21
    $region20: #{tpu_custom_call.1} parent=1 // pred_region
      %s84 = ssub.s32 16, 16
      %85 = vsyncadd [#allocation14], %s84
      %s87 = sshll.u32 [#allocation13], 4
      %s88 = int_to_ptr.vmem [resolvable:$true] %s87
      %90 = dma.hbm_to_vmem [thread:$0]  %s4, 16, %s88, [#allocation14]
    $region21: #{tpu_custom_call.1} parent=1 // pred_fallthru
      _
    // Predicated region
    $region22: #{tpu_custom_call.1} parent=1 // pred_check
      _
    $region23: #{tpu_custom_call.1} parent=1 // pred_check_branch
      %92 = sbr.rel (0) target = $region25
    $region24: #{tpu_custom_call.1} parent=1 // pred_region
      %s94 = ssub.s32 32, 32
      %95 = vsyncadd [#allocation14], %s94
      %s97 = sshll.u32 [#allocation15], 4
      %s98 = int_to_ptr.vmem [resolvable:$true] %s97
      %100 = dma.hbm_to_vmem [thread:$0]  %s5, 32, %s98, [#allocation14]
    $region25: #{tpu_custom_call.1} parent=1 // pred_fallthru
      _
    // Predicated region
    $region26: #{tpu_custom_call.1} parent=1 // pred_check
      _
    $region27: #{tpu_custom_call.1} parent=1 // pred_check_branch
      %102 = sbr.rel (0) target = $region29
    $region28: #{tpu_custom_call.1} parent=1 // pred_region
      %s104 = ssub.s32 16, 16
      %105 = vsyncadd [#allocation17], %s104
      %s107 = sshll.u32 [#allocation16], 4
      %s108 = int_to_ptr.vmem [resolvable:$true] %s107
      %110 = dma.hbm_to_vmem [thread:$0]  %s6, 16, %s108, [#allocation17]
    $region29: #{tpu_custom_call.1} parent=1 // pred_fallthru
      _
    // Predicated region
    $region30: #{tpu_custom_call.1} parent=1 // pred_check
      _
    $region31: #{tpu_custom_call.1} parent=1 // pred_check_branch
      %112 = sbr.rel (0) target = $region33
    $region32: #{tpu_custom_call.1} parent=1 // pred_region
      _
    $region33: #{tpu_custom_call.1} parent=1 // pred_fallthru
      _
    // Predicated region
    $region34: #{tpu_custom_call.1} parent=1 // pred_check
      _
    $region35: #{tpu_custom_call.1} parent=1 // pred_check_branch
      %114 = sbr.rel (0) target = $region37
    $region36: #{tpu_custom_call.1} parent=1 // pred_region
      %s116 = ssub.s32 32, 32
      %117 = vsyncadd [#allocation17], %s116
      %s119 = sshll.u32 [#allocation18], 4
      %s120 = int_to_ptr.vmem [resolvable:$true] %s119
      %122 = dma.hbm_to_vmem [thread:$0]  %s8, 32, %s120, [#allocation17]
    $region37: #{tpu_custom_call.1} parent=1 // pred_fallthru
      _
    // Predicated region
    $region38: #{tpu_custom_call.1} parent=1 // pred_check
      _
    $region39: #{tpu_custom_call.1} parent=1 // pred_check_branch
      %124 = sbr.rel (0) target = $region41
    $region40: #{tpu_custom_call.1} parent=1 // pred_region
      %s126 = ssub.s32 512, 512
      %127 = vsyncadd [#allocation20], %s126
      %s128 = sshll.u32 [#allocation19], 4
      %s129 = int_to_ptr.vmem [resolvable:$true] %s128
      %134 = dma.hbm_to_vmem [thread:$0]  %s9, 512, %s129, [#allocation20], 256, 256, 16
    $region41: #{tpu_custom_call.1} parent=1 // pred_fallthru
      _
    // Predicated region
    $region42: #{tpu_custom_call.1} parent=1 // pred_check
      _
    $region43: #{tpu_custom_call.1} parent=1 // pred_check_branch
      %136 = sbr.rel (0) target = $region45
    $region44: #{tpu_custom_call.1} parent=1 // pred_region
      %s138 = ssub.s32 2048, 2048
      %139 = vsyncadd [#allocation20], %s138
      %s140 = sshll.u32 [#allocation21], 4
      %s141 = int_to_ptr.vmem [resolvable:$true] %s140
      %146 = dma.hbm_to_vmem [thread:$0]  %s10, 2048, %s141, [#allocation20], 256, 256, 16
    $region45: #{tpu_custom_call.1} parent=1 // pred_fallthru
      _
    // Predicated region
    $region46: #{tpu_custom_call.1} parent=1 // pred_check
      _
    $region47: #{tpu_custom_call.1} parent=1 // pred_check_branch
      %148 = sbr.rel (0) target = $region49
    $region48: #{tpu_custom_call.1} parent=1 // pred_region
      %s150 = ssub.s32 512, 512
      %151 = vsyncadd [#allocation23], %s150
      %s152 = sshll.u32 [#allocation22], 4
      %s153 = int_to_ptr.vmem [resolvable:$true] %s152
      %158 = dma.hbm_to_vmem [thread:$0]  %s11, 512, %s153, [#allocation23], 128, 128, 8
    $region49: #{tpu_custom_call.1} parent=1 // pred_fallthru
      _
    // Predicated region
    $region50: #{tpu_custom_call.1} parent=1 // pred_check
      _
    $region51: #{tpu_custom_call.1} parent=1 // pred_check_branch
      %160 = sbr.rel (0) target = $region53
    $region52: #{tpu_custom_call.1} parent=1 // pred_region
      %s162 = ssub.s32 16, 16
      %163 = vsyncadd [#allocation23], %s162
      %s165 = sshll.u32 [#allocation24], 4
      %s166 = int_to_ptr.vmem [resolvable:$true] %s165
      %168 = dma.hbm_to_vmem [thread:$0]  %s12, 16, %s166, [#allocation23]
    $region53: #{tpu_custom_call.1} parent=1 // pred_fallthru
      _
    // Predicated region
    $region54: #{tpu_custom_call.1} parent=1 // pred_check
      _
    $region55: #{tpu_custom_call.1} parent=1 // pred_check_branch
      %170 = sbr.rel (0) target = $region57
    $region56: #{tpu_custom_call.1} parent=1 // pred_region
      _
    $region57: #{tpu_custom_call.1} parent=1 // pred_fallthru
      _
    // Predicated region
    $region58: #{tpu_custom_call.1} parent=1 // pred_check
      _
    $region59: #{tpu_custom_call.1} parent=1 // pred_check_branch
      %172 = sbr.rel (0) target = $region61
    $region60: #{tpu_custom_call.1} parent=1 // pred_region
      %s174 = ssub.s32 16, 16
      %175 = vsyncadd [#allocation26], %s174
      %s177 = sshll.u32 [#allocation25], 4
      %s178 = int_to_ptr.vmem [resolvable:$true] %s177
      %180 = dma.hbm_to_vmem [thread:$0]  %s14, 16, %s178, [#allocation26]
    $region61: #{tpu_custom_call.1} parent=1 // pred_fallthru
      _
    // Predicated region
    $region62: #{tpu_custom_call.1} parent=1 // pred_check
      _
    $region63: #{tpu_custom_call.1} parent=1 // pred_check_branch
      %182 = sbr.rel (0) target = $region65
    $region64: #{tpu_custom_call.1} parent=1 // pred_region
      %s184 = ssub.s32 16, 16
      %185 = vsyncadd [#allocation26], %s184
      %s187 = sshll.u32 [#allocation27], 4
      %s188 = int_to_ptr.vmem [resolvable:$true] %s187
      %190 = dma.hbm_to_vmem [thread:$0]  %s15, 16, %s188, [#allocation26]
    $region65: #{tpu_custom_call.1} parent=1 // pred_fallthru
      _
    // Predicated region
    $region66: #{tpu_custom_call.1} parent=1 // pred_check
      _
    $region67: #{tpu_custom_call.1} parent=1 // pred_check_branch
      %192 = sbr.rel (0) target = $region69
    $region68: #{tpu_custom_call.1} parent=1 // pred_region
      _
    $region69: #{tpu_custom_call.1} parent=1 // pred_fallthru
      _
    // Predicated region
    $region70: #{tpu_custom_call.1} parent=1 // pred_check
      _
    $region71: #{tpu_custom_call.1} parent=1 // pred_check_branch
      %194 = sbr.rel (0) target = $region73
    $region72: #{tpu_custom_call.1} parent=1 // pred_region
      %s196 = ssub.s32 512, 512
      %197 = vsyncadd [#allocation29], %s196
      %s198 = sshll.u32 [#allocation28], 4
      %s199 = int_to_ptr.vmem [resolvable:$true] %s198
      %204 = dma.hbm_to_vmem [thread:$0]  %s17, 512, %s199, [#allocation29], 128, 128, 8
    $region73: #{tpu_custom_call.1} parent=1 // pred_fallthru
      _
    // Predicated region
    $region74: #{tpu_custom_call.1} parent=1 // pred_check
      _
    $region75: #{tpu_custom_call.1} parent=1 // pred_check_branch
      %206 = sbr.rel (0) target = $region77
    $region76: #{tpu_custom_call.1} parent=1 // pred_region
      _
    $region77: #{tpu_custom_call.1} parent=1 // pred_fallthru
      _
    // Predicated region
    $region78: #{tpu_custom_call.1} parent=1 // pred_check
      _
    $region79: #{tpu_custom_call.1} parent=1 // pred_check_branch
      %208 = sbr.rel (0) target = $region81
    $region80: #{tpu_custom_call.1} parent=1 // pred_region
      _
    $region81: #{tpu_custom_call.1} parent=1 // pred_fallthru
      _
    // Predicated region
    $region82: #{tpu_custom_call.1} parent=1 // pred_check
      _
    $region83: #{tpu_custom_call.1} parent=1 // pred_check_branch
      %210 = sbr.rel (0) target = $region85
    $region84: #{tpu_custom_call.1} parent=1 // pred_region
      _
    $region85: #{tpu_custom_call.1} parent=1 // pred_fallthru
      _
    // Predicated region
    $region86: #{tpu_custom_call.1} parent=1 // pred_check
      _
    $region87: #{tpu_custom_call.1} parent=1 // pred_check_branch
      %212 = sbr.rel (0) target = $region89
    $region88: #{tpu_custom_call.1} parent=1 // pred_region
      %213 = dma.done [#allocation6], 16
    $region89: #{tpu_custom_call.1} parent=1 // pred_fallthru
      _
    // Predicated region
    $region90: #{tpu_custom_call.1} parent=1 // pred_check
      _
    $region91: #{tpu_custom_call.1} parent=1 // pred_check_branch
      %215 = sbr.rel (0) target = $region93
    $region92: #{tpu_custom_call.1} parent=1 // pred_region
      %216 = dma.done [#allocation10], 256
    $region93: #{tpu_custom_call.1} parent=1 // pred_fallthru
      _
    // Predicated region
    $region94: #{tpu_custom_call.1} parent=1 // pred_check
      _
    $region95: #{tpu_custom_call.1} parent=1 // pred_check_branch
      %218 = sbr.rel (0) target = $region97
    $region96: #{tpu_custom_call.1} parent=1 // pred_region
      %219 = dma.done [#allocation8], 16
    $region97: #{tpu_custom_call.1} parent=1 // pred_fallthru
      _
    // Predicated region
    $region98: #{tpu_custom_call.1} parent=1 // pred_check
      _
    $region99: #{tpu_custom_call.1} parent=1 // pred_check_branch
      %221 = sbr.rel (0) target = $region101
    $region100: #{tpu_custom_call.1} parent=1 // pred_region
      %222 = dma.done [#allocation10], 32
    $region101: #{tpu_custom_call.1} parent=1 // pred_fallthru
      _
    // Predicated region
    $region102: #{tpu_custom_call.1} parent=1 // pred_check
      _
    $region103: #{tpu_custom_call.1} parent=1 // pred_check_branch
      %224 = sbr.rel (0) target = $region105
    $region104: #{tpu_custom_call.1} parent=1 // pred_region
      %225 = dma.done [#allocation14], 16
    $region105: #{tpu_custom_call.1} parent=1 // pred_fallthru
      _
    // Predicated region
    $region106: #{tpu_custom_call.1} parent=1 // pred_check
      _
    $region107: #{tpu_custom_call.1} parent=1 // pred_check_branch
      %227 = sbr.rel (0) target = $region109
    $region108: #{tpu_custom_call.1} parent=1 // pred_region
      %228 = dma.done [#allocation14], 32
    $region109: #{tpu_custom_call.1} parent=1 // pred_fallthru
      _
    // Predicated region
    $region110: #{tpu_custom_call.1} parent=1 // pred_check
      _
    $region111: #{tpu_custom_call.1} parent=1 // pred_check_branch
      %230 = sbr.rel (0) target = $region113
    $region112: #{tpu_custom_call.1} parent=1 // pred_region
      %231 = dma.done [#allocation17], 16
    $region113: #{tpu_custom_call.1} parent=1 // pred_fallthru
      _
    // Predicated region
    $region114: #{tpu_custom_call.1} parent=1 // pred_check
      _
    $region115: #{tpu_custom_call.1} parent=1 // pred_check_branch
      %233 = sbr.rel (0) target = $region117
    $region116: #{tpu_custom_call.1} parent=1 // pred_region
      %234 = dma.done [#allocation17], 32
    $region117: #{tpu_custom_call.1} parent=1 // pred_fallthru
      _
    // Predicated region
    $region118: #{tpu_custom_call.1} parent=1 // pred_check
      _
    $region119: #{tpu_custom_call.1} parent=1 // pred_check_branch
      %236 = sbr.rel (0) target = $region121
    $region120: #{tpu_custom_call.1} parent=1 // pred_region
      %237 = dma.done [#allocation20], 512
    $region121: #{tpu_custom_call.1} parent=1 // pred_fallthru
      _
    // Predicated region
    $region122: #{tpu_custom_call.1} parent=1 // pred_check
      _
    $region123: #{tpu_custom_call.1} parent=1 // pred_check_branch
      %239 = sbr.rel (0) target = $region125
    $region124: #{tpu_custom_call.1} parent=1 // pred_region
      %240 = dma.done [#allocation20], 2048
    $region125: #{tpu_custom_call.1} parent=1 // pred_fallthru
      _
    // Predicated region
    $region126: #{tpu_custom_call.1} parent=1 // pred_check
      _
    $region127: #{tpu_custom_call.1} parent=1 // pred_check_branch
      %242 = sbr.rel (0) target = $region129
    $region128: #{tpu_custom_call.1} parent=1 // pred_region
      %243 = dma.done [#allocation23], 512
    $region129: #{tpu_custom_call.1} parent=1 // pred_fallthru
      _
    // Predicated region
    $region130: #{tpu_custom_call.1} parent=1 // pred_check
      _
    $region131: #{tpu_custom_call.1} parent=1 // pred_check_branch
      %245 = sbr.rel (0) target = $region133
    $region132: #{tpu_custom_call.1} parent=1 // pred_region
      %246 = dma.done [#allocation23], 16
    $region133: #{tpu_custom_call.1} parent=1 // pred_fallthru
      _
    // Predicated region
    $region134: #{tpu_custom_call.1} parent=1 // pred_check
      _
    $region135: #{tpu_custom_call.1} parent=1 // pred_check_branch
      %248 = sbr.rel (0) target = $region137
    $region136: #{tpu_custom_call.1} parent=1 // pred_region
      %249 = dma.done [#allocation26], 16
    $region137: #{tpu_custom_call.1} parent=1 // pred_fallthru
      _
    // Predicated region
    $region138: #{tpu_custom_call.1} parent=1 // pred_check
      _
    $region139: #{tpu_custom_call.1} parent=1 // pred_check_branch
      %251 = sbr.rel (0) target = $region141
    $region140: #{tpu_custom_call.1} parent=1 // pred_region
      %252 = dma.done [#allocation26], 16
    $region141: #{tpu_custom_call.1} parent=1 // pred_fallthru
      _
    // Predicated region
    $region142: #{tpu_custom_call.1} parent=1 // pred_check
      _
    $region143: #{tpu_custom_call.1} parent=1 // pred_check_branch
      %254 = sbr.rel (0) target = $region145
    $region144: #{tpu_custom_call.1} parent=1 // pred_region
      %255 = dma.done [#allocation29], 512
    $region145: #{tpu_custom_call.1} parent=1 // pred_fallthru
      _
    %256 = sfence
    %v257 = vld [vmem:[#allocation5] sm:$0x1]
    %v258 = vld [vmem:[#allocation12] sm:$0x3]
    %v259 = vld [vmem:[#allocation13] sm:$0x1]
    %vm260 = vcmask 15360
    %v262 = vsel %vm260, %v257, 0
    %vm264 = vcmask 1041408
    %v266 = vsel %vm264, %v258, 0
    %268 = vmatprep.subr.mxu0 0.0
    %269 = vmatpush1.msra.mxu0 %v266
    %270 = vmatprep.subr.mxu0 0.0
    %271 = vmatpush1.msra.mxu0 0.0
    %272 = vmatprep.subr.mxu0 0.0
    %273 = vmatpush1.msra.mxu0 0.0
    %274 = vmatprep.subr.mxu0 0.0
    %275 = vmatpush1.msra.mxu0 0.0
    %276 = vmatprep.subr.mxu0 0.0
    %277 = vmatpush1.msra.mxu0 0.0
    %278 = vmatprep.subr.mxu0 0.0
    %279 = vmatpush1.msra.mxu0 0.0
    %280 = vmatprep.subr.mxu0 0.0
    %281 = vmatpush1.msra.mxu0 0.0
    %282 = vmatprep.subr.mxu0 0.0
    %283 = vmatpush1.msra.mxu0 0.0
    %284 = vmatprep.subr.mxu0 0.0
    %285 = vmatpush1.msra.mxu0 0.0
    %286 = vmatprep.subr.mxu0 0.0
    %287 = vmatpush1.msra.mxu0 0.0
    %288 = vmatprep.subr.mxu0 0.0
    %289 = vmatpush1.msra.mxu0 0.0
    %290 = vmatprep.subr.mxu0 0.0
    %291 = vmatpush1.msra.mxu0 0.0
    %292 = vmatprep.subr.mxu0 0.0
    %293 = vmatpush1.msra.mxu0 0.0
    %294 = vmatprep.subr.mxu0 0.0
    %295 = vmatpush1.msra.mxu0 0.0
    %296 = vmatprep.subr.mxu0 0.0
    %297 = vmatpush1.msra.mxu0 0.0
    %298 = vmatprep.subr.mxu0 0.0
    %299 = vmatpush1.msra.mxu0 0.0
    %300 = vmatprep.subr.mxu0 0.0
    %301 = vmatpush1.msra.mxu0 0.0
    %302 = vmatprep.subr.mxu0 0.0
    %303 = vmatpush1.msra.mxu0 0.0
    %304 = vmatprep.subr.mxu0 0.0
    %305 = vmatpush1.msra.mxu0 0.0
    %306 = vmatprep.subr.mxu0 0.0
    %307 = vmatpush1.msra.mxu0 0.0
    %308 = vmatprep.subr.mxu0 0.0
    %309 = vmatpush1.msra.mxu0 0.0
    %310 = vmatprep.subr.mxu0 0.0
    %311 = vmatpush1.msra.mxu0 0.0
    %312 = vmatprep.subr.mxu0 0.0
    %313 = vmatpush1.msra.mxu0 0.0
    %314 = vmatprep.subr.mxu0 0.0
    %315 = vmatpush1.msra.mxu0 0.0
    %316 = vmatprep.subr.mxu0 0.0
    %317 = vmatpush1.msra.mxu0 0.0
    %318 = vmatprep.subr.mxu0 0.0
    %319 = vmatpush1.msra.mxu0 0.0
    %320 = vmatprep.subr.mxu0 0.0
    %321 = vmatpush1.msra.mxu0 0.0
    %322 = vmatprep.subr.mxu0 0.0
    %323 = vmatpush1.msra.mxu0 0.0
    %324 = vmatprep.subr.mxu0 0.0
    %325 = vmatpush1.msra.mxu0 0.0
    %326 = vmatprep.subr.mxu0 0.0
    %327 = vmatpush1.msra.mxu0 0.0
    %328 = vmatprep.subr.mxu0 0.0
    %329 = vmatpush1.msra.mxu0 0.0
    %330 = vmatprep.subr.mxu0 0.0
    %331 = vmatpush1.msra.mxu0 0.0
    %332 = vmatprep.mubr.f32.mxu0 0.0
    %333 = vmatmul.mubr.f32.gmra.mrb[0].mxu0 %v262
    %v334 = vpop.f32.mrb[0].mxu0
    %v335 = vadd.f32 %v259, %v334
    %v336 = vpop.f32.mrb[0].mxu0
    %337 = vdwg.mxu0
    %v338 = vld [vmem:[#allocation15] sm:$0x3]
    %v339 = vld [vmem:[#allocation16] sm:$0x1]
    %v341 = vsel %vm264, %v338, 0
    %343 = vmatprep.subr.mxu0 0.0
    %344 = vmatpush1.msra.mxu0 %v341
    %345 = vmatprep.subr.mxu0 0.0
    %346 = vmatpush1.msra.mxu0 0.0
    %347 = vmatprep.subr.mxu0 0.0
    %348 = vmatpush1.msra.mxu0 0.0
    %349 = vmatprep.subr.mxu0 0.0
    %350 = vmatpush1.msra.mxu0 0.0
    %351 = vmatprep.subr.mxu0 0.0
    %352 = vmatpush1.msra.mxu0 0.0
    %353 = vmatprep.subr.mxu0 0.0
    %354 = vmatpush1.msra.mxu0 0.0
    %355 = vmatprep.subr.mxu0 0.0
    %356 = vmatpush1.msra.mxu0 0.0
    %357 = vmatprep.subr.mxu0 0.0
    %358 = vmatpush1.msra.mxu0 0.0
    %359 = vmatprep.subr.mxu0 0.0
    %360 = vmatpush1.msra.mxu0 0.0
    %361 = vmatprep.subr.mxu0 0.0
    %362 = vmatpush1.msra.mxu0 0.0
    %363 = vmatprep.subr.mxu0 0.0
    %364 = vmatpush1.msra.mxu0 0.0
    %365 = vmatprep.subr.mxu0 0.0
    %366 = vmatpush1.msra.mxu0 0.0
    %367 = vmatprep.subr.mxu0 0.0
    %368 = vmatpush1.msra.mxu0 0.0
    %369 = vmatprep.subr.mxu0 0.0
    %370 = vmatpush1.msra.mxu0 0.0
    %371 = vmatprep.subr.mxu0 0.0
    %372 = vmatpush1.msra.mxu0 0.0
    %373 = vmatprep.subr.mxu0 0.0
    %374 = vmatpush1.msra.mxu0 0.0
    %375 = vmatprep.subr.mxu0 0.0
    %376 = vmatpush1.msra.mxu0 0.0
    %377 = vmatprep.subr.mxu0 0.0
    %378 = vmatpush1.msra.mxu0 0.0
    %379 = vmatprep.subr.mxu0 0.0
    %380 = vmatpush1.msra.mxu0 0.0
    %381 = vmatprep.subr.mxu0 0.0
    %382 = vmatpush1.msra.mxu0 0.0
    %383 = vmatprep.subr.mxu0 0.0
    %384 = vmatpush1.msra.mxu0 0.0
    %385 = vmatprep.subr.mxu0 0.0
    %386 = vmatpush1.msra.mxu0 0.0
    %387 = vmatprep.subr.mxu0 0.0
    %388 = vmatpush1.msra.mxu0 0.0
    %389 = vmatprep.subr.mxu0 0.0
    %390 = vmatpush1.msra.mxu0 0.0
    %391 = vmatprep.subr.mxu0 0.0
    %392 = vmatpush1.msra.mxu0 0.0
    %393 = vmatprep.subr.mxu0 0.0
    %394 = vmatpush1.msra.mxu0 0.0
    %395 = vmatprep.subr.mxu0 0.0
    %396 = vmatpush1.msra.mxu0 0.0
    %397 = vmatprep.subr.mxu0 0.0
    %398 = vmatpush1.msra.mxu0 0.0
    %399 = vmatprep.subr.mxu0 0.0
    %400 = vmatpush1.msra.mxu0 0.0
    %401 = vmatprep.subr.mxu0 0.0
    %402 = vmatpush1.msra.mxu0 0.0
    %403 = vmatprep.subr.mxu0 0.0
    %404 = vmatpush1.msra.mxu0 0.0
    %405 = vmatprep.subr.mxu0 0.0
    %406 = vmatpush1.msra.mxu0 0.0
    %407 = vmatprep.mubr.f32.mxu0 0.0
    %408 = vmatmul.mubr.f32.gmra.mrb[0].mxu0 %v262
    %v409 = vpop.f32.mrb[0].mxu0
    %v410 = vadd.f32 %v339, %v409
    %v411 = vpop.f32.mrb[0].mxu0
    %412 = vdwg.mxu0
    %v413 = vld [vmem:[#allocation9] sm:$0xff]
    %v414 = vld [vmem:[#allocation9 + $0x8] sm:$0x3]
    %v415 = vld [vmem:[%s7] sm:$0xff]
    %v416 = vld [vmem:[%s7 + $0x8] sm:$0xff]
    %v417 = vld [vmem:[%s7 + $0x10] sm:$0xff]
    %v418 = vld [vmem:[%s7 + $0x18] sm:$0xff]
    %v419 = vld [vmem:[%s7 + $0x20] sm:$0xff]
    %v420 = vld [vmem:[%s7 + $0x28] sm:$0xff]
    %v421 = vld [vmem:[%s7 + $0x30] sm:$0x3f]
    %v422 = vld [vmem:[%s7 + $0x38] sm:$0x3f]
    %v423 = vld [vmem:[#allocation18] sm:$0x3]
    %v425 = vlaneseq
    %v426 = vshrl.u32 %v425, 7
    %v427 = vsub.s32 0, %v426
    %v428 = vrot.slane %v423, %v427
    %v429 = vlaneseq
    %v430 = vshrl.u32 %v429, 7
    %v431 = vsub.s32 1, %v430
    %v432 = vrot.slane %v423, %v431
    %vm435 = vcmask 244736
    %v437 = vsel %vm435, %v413, 0
    %v440 = vsel %vm435, %v414, 0
    %vm442 = vcmask 1045504
    %v444 = vsel %vm442, %v421, 0
    %v447 = vsel %vm442, %v422, 0
    %449 = vmatprep.subr.mxu0 %v416
    %450 = vmatpush1.msra.mxu0 %v415
    %451 = vmatprep.subr.mxu0 %v418
    %452 = vmatpush1.msra.mxu0 %v417
    %453 = vmatprep.subr.mxu0 %v420
    %454 = vmatpush1.msra.mxu0 %v419
    %455 = vmatprep.subr.mxu0 %v447
    %456 = vmatpush1.msra.mxu0 %v444
    %457 = vmatprep.subr.mxu0 0.0
    %458 = vmatpush1.msra.mxu0 0.0
    %459 = vmatprep.subr.mxu0 0.0
    %460 = vmatpush1.msra.mxu0 0.0
    %461 = vmatprep.subr.mxu0 0.0
    %462 = vmatpush1.msra.mxu0 0.0
    %463 = vmatprep.subr.mxu0 0.0
    %464 = vmatpush1.msra.mxu0 0.0
    %465 = vmatprep.subr.mxu0 0.0
    %466 = vmatpush1.msra.mxu0 0.0
    %467 = vmatprep.subr.mxu0 0.0
    %468 = vmatpush1.msra.mxu0 0.0
    %469 = vmatprep.subr.mxu0 0.0
    %470 = vmatpush1.msra.mxu0 0.0
    %471 = vmatprep.subr.mxu0 0.0
    %472 = vmatpush1.msra.mxu0 0.0
    %473 = vmatprep.subr.mxu0 0.0
    %474 = vmatpush1.msra.mxu0 0.0
    %475 = vmatprep.subr.mxu0 0.0
    %476 = vmatpush1.msra.mxu0 0.0
    %477 = vmatprep.subr.mxu0 0.0
    %478 = vmatpush1.msra.mxu0 0.0
    %479 = vmatprep.subr.mxu0 0.0
    %480 = vmatpush1.msra.mxu0 0.0
    %481 = vmatprep.subr.mxu0 0.0
    %482 = vmatpush1.msra.mxu0 0.0
    %483 = vmatprep.subr.mxu0 0.0
    %484 = vmatpush1.msra.mxu0 0.0
    %485 = vmatprep.subr.mxu0 0.0
    %486 = vmatpush1.msra.mxu0 0.0
    %487 = vmatprep.subr.mxu0 0.0
    %488 = vmatpush1.msra.mxu0 0.0
    %489 = vmatprep.subr.mxu0 0.0
    %490 = vmatpush1.msra.mxu0 0.0
    %491 = vmatprep.subr.mxu0 0.0
    %492 = vmatpush1.msra.mxu0 0.0
    %493 = vmatprep.subr.mxu0 0.0
    %494 = vmatpush1.msra.mxu0 0.0
    %495 = vmatprep.subr.mxu0 0.0
    %496 = vmatpush1.msra.mxu0 0.0
    %497 = vmatprep.subr.mxu0 0.0
    %498 = vmatpush1.msra.mxu0 0.0
    %499 = vmatprep.subr.mxu0 0.0
    %500 = vmatpush1.msra.mxu0 0.0
    %501 = vmatprep.subr.mxu0 0.0
    %502 = vmatpush1.msra.mxu0 0.0
    %503 = vmatprep.subr.mxu0 0.0
    %504 = vmatpush1.msra.mxu0 0.0
    %505 = vmatprep.subr.mxu0 0.0
    %506 = vmatpush1.msra.mxu0 0.0
    %507 = vmatprep.subr.mxu0 0.0
    %508 = vmatpush1.msra.mxu0 0.0
    %509 = vmatprep.subr.mxu0 0.0
    %510 = vmatpush1.msra.mxu0 0.0
    %511 = vmatprep.subr.mxu0 0.0
    %512 = vmatpush1.msra.mxu0 0.0
    %513 = vmatprep.mubr.f32.mxu0 0.0
    %514 = vmatmul.mubr.f32.gmra.mrb[0].mxu0 %v437
    %v515 = vpop.f32.mrb[0].mxu0
    %v516 = vadd.f32 %v428, %v515
    %v517 = vpop.f32.mrb[0].mxu0
    %v518 = vadd.f32 %v432, %v517
    %519 = vmatprep.mubr.f32.mxu0 0.0
    %520 = vmatmul.mubr.f32.gmra.mrb[0].mxu0 %v440
    %v521 = vpop.f32.mrb[0].mxu0
    %v522 = vadd.f32 %v428, %v521
    %v523 = vpop.f32.mrb[0].mxu0
    %v524 = vadd.f32 %v432, %v523
    %525 = vdwg.mxu0
    %v526 = vld [vmem:[#allocation21] sm:$0xff]
    %v527 = vld [vmem:[#allocation21 + $0x8] sm:$0xff]
    %v528 = vld [vmem:[#allocation21 + $0x10] sm:$0xff]
    %v529 = vld [vmem:[#allocation21 + $0x18] sm:$0xff]
    %v530 = vld [vmem:[#allocation21 + $0x20] sm:$0xff]
    %v531 = vld [vmem:[#allocation21 + $0x28] sm:$0xff]
    %v532 = vld [vmem:[#allocation21 + $0x30] sm:$0xff]
    %v533 = vld [vmem:[#allocation21 + $0x38] sm:$0xff]
    %v534 = vld [vmem:[#allocation21 + $0x40] sm:$0xff]
    %v535 = vld [vmem:[#allocation21 + $0x48] sm:$0xff]
    %v536 = vld [vmem:[#allocation21 + $0x50] sm:$0xff]
    %v537 = vld [vmem:[#allocation21 + $0x58] sm:$0xff]
    %v538 = vld [vmem:[#allocation21 + $0x60] sm:$0xff]
    %v539 = vld [vmem:[#allocation21 + $0x68] sm:$0xff]
    %v540 = vld [vmem:[#allocation21 + $0x70] sm:$0xff]
    %v541 = vld [vmem:[#allocation21 + $0x78] sm:$0xff]
    %s542 = sld [smem:[#allocation11]]
    %s543 = sshra.s32 %s542, 3
    %s544 = sand.u32 %s542, 7
    %s545 = sshra.s32 %s542, 3
    %s546 = sand.u32 %s542, 7
    %s547 = smul.u32 %s543, 2
    %s548 = smul.u32 %s547, 8
    %s549 = sadd.s32 %s548, %s546
    %s550 = scalar_lea.vmem [#allocation19], %s549
    %v551 = vld [vmem:[%s550] ss:$8 sm:$0x3]
    %v553 = vlaneseq
    %v554 = vshrl.u32 %v553, 7
    %v555 = vsub.s32 0, %v554
    %v556 = vrot.slane %v551, %v555
    %v557 = vlaneseq
    %v558 = vshrl.u32 %v557, 7
    %v559 = vsub.s32 1, %v558
    %v560 = vrot.slane %v551, %v559
    %v563 = vadd.f32 %v516, %v556
    %v564 = vadd.f32 %v518, %v560
    %vm565 = vcmask 523264
    %v567 = vsel %vm565, %v335, 0
    %569 = vmatprep.subr.mxu0 %v527
    %570 = vmatpush1.msra.mxu0 %v526
    %571 = vmatprep.subr.mxu0 %v529
    %572 = vmatpush1.msra.mxu0 %v528
    %573 = vmatprep.subr.mxu0 %v531
    %574 = vmatpush1.msra.mxu0 %v530
    %575 = vmatprep.subr.mxu0 %v533
    %576 = vmatpush1.msra.mxu0 %v532
    %577 = vmatprep.subr.mxu0 %v535
    %578 = vmatpush1.msra.mxu0 %v534
    %579 = vmatprep.subr.mxu0 %v537
    %580 = vmatpush1.msra.mxu0 %v536
    %581 = vmatprep.subr.mxu0 %v539
    %582 = vmatpush1.msra.mxu0 %v538
    %583 = vmatprep.subr.mxu0 %v541
    %584 = vmatpush1.msra.mxu0 %v540
    %585 = vmatprep.subr.mxu0 0.0
    %586 = vmatpush1.msra.mxu0 0.0
    %587 = vmatprep.subr.mxu0 0.0
    %588 = vmatpush1.msra.mxu0 0.0
    %589 = vmatprep.subr.mxu0 0.0
    %590 = vmatpush1.msra.mxu0 0.0
    %591 = vmatprep.subr.mxu0 0.0
    %592 = vmatpush1.msra.mxu0 0.0
    %593 = vmatprep.subr.mxu0 0.0
    %594 = vmatpush1.msra.mxu0 0.0
    %595 = vmatprep.subr.mxu0 0.0
    %596 = vmatpush1.msra.mxu0 0.0
    %597 = vmatprep.subr.mxu0 0.0
    %598 = vmatpush1.msra.mxu0 0.0
    %599 = vmatprep.subr.mxu0 0.0
    %600 = vmatpush1.msra.mxu0 0.0
    %601 = vmatprep.subr.mxu0 0.0
    %602 = vmatpush1.msra.mxu0 0.0
    %603 = vmatprep.subr.mxu0 0.0
    %604 = vmatpush1.msra.mxu0 0.0
    %605 = vmatprep.subr.mxu0 0.0
    %606 = vmatpush1.msra.mxu0 0.0
    %607 = vmatprep.subr.mxu0 0.0
    %608 = vmatpush1.msra.mxu0 0.0
    %609 = vmatprep.subr.mxu0 0.0
    %610 = vmatpush1.msra.mxu0 0.0
    %611 = vmatprep.subr.mxu0 0.0
    %612 = vmatpush1.msra.mxu0 0.0
    %613 = vmatprep.subr.mxu0 0.0
    %614 = vmatpush1.msra.mxu0 0.0
    %615 = vmatprep.subr.mxu0 0.0
    %616 = vmatpush1.msra.mxu0 0.0
    %617 = vmatprep.subr.mxu0 0.0
    %618 = vmatpush1.msra.mxu0 0.0
    %619 = vmatprep.subr.mxu0 0.0
    %620 = vmatpush1.msra.mxu0 0.0
    %621 = vmatprep.subr.mxu0 0.0
    %622 = vmatpush1.msra.mxu0 0.0
    %623 = vmatprep.subr.mxu0 0.0
    %624 = vmatpush1.msra.mxu0 0.0
    %625 = vmatprep.subr.mxu0 0.0
    %626 = vmatpush1.msra.mxu0 0.0
    %627 = vmatprep.subr.mxu0 0.0
    %628 = vmatpush1.msra.mxu0 0.0
    %629 = vmatprep.subr.mxu0 0.0
    %630 = vmatpush1.msra.mxu0 0.0
    %631 = vmatprep.subr.mxu0 0.0
    %632 = vmatpush1.msra.mxu0 0.0
    %633 = vmatprep.mubr.f32.mxu0 0.0
    %634 = vmatmul.mubr.f32.gmra.mrb[0].mxu0 %v567
    %v635 = vpop.f32.mrb[0].mxu0
    %v636 = vadd.f32 0.0, %v635
    %v637 = vpop.f32.mrb[0].mxu0
    %v638 = vadd.f32 0.0, %v637
    %639 = vdwg.mxu0
    %v640 = vadd.f32 %v563, %v636
    %v641 = vadd.f32 %v564, %v638
    %v642 = vxor.u32 %v640, 2147483648
    %v643 = vxor.u32 %v641, 2147483648
    %v644 = vmul.f32 %v642, 1.442695
    %v645 = vpow.pop %v644
    %v646 = vmul.f32 %v643, 1.442695
    %v647 = vpow.pop %v646
    %v648 = vadd.f32 %v645, 1.0
    %v649 = vadd.f32 %v647, 1.0
    %v650 = vrcp.pop %v648
    %v651 = vmul.f32 1.0, %v650
    %v652 = vrcp.pop %v649
    %v653 = vmul.f32 1.0, %v652
    %v654 = vtanh.pop %v641
    %656 = vrot.lane.b32.xlu0 %v410, 64
    %v657 = vpop.permute.xlu0 %656
    %v659 = vmul.f32 %v651, %v657
    %v660 = vmul.f32 %v651, %v654
    %662 = vrot.lane.b32.xlu0 %v660, 64
    %v663 = vpop.permute.xlu0 %662
    %v665 = vadd.f32 %v659, %v663
    %v666 = vtanh.pop %v665
    %v667 = vmul.f32 %v653, %v666
    %669 = vrot.lane.b32.xlu0 %v667, 64
    %v670 = vpop.permute.xlu0 %669
    %vm672 = vcmask 253952
    %673 = vst.msk [vmem:[#allocation2] sm:$0x1] %vm672, %v670
    %674 = vrot.lane.b32.xlu0 %v667, 32
    %v675 = vpop.permute.xlu0 %674
    %677 = vst.msk [vmem:[#allocation3] sm:$0x1] %vm672, %v675
    %s678 = sld [smem:[#allocation11 + $0x1]]
    %s679 = sshra.s32 %s678, 3
    %s680 = sand.u32 %s678, 7
    %s681 = sshra.s32 %s678, 3
    %s682 = sand.u32 %s678, 7
    %s683 = smul.u32 %s679, 2
    %s684 = smul.u32 %s683, 8
    %s685 = sadd.s32 %s684, %s682
    %s686 = scalar_lea.vmem [#allocation19], %s685
    %v687 = vld [vmem:[%s686] ss:$8 sm:$0x3]
    %v689 = vlaneseq
    %v690 = vshrl.u32 %v689, 7
    %v691 = vsub.s32 0, %v690
    %v692 = vrot.slane %v687, %v691
    %v693 = vlaneseq
    %v694 = vshrl.u32 %v693, 7
    %v695 = vsub.s32 1, %v694
    %v696 = vrot.slane %v687, %v695
    %v699 = vadd.f32 %v516, %v692
    %v700 = vadd.f32 %v518, %v696
    %v701 = vsel %vm565, %v670, 0
    %703 = vmatprep.subr.mxu0 %v527
    %704 = vmatpush1.msra.mxu0 %v526
    %705 = vmatprep.subr.mxu0 %v529
    %706 = vmatpush1.msra.mxu0 %v528
    %707 = vmatprep.subr.mxu0 %v531
    %708 = vmatpush1.msra.mxu0 %v530
    %709 = vmatprep.subr.mxu0 %v533
    %710 = vmatpush1.msra.mxu0 %v532
    %711 = vmatprep.subr.mxu0 %v535
    %712 = vmatpush1.msra.mxu0 %v534
    %713 = vmatprep.subr.mxu0 %v537
    %714 = vmatpush1.msra.mxu0 %v536
    %715 = vmatprep.subr.mxu0 %v539
    %716 = vmatpush1.msra.mxu0 %v538
    %717 = vmatprep.subr.mxu0 %v541
    %718 = vmatpush1.msra.mxu0 %v540
    %719 = vmatprep.subr.mxu0 0.0
    %720 = vmatpush1.msra.mxu0 0.0
    %721 = vmatprep.subr.mxu0 0.0
    %722 = vmatpush1.msra.mxu0 0.0
    %723 = vmatprep.subr.mxu0 0.0
    %724 = vmatpush1.msra.mxu0 0.0
    %725 = vmatprep.subr.mxu0 0.0
    %726 = vmatpush1.msra.mxu0 0.0
    %727 = vmatprep.subr.mxu0 0.0
    %728 = vmatpush1.msra.mxu0 0.0
    %729 = vmatprep.subr.mxu0 0.0
    %730 = vmatpush1.msra.mxu0 0.0
    %731 = vmatprep.subr.mxu0 0.0
    %732 = vmatpush1.msra.mxu0 0.0
    %733 = vmatprep.subr.mxu0 0.0
    %734 = vmatpush1.msra.mxu0 0.0
    %735 = vmatprep.subr.mxu0 0.0
    %736 = vmatpush1.msra.mxu0 0.0
    %737 = vmatprep.subr.mxu0 0.0
    %738 = vmatpush1.msra.mxu0 0.0
    %739 = vmatprep.subr.mxu0 0.0
    %740 = vmatpush1.msra.mxu0 0.0
    %741 = vmatprep.subr.mxu0 0.0
    %742 = vmatpush1.msra.mxu0 0.0
    %743 = vmatprep.subr.mxu0 0.0
    %744 = vmatpush1.msra.mxu0 0.0
    %745 = vmatprep.subr.mxu0 0.0
    %746 = vmatpush1.msra.mxu0 0.0
    %747 = vmatprep.subr.mxu0 0.0
    %748 = vmatpush1.msra.mxu0 0.0
    %749 = vmatprep.subr.mxu0 0.0
    %750 = vmatpush1.msra.mxu0 0.0
    %751 = vmatprep.subr.mxu0 0.0
    %752 = vmatpush1.msra.mxu0 0.0
    %753 = vmatprep.subr.mxu0 0.0
    %754 = vmatpush1.msra.mxu0 0.0
    %755 = vmatprep.subr.mxu0 0.0
    %756 = vmatpush1.msra.mxu0 0.0
    %757 = vmatprep.subr.mxu0 0.0
    %758 = vmatpush1.msra.mxu0 0.0
    %759 = vmatprep.subr.mxu0 0.0
    %760 = vmatpush1.msra.mxu0 0.0
    %761 = vmatprep.subr.mxu0 0.0
    %762 = vmatpush1.msra.mxu0 0.0
    %763 = vmatprep.subr.mxu0 0.0
    %764 = vmatpush1.msra.mxu0 0.0
    %765 = vmatprep.subr.mxu0 0.0
    %766 = vmatpush1.msra.mxu0 0.0
    %767 = vmatprep.mubr.f32.mxu0 0.0
    %768 = vmatmul.mubr.f32.gmra.mrb[0].mxu0 %v701
    %v769 = vpop.f32.mrb[0].mxu0
    %v770 = vadd.f32 0.0, %v769
    %v771 = vpop.f32.mrb[0].mxu0
    %v772 = vadd.f32 0.0, %v771
    %773 = vdwg.mxu0
    %v776 = vrot.slane %v770, 7
    %v777 = vrot.slane %v772, 7
    %v780 = vadd.f32 %v699, %v776
    %v781 = vadd.f32 %v700, %v777
    %v782 = vxor.u32 %v780, 2147483648
    %v783 = vxor.u32 %v781, 2147483648
    %v784 = vmul.f32 %v782, 1.442695
    %v785 = vpow.pop %v784
    %v786 = vmul.f32 %v783, 1.442695
    %v787 = vpow.pop %v786
    %v788 = vadd.f32 %v785, 1.0
    %v789 = vadd.f32 %v787, 1.0
    %v790 = vrcp.pop %v788
    %v791 = vmul.f32 1.0, %v790
    %v792 = vrcp.pop %v789
    %v793 = vmul.f32 1.0, %v792
    %v794 = vtanh.pop %v781
    %v796 = vrot.slane %v665, 7
    %v798 = vmul.f32 %v791, %v796
    %v799 = vmul.f32 %v791, %v794
    %801 = vrot.lane.b32.xlu0 %v799, 64
    %v802 = vpop.permute.xlu0 %801
    %v804 = vadd.f32 %v798, %v802
    %v805 = vtanh.pop %v804
    %v806 = vmul.f32 %v793, %v805
    %808 = vrot.lane.b32.xlu0 %v806, 64
    %v809 = vpop.permute.xlu0 %808
    %vm811 = vcmask 254977
    %812 = vst.msk [vmem:[#allocation2] sm:$0x2] %vm811, %v809
    %813 = vrot.lane.b32.xlu0 %v806, 32
    %v814 = vpop.permute.xlu0 %813
    %816 = vst.msk [vmem:[#allocation3] sm:$0x2] %vm811, %v814
    %s817 = sld [smem:[#allocation11 + $0x2]]
    %s818 = sshra.s32 %s817, 3
    %s819 = sand.u32 %s817, 7
    %s820 = sshra.s32 %s817, 3
    %s821 = sand.u32 %s817, 7
    %s822 = smul.u32 %s818, 2
    %s823 = smul.u32 %s822, 8
    %s824 = sadd.s32 %s823, %s821
    %s825 = scalar_lea.vmem [#allocation19], %s824
    %v826 = vld [vmem:[%s825] ss:$8 sm:$0x3]
    %v828 = vlaneseq
    %v829 = vshrl.u32 %v828, 7
    %v830 = vsub.s32 0, %v829
    %v831 = vrot.slane %v826, %v830
    %v832 = vlaneseq
    %v833 = vshrl.u32 %v832, 7
    %v834 = vsub.s32 1, %v833
    %v835 = vrot.slane %v826, %v834
    %v838 = vadd.f32 %v516, %v831
    %v839 = vadd.f32 %v518, %v835
    %v840 = vrot.slane %v806, 1
    %841 = vrot.lane.b32.xlu0 %v840, 64
    %v842 = vpop.permute.xlu0 %841
    %v843 = vsel %vm565, %v842, 0
    %845 = vmatprep.subr.mxu0 %v527
    %846 = vmatpush1.msra.mxu0 %v526
    %847 = vmatprep.subr.mxu0 %v529
    %848 = vmatpush1.msra.mxu0 %v528
    %849 = vmatprep.subr.mxu0 %v531
    %850 = vmatpush1.msra.mxu0 %v530
    %851 = vmatprep.subr.mxu0 %v533
    %852 = vmatpush1.msra.mxu0 %v532
    %853 = vmatprep.subr.mxu0 %v535
    %854 = vmatpush1.msra.mxu0 %v534
    %855 = vmatprep.subr.mxu0 %v537
    %856 = vmatpush1.msra.mxu0 %v536
    %857 = vmatprep.subr.mxu0 %v539
    %858 = vmatpush1.msra.mxu0 %v538
    %859 = vmatprep.subr.mxu0 %v541
    %860 = vmatpush1.msra.mxu0 %v540
    %861 = vmatprep.subr.mxu0 0.0
    %862 = vmatpush1.msra.mxu0 0.0
    %863 = vmatprep.subr.mxu0 0.0
    %864 = vmatpush1.msra.mxu0 0.0
    %865 = vmatprep.subr.mxu0 0.0
    %866 = vmatpush1.msra.mxu0 0.0
    %867 = vmatprep.subr.mxu0 0.0
    %868 = vmatpush1.msra.mxu0 0.0
    %869 = vmatprep.subr.mxu0 0.0
    %870 = vmatpush1.msra.mxu0 0.0
    %871 = vmatprep.subr.mxu0 0.0
    %872 = vmatpush1.msra.mxu0 0.0
    %873 = vmatprep.subr.mxu0 0.0
    %874 = vmatpush1.msra.mxu0 0.0
    %875 = vmatprep.subr.mxu0 0.0
    %876 = vmatpush1.msra.mxu0 0.0
    %877 = vmatprep.subr.mxu0 0.0
    %878 = vmatpush1.msra.mxu0 0.0
    %879 = vmatprep.subr.mxu0 0.0
    %880 = vmatpush1.msra.mxu0 0.0
    %881 = vmatprep.subr.mxu0 0.0
    %882 = vmatpush1.msra.mxu0 0.0
    %883 = vmatprep.subr.mxu0 0.0
    %884 = vmatpush1.msra.mxu0 0.0
    %885 = vmatprep.subr.mxu0 0.0
    %886 = vmatpush1.msra.mxu0 0.0
    %887 = vmatprep.subr.mxu0 0.0
    %888 = vmatpush1.msra.mxu0 0.0
    %889 = vmatprep.subr.mxu0 0.0
    %890 = vmatpush1.msra.mxu0 0.0
    %891 = vmatprep.subr.mxu0 0.0
    %892 = vmatpush1.msra.mxu0 0.0
    %893 = vmatprep.subr.mxu0 0.0
    %894 = vmatpush1.msra.mxu0 0.0
    %895 = vmatprep.subr.mxu0 0.0
    %896 = vmatpush1.msra.mxu0 0.0
    %897 = vmatprep.subr.mxu0 0.0
    %898 = vmatpush1.msra.mxu0 0.0
    %899 = vmatprep.subr.mxu0 0.0
    %900 = vmatpush1.msra.mxu0 0.0
    %901 = vmatprep.subr.mxu0 0.0
    %902 = vmatpush1.msra.mxu0 0.0
    %903 = vmatprep.subr.mxu0 0.0
    %904 = vmatpush1.msra.mxu0 0.0
    %905 = vmatprep.subr.mxu0 0.0
    %906 = vmatpush1.msra.mxu0 0.0
    %907 = vmatprep.subr.mxu0 0.0
    %908 = vmatpush1.msra.mxu0 0.0
    %909 = vmatprep.mubr.f32.mxu0 0.0
    %910 = vmatmul.mubr.f32.gmra.mrb[0].mxu0 %v843
    %v911 = vpop.f32.mrb[0].mxu0
    %v912 = vadd.f32 0.0, %v911
    %v913 = vpop.f32.mrb[0].mxu0
    %v914 = vadd.f32 0.0, %v913
    %915 = vdwg.mxu0
    %v918 = vrot.slane %v912, 6
    %v919 = vrot.slane %v914, 6
    %v922 = vadd.f32 %v838, %v918
    %v923 = vadd.f32 %v839, %v919
    %v924 = vxor.u32 %v922, 2147483648
    %v925 = vxor.u32 %v923, 2147483648
    %v926 = vmul.f32 %v924, 1.442695
    %v927 = vpow.pop %v926
    %v928 = vmul.f32 %v925, 1.442695
    %v929 = vpow.pop %v928
    %v930 = vadd.f32 %v927, 1.0
    %v931 = vadd.f32 %v929, 1.0
    %v932 = vrcp.pop %v930
    %v933 = vmul.f32 1.0, %v932
    %v934 = vrcp.pop %v931
    %v935 = vmul.f32 1.0, %v934
    %v936 = vtanh.pop %v923
    %v938 = vrot.slane %v804, 7
    %v940 = vmul.f32 %v933, %v938
    %v941 = vmul.f32 %v933, %v936
    %943 = vrot.lane.b32.xlu0 %v941, 64
    %v944 = vpop.permute.xlu0 %943
    %v946 = vadd.f32 %v940, %v944
    %v947 = vtanh.pop %v946
    %v948 = vmul.f32 %v935, %v947
    %950 = vrot.lane.b32.xlu0 %v948, 64
    %v951 = vpop.permute.xlu0 %950
    %vm953 = vcmask 256002
    %954 = vst.msk [vmem:[#allocation2] sm:$0x4] %vm953, %v951
    %955 = vrot.lane.b32.xlu0 %v948, 32
    %v956 = vpop.permute.xlu0 %955
    %958 = vst.msk [vmem:[#allocation3] sm:$0x4] %vm953, %v956
    %s959 = sld [smem:[#allocation11 + $0x3]]
    %s960 = sshra.s32 %s959, 3
    %s961 = sand.u32 %s959, 7
    %s962 = sshra.s32 %s959, 3
    %s963 = sand.u32 %s959, 7
    %s964 = smul.u32 %s960, 2
    %s965 = smul.u32 %s964, 8
    %s966 = sadd.s32 %s965, %s963
    %s967 = scalar_lea.vmem [#allocation19], %s966
    %v968 = vld [vmem:[%s967] ss:$8 sm:$0x3]
    %v970 = vlaneseq
    %v971 = vshrl.u32 %v970, 7
    %v972 = vsub.s32 0, %v971
    %v973 = vrot.slane %v968, %v972
    %v974 = vlaneseq
    %v975 = vshrl.u32 %v974, 7
    %v976 = vsub.s32 1, %v975
    %v977 = vrot.slane %v968, %v976
    %v980 = vadd.f32 %v516, %v973
    %v981 = vadd.f32 %v518, %v977
    %v982 = vrot.slane %v948, 2
    %983 = vrot.lane.b32.xlu0 %v982, 64
    %v984 = vpop.permute.xlu0 %983
    %v985 = vsel %vm565, %v984, 0
    %987 = vmatprep.subr.mxu0 %v527
    %988 = vmatpush1.msra.mxu0 %v526
    %989 = vmatprep.subr.mxu0 %v529
    %990 = vmatpush1.msra.mxu0 %v528
    %991 = vmatprep.subr.mxu0 %v531
    %992 = vmatpush1.msra.mxu0 %v530
    %993 = vmatprep.subr.mxu0 %v533
    %994 = vmatpush1.msra.mxu0 %v532
    %995 = vmatprep.subr.mxu0 %v535
    %996 = vmatpush1.msra.mxu0 %v534
    %997 = vmatprep.subr.mxu0 %v537
    %998 = vmatpush1.msra.mxu0 %v536
    %999 = vmatprep.subr.mxu0 %v539
    %1000 = vmatpush1.msra.mxu0 %v538
    %1001 = vmatprep.subr.mxu0 %v541
    %1002 = vmatpush1.msra.mxu0 %v540
    %1003 = vmatprep.subr.mxu0 0.0
    %1004 = vmatpush1.msra.mxu0 0.0
    %1005 = vmatprep.subr.mxu0 0.0
    %1006 = vmatpush1.msra.mxu0 0.0
    %1007 = vmatprep.subr.mxu0 0.0
    %1008 = vmatpush1.msra.mxu0 0.0
    %1009 = vmatprep.subr.mxu0 0.0
    %1010 = vmatpush1.msra.mxu0 0.0
    %1011 = vmatprep.subr.mxu0 0.0
    %1012 = vmatpush1.msra.mxu0 0.0
    %1013 = vmatprep.subr.mxu0 0.0
    %1014 = vmatpush1.msra.mxu0 0.0
    %1015 = vmatprep.subr.mxu0 0.0
    %1016 = vmatpush1.msra.mxu0 0.0
    %1017 = vmatprep.subr.mxu0 0.0
    %1018 = vmatpush1.msra.mxu0 0.0
    %1019 = vmatprep.subr.mxu0 0.0
    %1020 = vmatpush1.msra.mxu0 0.0
    %1021 = vmatprep.subr.mxu0 0.0
    %1022 = vmatpush1.msra.mxu0 0.0
    %1023 = vmatprep.subr.mxu0 0.0
    %1024 = vmatpush1.msra.mxu0 0.0
    %1025 = vmatprep.subr.mxu0 0.0
    %1026 = vmatpush1.msra.mxu0 0.0
    %1027 = vmatprep.subr.mxu0 0.0
    %1028 = vmatpush1.msra.mxu0 0.0
    %1029 = vmatprep.subr.mxu0 0.0
    %1030 = vmatpush1.msra.mxu0 0.0
    %1031 = vmatprep.subr.mxu0 0.0
    %1032 = vmatpush1.msra.mxu0 0.0
    %1033 = vmatprep.subr.mxu0 0.0
    %1034 = vmatpush1.msra.mxu0 0.0
    %1035 = vmatprep.subr.mxu0 0.0
    %1036 = vmatpush1.msra.mxu0 0.0
    %1037 = vmatprep.subr.mxu0 0.0
    %1038 = vmatpush1.msra.mxu0 0.0
    %1039 = vmatprep.subr.mxu0 0.0
    %1040 = vmatpush1.msra.mxu0 0.0
    %1041 = vmatprep.subr.mxu0 0.0
    %1042 = vmatpush1.msra.mxu0 0.0
    %1043 = vmatprep.subr.mxu0 0.0
    %1044 = vmatpush1.msra.mxu0 0.0
    %1045 = vmatprep.subr.mxu0 0.0
    %1046 = vmatpush1.msra.mxu0 0.0
    %1047 = vmatprep.subr.mxu0 0.0
    %1048 = vmatpush1.msra.mxu0 0.0
    %1049 = vmatprep.subr.mxu0 0.0
    %1050 = vmatpush1.msra.mxu0 0.0
    %1051 = vmatprep.mubr.f32.mxu0 0.0
    %1052 = vmatmul.mubr.f32.gmra.mrb[0].mxu0 %v985
    %v1053 = vpop.f32.mrb[0].mxu0
    %v1054 = vadd.f32 0.0, %v1053
    %v1055 = vpop.f32.mrb[0].mxu0
    %v1056 = vadd.f32 0.0, %v1055
    %1057 = vdwg.mxu0
    %v1060 = vrot.slane %v1054, 5
    %v1061 = vrot.slane %v1056, 5
    %v1064 = vadd.f32 %v980, %v1060
    %v1065 = vadd.f32 %v981, %v1061
    %v1066 = vxor.u32 %v1064, 2147483648
    %v1067 = vxor.u32 %v1065, 2147483648
    %v1068 = vmul.f32 %v1066, 1.442695
    %v1069 = vpow.pop %v1068
    %v1070 = vmul.f32 %v1067, 1.442695
    %v1071 = vpow.pop %v1070
    %v1072 = vadd.f32 %v1069, 1.0
    %v1073 = vadd.f32 %v1071, 1.0
    %v1074 = vrcp.pop %v1072
    %v1075 = vmul.f32 1.0, %v1074
    %v1076 = vrcp.pop %v1073
    %v1077 = vmul.f32 1.0, %v1076
    %v1078 = vtanh.pop %v1065
    %v1080 = vrot.slane %v946, 7
    %v1082 = vmul.f32 %v1075, %v1080
    %v1083 = vmul.f32 %v1075, %v1078
    %1085 = vrot.lane.b32.xlu0 %v1083, 64
    %v1086 = vpop.permute.xlu0 %1085
    %v1088 = vadd.f32 %v1082, %v1086
    %v1089 = vtanh.pop %v1088
    %v1090 = vmul.f32 %v1077, %v1089
    %1092 = vrot.lane.b32.xlu0 %v1090, 64
    %v1093 = vpop.permute.xlu0 %1092
    %vm1095 = vcmask 257027
    %1096 = vst.msk [vmem:[#allocation2] sm:$0x8] %vm1095, %v1093
    %1097 = vrot.lane.b32.xlu0 %v1090, 32
    %v1098 = vpop.permute.xlu0 %1097
    %1100 = vst.msk [vmem:[#allocation3] sm:$0x8] %vm1095, %v1098
    %s1101 = sld [smem:[#allocation11 + $0x4]]
    %s1102 = sshra.s32 %s1101, 3
    %s1103 = sand.u32 %s1101, 7
    %s1104 = sshra.s32 %s1101, 3
    %s1105 = sand.u32 %s1101, 7
    %s1106 = smul.u32 %s1102, 2
    %s1107 = smul.u32 %s1106, 8
    %s1108 = sadd.s32 %s1107, %s1105
    %s1109 = scalar_lea.vmem [#allocation19], %s1108
    %v1110 = vld [vmem:[%s1109] ss:$8 sm:$0x3]
    %v1112 = vlaneseq
    %v1113 = vshrl.u32 %v1112, 7
    %v1114 = vsub.s32 0, %v1113
    %v1115 = vrot.slane %v1110, %v1114
    %v1116 = vlaneseq
    %v1117 = vshrl.u32 %v1116, 7
    %v1118 = vsub.s32 1, %v1117
    %v1119 = vrot.slane %v1110, %v1118
    %v1122 = vadd.f32 %v516, %v1115
    %v1123 = vadd.f32 %v518, %v1119
    %v1124 = vrot.slane %v1090, 3
    %1125 = vrot.lane.b32.xlu0 %v1124, 64
    %v1126 = vpop.permute.xlu0 %1125
    %v1127 = vsel %vm565, %v1126, 0
    %1129 = vmatprep.subr.mxu0 %v527
    %1130 = vmatpush1.msra.mxu0 %v526
    %1131 = vmatprep.subr.mxu0 %v529
    %1132 = vmatpush1.msra.mxu0 %v528
    %1133 = vmatprep.subr.mxu0 %v531
    %1134 = vmatpush1.msra.mxu0 %v530
    %1135 = vmatprep.subr.mxu0 %v533
    %1136 = vmatpush1.msra.mxu0 %v532
    %1137 = vmatprep.subr.mxu0 %v535
    %1138 = vmatpush1.msra.mxu0 %v534
    %1139 = vmatprep.subr.mxu0 %v537
    %1140 = vmatpush1.msra.mxu0 %v536
    %1141 = vmatprep.subr.mxu0 %v539
    %1142 = vmatpush1.msra.mxu0 %v538
    %1143 = vmatprep.subr.mxu0 %v541
    %1144 = vmatpush1.msra.mxu0 %v540
    %1145 = vmatprep.subr.mxu0 0.0
    %1146 = vmatpush1.msra.mxu0 0.0
    %1147 = vmatprep.subr.mxu0 0.0
    %1148 = vmatpush1.msra.mxu0 0.0
    %1149 = vmatprep.subr.mxu0 0.0
    %1150 = vmatpush1.msra.mxu0 0.0
    %1151 = vmatprep.subr.mxu0 0.0
    %1152 = vmatpush1.msra.mxu0 0.0
    %1153 = vmatprep.subr.mxu0 0.0
    %1154 = vmatpush1.msra.mxu0 0.0
    %1155 = vmatprep.subr.mxu0 0.0
    %1156 = vmatpush1.msra.mxu0 0.0
    %1157 = vmatprep.subr.mxu0 0.0
    %1158 = vmatpush1.msra.mxu0 0.0
    %1159 = vmatprep.subr.mxu0 0.0
    %1160 = vmatpush1.msra.mxu0 0.0
    %1161 = vmatprep.subr.mxu0 0.0
    %1162 = vmatpush1.msra.mxu0 0.0
    %1163 = vmatprep.subr.mxu0 0.0
    %1164 = vmatpush1.msra.mxu0 0.0
    %1165 = vmatprep.subr.mxu0 0.0
    %1166 = vmatpush1.msra.mxu0 0.0
    %1167 = vmatprep.subr.mxu0 0.0
    %1168 = vmatpush1.msra.mxu0 0.0
    %1169 = vmatprep.subr.mxu0 0.0
    %1170 = vmatpush1.msra.mxu0 0.0
    %1171 = vmatprep.subr.mxu0 0.0
    %1172 = vmatpush1.msra.mxu0 0.0
    %1173 = vmatprep.subr.mxu0 0.0
    %1174 = vmatpush1.msra.mxu0 0.0
    %1175 = vmatprep.subr.mxu0 0.0
    %1176 = vmatpush1.msra.mxu0 0.0
    %1177 = vmatprep.subr.mxu0 0.0
    %1178 = vmatpush1.msra.mxu0 0.0
    %1179 = vmatprep.subr.mxu0 0.0
    %1180 = vmatpush1.msra.mxu0 0.0
    %1181 = vmatprep.subr.mxu0 0.0
    %1182 = vmatpush1.msra.mxu0 0.0
    %1183 = vmatprep.subr.mxu0 0.0
    %1184 = vmatpush1.msra.mxu0 0.0
    %1185 = vmatprep.subr.mxu0 0.0
    %1186 = vmatpush1.msra.mxu0 0.0
    %1187 = vmatprep.subr.mxu0 0.0
    %1188 = vmatpush1.msra.mxu0 0.0
    %1189 = vmatprep.subr.mxu0 0.0
    %1190 = vmatpush1.msra.mxu0 0.0
    %1191 = vmatprep.subr.mxu0 0.0
    %1192 = vmatpush1.msra.mxu0 0.0
    %1193 = vmatprep.mubr.f32.mxu0 0.0
    %1194 = vmatmul.mubr.f32.gmra.mrb[0].mxu0 %v1127
    %v1195 = vpop.f32.mrb[0].mxu0
    %v1196 = vadd.f32 0.0, %v1195
    %v1197 = vpop.f32.mrb[0].mxu0
    %v1198 = vadd.f32 0.0, %v1197
    %1199 = vdwg.mxu0
    %v1202 = vrot.slane %v1196, 4
    %v1203 = vrot.slane %v1198, 4
    %v1206 = vadd.f32 %v1122, %v1202
    %v1207 = vadd.f32 %v1123, %v1203
    %v1208 = vxor.u32 %v1206, 2147483648
    %v1209 = vxor.u32 %v1207, 2147483648
    %v1210 = vmul.f32 %v1208, 1.442695
    %v1211 = vpow.pop %v1210
    %v1212 = vmul.f32 %v1209, 1.442695
    %v1213 = vpow.pop %v1212
    %v1214 = vadd.f32 %v1211, 1.0
    %v1215 = vadd.f32 %v1213, 1.0
    %v1216 = vrcp.pop %v1214
    %v1217 = vmul.f32 1.0, %v1216
    %v1218 = vrcp.pop %v1215
    %v1219 = vmul.f32 1.0, %v1218
    %v1220 = vtanh.pop %v1207
    %v1222 = vrot.slane %v1088, 7
    %v1224 = vmul.f32 %v1217, %v1222
    %v1225 = vmul.f32 %v1217, %v1220
    %1227 = vrot.lane.b32.xlu0 %v1225, 64
    %v1228 = vpop.permute.xlu0 %1227
    %v1230 = vadd.f32 %v1224, %v1228
    %v1231 = vtanh.pop %v1230
    %v1232 = vmul.f32 %v1219, %v1231
    %1234 = vrot.lane.b32.xlu0 %v1232, 64
    %v1235 = vpop.permute.xlu0 %1234
    %vm1237 = vcmask 258052
    %1238 = vst.msk [vmem:[#allocation2] sm:$0x10] %vm1237, %v1235
    %1239 = vrot.lane.b32.xlu0 %v1232, 32
    %v1240 = vpop.permute.xlu0 %1239
    %1242 = vst.msk [vmem:[#allocation3] sm:$0x10] %vm1237, %v1240
    %s1243 = sld [smem:[#allocation11 + $0x5]]
    %s1244 = sshra.s32 %s1243, 3
    %s1245 = sand.u32 %s1243, 7
    %s1246 = sshra.s32 %s1243, 3
    %s1247 = sand.u32 %s1243, 7
    %s1248 = smul.u32 %s1244, 2
    %s1249 = smul.u32 %s1248, 8
    %s1250 = sadd.s32 %s1249, %s1247
    %s1251 = scalar_lea.vmem [#allocation19], %s1250
    %v1252 = vld [vmem:[%s1251] ss:$8 sm:$0x3]
    %v1254 = vlaneseq
    %v1255 = vshrl.u32 %v1254, 7
    %v1256 = vsub.s32 0, %v1255
    %v1257 = vrot.slane %v1252, %v1256
    %v1258 = vlaneseq
    %v1259 = vshrl.u32 %v1258, 7
    %v1260 = vsub.s32 1, %v1259
    %v1261 = vrot.slane %v1252, %v1260
    %v1264 = vadd.f32 %v516, %v1257
    %v1265 = vadd.f32 %v518, %v1261
    %v1266 = vrot.slane %v1232, 4
    %1267 = vrot.lane.b32.xlu0 %v1266, 64
    %v1268 = vpop.permute.xlu0 %1267
    %v1269 = vsel %vm565, %v1268, 0
    %1271 = vmatprep.subr.mxu0 %v527
    %1272 = vmatpush1.msra.mxu0 %v526
    %1273 = vmatprep.subr.mxu0 %v529
    %1274 = vmatpush1.msra.mxu0 %v528
    %1275 = vmatprep.subr.mxu0 %v531
    %1276 = vmatpush1.msra.mxu0 %v530
    %1277 = vmatprep.subr.mxu0 %v533
    %1278 = vmatpush1.msra.mxu0 %v532
    %1279 = vmatprep.subr.mxu0 %v535
    %1280 = vmatpush1.msra.mxu0 %v534
    %1281 = vmatprep.subr.mxu0 %v537
    %1282 = vmatpush1.msra.mxu0 %v536
    %1283 = vmatprep.subr.mxu0 %v539
    %1284 = vmatpush1.msra.mxu0 %v538
    %1285 = vmatprep.subr.mxu0 %v541
    %1286 = vmatpush1.msra.mxu0 %v540
    %1287 = vmatprep.subr.mxu0 0.0
    %1288 = vmatpush1.msra.mxu0 0.0
    %1289 = vmatprep.subr.mxu0 0.0
    %1290 = vmatpush1.msra.mxu0 0.0
    %1291 = vmatprep.subr.mxu0 0.0
    %1292 = vmatpush1.msra.mxu0 0.0
    %1293 = vmatprep.subr.mxu0 0.0
    %1294 = vmatpush1.msra.mxu0 0.0
    %1295 = vmatprep.subr.mxu0 0.0
    %1296 = vmatpush1.msra.mxu0 0.0
    %1297 = vmatprep.subr.mxu0 0.0
    %1298 = vmatpush1.msra.mxu0 0.0
    %1299 = vmatprep.subr.mxu0 0.0
    %1300 = vmatpush1.msra.mxu0 0.0
    %1301 = vmatprep.subr.mxu0 0.0
    %1302 = vmatpush1.msra.mxu0 0.0
    %1303 = vmatprep.subr.mxu0 0.0
    %1304 = vmatpush1.msra.mxu0 0.0
    %1305 = vmatprep.subr.mxu0 0.0
    %1306 = vmatpush1.msra.mxu0 0.0
    %1307 = vmatprep.subr.mxu0 0.0
    %1308 = vmatpush1.msra.mxu0 0.0
    %1309 = vmatprep.subr.mxu0 0.0
    %1310 = vmatpush1.msra.mxu0 0.0
    %1311 = vmatprep.subr.mxu0 0.0
    %1312 = vmatpush1.msra.mxu0 0.0
    %1313 = vmatprep.subr.mxu0 0.0
    %1314 = vmatpush1.msra.mxu0 0.0
    %1315 = vmatprep.subr.mxu0 0.0
    %1316 = vmatpush1.msra.mxu0 0.0
    %1317 = vmatprep.subr.mxu0 0.0
    %1318 = vmatpush1.msra.mxu0 0.0
    %1319 = vmatprep.subr.mxu0 0.0
    %1320 = vmatpush1.msra.mxu0 0.0
    %1321 = vmatprep.subr.mxu0 0.0
    %1322 = vmatpush1.msra.mxu0 0.0
    %1323 = vmatprep.subr.mxu0 0.0
    %1324 = vmatpush1.msra.mxu0 0.0
    %1325 = vmatprep.subr.mxu0 0.0
    %1326 = vmatpush1.msra.mxu0 0.0
    %1327 = vmatprep.subr.mxu0 0.0
    %1328 = vmatpush1.msra.mxu0 0.0
    %1329 = vmatprep.subr.mxu0 0.0
    %1330 = vmatpush1.msra.mxu0 0.0
    %1331 = vmatprep.subr.mxu0 0.0
    %1332 = vmatpush1.msra.mxu0 0.0
    %1333 = vmatprep.subr.mxu0 0.0
    %1334 = vmatpush1.msra.mxu0 0.0
    %1335 = vmatprep.mubr.f32.mxu0 0.0
    %1336 = vmatmul.mubr.f32.gmra.mrb[0].mxu0 %v1269
    %v1337 = vpop.f32.mrb[0].mxu0
    %v1338 = vadd.f32 0.0, %v1337
    %v1339 = vpop.f32.mrb[0].mxu0
    %v1340 = vadd.f32 0.0, %v1339
    %1341 = vdwg.mxu0
    %v1344 = vrot.slane %v1338, 3
    %v1345 = vrot.slane %v1340, 3
    %v1348 = vadd.f32 %v1264, %v1344
    %v1349 = vadd.f32 %v1265, %v1345
    %v1350 = vxor.u32 %v1348, 2147483648
    %v1351 = vxor.u32 %v1349, 2147483648
    %v1352 = vmul.f32 %v1350, 1.442695
    %v1353 = vpow.pop %v1352
    %v1354 = vmul.f32 %v1351, 1.442695
    %v1355 = vpow.pop %v1354
    %v1356 = vadd.f32 %v1353, 1.0
    %v1357 = vadd.f32 %v1355, 1.0
    %v1358 = vrcp.pop %v1356
    %v1359 = vmul.f32 1.0, %v1358
    %v1360 = vrcp.pop %v1357
    %v1361 = vmul.f32 1.0, %v1360
    %v1362 = vtanh.pop %v1349
    %v1364 = vrot.slane %v1230, 7
    %v1366 = vmul.f32 %v1359, %v1364
    %v1367 = vmul.f32 %v1359, %v1362
    %1369 = vrot.lane.b32.xlu0 %v1367, 64
    %v1370 = vpop.permute.xlu0 %1369
    %v1372 = vadd.f32 %v1366, %v1370
    %v1373 = vtanh.pop %v1372
    %v1374 = vmul.f32 %v1361, %v1373
    %1376 = vrot.lane.b32.xlu0 %v1374, 64
    %v1377 = vpop.permute.xlu0 %1376
    %vm1379 = vcmask 259077
    %1380 = vst.msk [vmem:[#allocation2] sm:$0x20] %vm1379, %v1377
    %1381 = vrot.lane.b32.xlu0 %v1374, 32
    %v1382 = vpop.permute.xlu0 %1381
    %1384 = vst.msk [vmem:[#allocation3] sm:$0x20] %vm1379, %v1382
    %s1385 = sld [smem:[#allocation11 + $0x6]]
    %s1386 = sshra.s32 %s1385, 3
    %s1387 = sand.u32 %s1385, 7
    %s1388 = sshra.s32 %s1385, 3
    %s1389 = sand.u32 %s1385, 7
    %s1390 = smul.u32 %s1386, 2
    %s1391 = smul.u32 %s1390, 8
    %s1392 = sadd.s32 %s1391, %s1389
    %s1393 = scalar_lea.vmem [#allocation19], %s1392
    %v1394 = vld [vmem:[%s1393] ss:$8 sm:$0x3]
    %v1396 = vlaneseq
    %v1397 = vshrl.u32 %v1396, 7
    %v1398 = vsub.s32 0, %v1397
    %v1399 = vrot.slane %v1394, %v1398
    %v1400 = vlaneseq
    %v1401 = vshrl.u32 %v1400, 7
    %v1402 = vsub.s32 1, %v1401
    %v1403 = vrot.slane %v1394, %v1402
    %v1406 = vadd.f32 %v516, %v1399
    %v1407 = vadd.f32 %v518, %v1403
    %v1408 = vrot.slane %v1374, 5
    %1409 = vrot.lane.b32.xlu0 %v1408, 64
    %v1410 = vpop.permute.xlu0 %1409
    %v1411 = vsel %vm565, %v1410, 0
    %1413 = vmatprep.subr.mxu0 %v527
    %1414 = vmatpush1.msra.mxu0 %v526
    %1415 = vmatprep.subr.mxu0 %v529
    %1416 = vmatpush1.msra.mxu0 %v528
    %1417 = vmatprep.subr.mxu0 %v531
    %1418 = vmatpush1.msra.mxu0 %v530
    %1419 = vmatprep.subr.mxu0 %v533
    %1420 = vmatpush1.msra.mxu0 %v532
    %1421 = vmatprep.subr.mxu0 %v535
    %1422 = vmatpush1.msra.mxu0 %v534
    %1423 = vmatprep.subr.mxu0 %v537
    %1424 = vmatpush1.msra.mxu0 %v536
    %1425 = vmatprep.subr.mxu0 %v539
    %1426 = vmatpush1.msra.mxu0 %v538
    %1427 = vmatprep.subr.mxu0 %v541
    %1428 = vmatpush1.msra.mxu0 %v540
    %1429 = vmatprep.subr.mxu0 0.0
    %1430 = vmatpush1.msra.mxu0 0.0
    %1431 = vmatprep.subr.mxu0 0.0
    %1432 = vmatpush1.msra.mxu0 0.0
    %1433 = vmatprep.subr.mxu0 0.0
    %1434 = vmatpush1.msra.mxu0 0.0
    %1435 = vmatprep.subr.mxu0 0.0
    %1436 = vmatpush1.msra.mxu0 0.0
    %1437 = vmatprep.subr.mxu0 0.0
    %1438 = vmatpush1.msra.mxu0 0.0
    %1439 = vmatprep.subr.mxu0 0.0
    %1440 = vmatpush1.msra.mxu0 0.0
    %1441 = vmatprep.subr.mxu0 0.0
    %1442 = vmatpush1.msra.mxu0 0.0
    %1443 = vmatprep.subr.mxu0 0.0
    %1444 = vmatpush1.msra.mxu0 0.0
    %1445 = vmatprep.subr.mxu0 0.0
    %1446 = vmatpush1.msra.mxu0 0.0
    %1447 = vmatprep.subr.mxu0 0.0
    %1448 = vmatpush1.msra.mxu0 0.0
    %1449 = vmatprep.subr.mxu0 0.0
    %1450 = vmatpush1.msra.mxu0 0.0
    %1451 = vmatprep.subr.mxu0 0.0
    %1452 = vmatpush1.msra.mxu0 0.0
    %1453 = vmatprep.subr.mxu0 0.0
    %1454 = vmatpush1.msra.mxu0 0.0
    %1455 = vmatprep.subr.mxu0 0.0
    %1456 = vmatpush1.msra.mxu0 0.0
    %1457 = vmatprep.subr.mxu0 0.0
    %1458 = vmatpush1.msra.mxu0 0.0
    %1459 = vmatprep.subr.mxu0 0.0
    %1460 = vmatpush1.msra.mxu0 0.0
    %1461 = vmatprep.subr.mxu0 0.0
    %1462 = vmatpush1.msra.mxu0 0.0
    %1463 = vmatprep.subr.mxu0 0.0
    %1464 = vmatpush1.msra.mxu0 0.0
    %1465 = vmatprep.subr.mxu0 0.0
    %1466 = vmatpush1.msra.mxu0 0.0
    %1467 = vmatprep.subr.mxu0 0.0
    %1468 = vmatpush1.msra.mxu0 0.0
    %1469 = vmatprep.subr.mxu0 0.0
    %1470 = vmatpush1.msra.mxu0 0.0
    %1471 = vmatprep.subr.mxu0 0.0
    %1472 = vmatpush1.msra.mxu0 0.0
    %1473 = vmatprep.subr.mxu0 0.0
    %1474 = vmatpush1.msra.mxu0 0.0
    %1475 = vmatprep.subr.mxu0 0.0
    %1476 = vmatpush1.msra.mxu0 0.0
    %1477 = vmatprep.mubr.f32.mxu0 0.0
    %1478 = vmatmul.mubr.f32.gmra.mrb[0].mxu0 %v1411
    %v1479 = vpop.f32.mrb[0].mxu0
    %v1480 = vadd.f32 0.0, %v1479
    %v1481 = vpop.f32.mrb[0].mxu0
    %v1482 = vadd.f32 0.0, %v1481
    %1483 = vdwg.mxu0
    %v1486 = vrot.slane %v1480, 2
    %v1487 = vrot.slane %v1482, 2
    %v1490 = vadd.f32 %v1406, %v1486
    %v1491 = vadd.f32 %v1407, %v1487
    %v1492 = vxor.u32 %v1490, 2147483648
    %v1493 = vxor.u32 %v1491, 2147483648
    %v1494 = vmul.f32 %v1492, 1.442695
    %v1495 = vpow.pop %v1494
    %v1496 = vmul.f32 %v1493, 1.442695
    %v1497 = vpow.pop %v1496
    %v1498 = vadd.f32 %v1495, 1.0
    %v1499 = vadd.f32 %v1497, 1.0
    %v1500 = vrcp.pop %v1498
    %v1501 = vmul.f32 1.0, %v1500
    %v1502 = vrcp.pop %v1499
    %v1503 = vmul.f32 1.0, %v1502
    %v1504 = vtanh.pop %v1491
    %v1506 = vrot.slane %v1372, 7
    %v1508 = vmul.f32 %v1501, %v1506
    %v1509 = vmul.f32 %v1501, %v1504
    %1511 = vrot.lane.b32.xlu0 %v1509, 64
    %v1512 = vpop.permute.xlu0 %1511
    %v1514 = vadd.f32 %v1508, %v1512
    %v1515 = vtanh.pop %v1514
    %v1516 = vmul.f32 %v1503, %v1515
    %1518 = vrot.lane.b32.xlu0 %v1516, 64
    %v1519 = vpop.permute.xlu0 %1518
    %vm1521 = vcmask 260102
    %1522 = vst.msk [vmem:[#allocation2] sm:$0x40] %vm1521, %v1519
    %1523 = vrot.lane.b32.xlu0 %v1516, 32
    %v1524 = vpop.permute.xlu0 %1523
    %1526 = vst.msk [vmem:[#allocation3] sm:$0x40] %vm1521, %v1524
    %s1527 = sld [smem:[#allocation11 + $0x7]]
    %s1528 = sshra.s32 %s1527, 3
    %s1529 = sand.u32 %s1527, 7
    %s1530 = sshra.s32 %s1527, 3
    %s1531 = sand.u32 %s1527, 7
    %s1532 = smul.u32 %s1528, 2
    %s1533 = smul.u32 %s1532, 8
    %s1534 = sadd.s32 %s1533, %s1531
    %s1535 = scalar_lea.vmem [#allocation19], %s1534
    %v1536 = vld [vmem:[%s1535] ss:$8 sm:$0x3]
    %v1538 = vlaneseq
    %v1539 = vshrl.u32 %v1538, 7
    %v1540 = vsub.s32 0, %v1539
    %v1541 = vrot.slane %v1536, %v1540
    %v1542 = vlaneseq
    %v1543 = vshrl.u32 %v1542, 7
    %v1544 = vsub.s32 1, %v1543
    %v1545 = vrot.slane %v1536, %v1544
    %v1548 = vadd.f32 %v516, %v1541
    %v1549 = vadd.f32 %v518, %v1545
    %v1550 = vrot.slane %v1516, 6
    %1551 = vrot.lane.b32.xlu0 %v1550, 64
    %v1552 = vpop.permute.xlu0 %1551
    %v1553 = vsel %vm565, %v1552, 0
    %1555 = vmatprep.subr.mxu0 %v527
    %1556 = vmatpush1.msra.mxu0 %v526
    %1557 = vmatprep.subr.mxu0 %v529
    %1558 = vmatpush1.msra.mxu0 %v528
    %1559 = vmatprep.subr.mxu0 %v531
    %1560 = vmatpush1.msra.mxu0 %v530
    %1561 = vmatprep.subr.mxu0 %v533
    %1562 = vmatpush1.msra.mxu0 %v532
    %1563 = vmatprep.subr.mxu0 %v535
    %1564 = vmatpush1.msra.mxu0 %v534
    %1565 = vmatprep.subr.mxu0 %v537
    %1566 = vmatpush1.msra.mxu0 %v536
    %1567 = vmatprep.subr.mxu0 %v539
    %1568 = vmatpush1.msra.mxu0 %v538
    %1569 = vmatprep.subr.mxu0 %v541
    %1570 = vmatpush1.msra.mxu0 %v540
    %1571 = vmatprep.subr.mxu0 0.0
    %1572 = vmatpush1.msra.mxu0 0.0
    %1573 = vmatprep.subr.mxu0 0.0
    %1574 = vmatpush1.msra.mxu0 0.0
    %1575 = vmatprep.subr.mxu0 0.0
    %1576 = vmatpush1.msra.mxu0 0.0
    %1577 = vmatprep.subr.mxu0 0.0
    %1578 = vmatpush1.msra.mxu0 0.0
    %1579 = vmatprep.subr.mxu0 0.0
    %1580 = vmatpush1.msra.mxu0 0.0
    %1581 = vmatprep.subr.mxu0 0.0
    %1582 = vmatpush1.msra.mxu0 0.0
    %1583 = vmatprep.subr.mxu0 0.0
    %1584 = vmatpush1.msra.mxu0 0.0
    %1585 = vmatprep.subr.mxu0 0.0
    %1586 = vmatpush1.msra.mxu0 0.0
    %1587 = vmatprep.subr.mxu0 0.0
    %1588 = vmatpush1.msra.mxu0 0.0
    %1589 = vmatprep.subr.mxu0 0.0
    %1590 = vmatpush1.msra.mxu0 0.0
    %1591 = vmatprep.subr.mxu0 0.0
    %1592 = vmatpush1.msra.mxu0 0.0
    %1593 = vmatprep.subr.mxu0 0.0
    %1594 = vmatpush1.msra.mxu0 0.0
    %1595 = vmatprep.subr.mxu0 0.0
    %1596 = vmatpush1.msra.mxu0 0.0
    %1597 = vmatprep.subr.mxu0 0.0
    %1598 = vmatpush1.msra.mxu0 0.0
    %1599 = vmatprep.subr.mxu0 0.0
    %1600 = vmatpush1.msra.mxu0 0.0
    %1601 = vmatprep.subr.mxu0 0.0
    %1602 = vmatpush1.msra.mxu0 0.0
    %1603 = vmatprep.subr.mxu0 0.0
    %1604 = vmatpush1.msra.mxu0 0.0
    %1605 = vmatprep.subr.mxu0 0.0
    %1606 = vmatpush1.msra.mxu0 0.0
    %1607 = vmatprep.subr.mxu0 0.0
    %1608 = vmatpush1.msra.mxu0 0.0
    %1609 = vmatprep.subr.mxu0 0.0
    %1610 = vmatpush1.msra.mxu0 0.0
    %1611 = vmatprep.subr.mxu0 0.0
    %1612 = vmatpush1.msra.mxu0 0.0
    %1613 = vmatprep.subr.mxu0 0.0
    %1614 = vmatpush1.msra.mxu0 0.0
    %1615 = vmatprep.subr.mxu0 0.0
    %1616 = vmatpush1.msra.mxu0 0.0
    %1617 = vmatprep.subr.mxu0 0.0
    %1618 = vmatpush1.msra.mxu0 0.0
    %1619 = vmatprep.mubr.f32.mxu0 0.0
    %1620 = vmatmul.mubr.f32.gmra.mrb[0].mxu0 %v1553
    %v1621 = vpop.f32.mrb[0].mxu0
    %v1622 = vadd.f32 0.0, %v1621
    %v1623 = vpop.f32.mrb[0].mxu0
    %v1624 = vadd.f32 0.0, %v1623
    %1625 = vdwg.mxu0
    %v1628 = vrot.slane %v1622, 1
    %v1629 = vrot.slane %v1624, 1
    %v1632 = vadd.f32 %v1548, %v1628
    %v1633 = vadd.f32 %v1549, %v1629
    %v1634 = vxor.u32 %v1632, 2147483648
    %v1635 = vxor.u32 %v1633, 2147483648
    %v1636 = vmul.f32 %v1634, 1.442695
    %v1637 = vpow.pop %v1636
    %v1638 = vmul.f32 %v1635, 1.442695
    %v1639 = vpow.pop %v1638
    %v1640 = vadd.f32 %v1637, 1.0
    %v1641 = vadd.f32 %v1639, 1.0
    %v1642 = vrcp.pop %v1640
    %v1643 = vmul.f32 1.0, %v1642
    %v1644 = vrcp.pop %v1641
    %v1645 = vmul.f32 1.0, %v1644
    %v1646 = vtanh.pop %v1633
    %v1648 = vrot.slane %v1514, 7
    %v1650 = vmul.f32 %v1643, %v1648
    %v1651 = vmul.f32 %v1643, %v1646
    %1653 = vrot.lane.b32.xlu0 %v1651, 64
    %v1654 = vpop.permute.xlu0 %1653
    %v1656 = vadd.f32 %v1650, %v1654
    %v1657 = vtanh.pop %v1656
    %v1658 = vmul.f32 %v1645, %v1657
    %1660 = vrot.lane.b32.xlu0 %v1658, 64
    %v1661 = vpop.permute.xlu0 %1660
    %vm1663 = vcmask 261127
    %1664 = vst.msk [vmem:[#allocation2] sm:$0x80] %vm1663, %v1661
    %1665 = vrot.lane.b32.xlu0 %v1658, 32
    %v1666 = vpop.permute.xlu0 %1665
    %1668 = vst.msk [vmem:[#allocation3] sm:$0x80] %vm1663, %v1666
    %v1669 = vrot.slane %v1658, 7
    %1670 = vrot.lane.b32.xlu0 %v1669, 64
    %v1671 = vpop.permute.xlu0 %1670
    %v1672 = vsel %vm565, %v1671, 0
    %1674 = vmatprep.subr.mxu0 %v527
    %1675 = vmatpush1.msra.mxu0 %v526
    %1676 = vmatprep.subr.mxu0 %v529
    %1677 = vmatpush1.msra.mxu0 %v528
    %1678 = vmatprep.subr.mxu0 %v531
    %1679 = vmatpush1.msra.mxu0 %v530
    %1680 = vmatprep.subr.mxu0 %v533
    %1681 = vmatpush1.msra.mxu0 %v532
    %1682 = vmatprep.subr.mxu0 %v535
    %1683 = vmatpush1.msra.mxu0 %v534
    %1684 = vmatprep.subr.mxu0 %v537
    %1685 = vmatpush1.msra.mxu0 %v536
    %1686 = vmatprep.subr.mxu0 %v539
    %1687 = vmatpush1.msra.mxu0 %v538
    %1688 = vmatprep.subr.mxu0 %v541
    %1689 = vmatpush1.msra.mxu0 %v540
    %1690 = vmatprep.subr.mxu0 0.0
    %1691 = vmatpush1.msra.mxu0 0.0
    %1692 = vmatprep.subr.mxu0 0.0
    %1693 = vmatpush1.msra.mxu0 0.0
    %1694 = vmatprep.subr.mxu0 0.0
    %1695 = vmatpush1.msra.mxu0 0.0
    %1696 = vmatprep.subr.mxu0 0.0
    %1697 = vmatpush1.msra.mxu0 0.0
    %1698 = vmatprep.subr.mxu0 0.0
    %1699 = vmatpush1.msra.mxu0 0.0
    %1700 = vmatprep.subr.mxu0 0.0
    %1701 = vmatpush1.msra.mxu0 0.0
    %1702 = vmatprep.subr.mxu0 0.0
    %1703 = vmatpush1.msra.mxu0 0.0
    %1704 = vmatprep.subr.mxu0 0.0
    %1705 = vmatpush1.msra.mxu0 0.0
    %1706 = vmatprep.subr.mxu0 0.0
    %1707 = vmatpush1.msra.mxu0 0.0
    %1708 = vmatprep.subr.mxu0 0.0
    %1709 = vmatpush1.msra.mxu0 0.0
    %1710 = vmatprep.subr.mxu0 0.0
    %1711 = vmatpush1.msra.mxu0 0.0
    %1712 = vmatprep.subr.mxu0 0.0
    %1713 = vmatpush1.msra.mxu0 0.0
    %1714 = vmatprep.subr.mxu0 0.0
    %1715 = vmatpush1.msra.mxu0 0.0
    %1716 = vmatprep.subr.mxu0 0.0
    %1717 = vmatpush1.msra.mxu0 0.0
    %1718 = vmatprep.subr.mxu0 0.0
    %1719 = vmatpush1.msra.mxu0 0.0
    %1720 = vmatprep.subr.mxu0 0.0
    %1721 = vmatpush1.msra.mxu0 0.0
    %1722 = vmatprep.subr.mxu0 0.0
    %1723 = vmatpush1.msra.mxu0 0.0
    %1724 = vmatprep.subr.mxu0 0.0
    %1725 = vmatpush1.msra.mxu0 0.0
    %1726 = vmatprep.subr.mxu0 0.0
    %1727 = vmatpush1.msra.mxu0 0.0
    %1728 = vmatprep.subr.mxu0 0.0
    %1729 = vmatpush1.msra.mxu0 0.0
    %1730 = vmatprep.subr.mxu0 0.0
    %1731 = vmatpush1.msra.mxu0 0.0
    %1732 = vmatprep.subr.mxu0 0.0
    %1733 = vmatpush1.msra.mxu0 0.0
    %1734 = vmatprep.subr.mxu0 0.0
    %1735 = vmatpush1.msra.mxu0 0.0
    %1736 = vmatprep.subr.mxu0 0.0
    %1737 = vmatpush1.msra.mxu0 0.0
    %1738 = vmatprep.mubr.f32.mxu0 0.0
    %1739 = vmatmul.mubr.f32.gmra.mrb[0].mxu0 %v1672
    %v1740 = vpop.f32.mrb[0].mxu0
    %v1741 = vadd.f32 0.0, %v1740
    %v1742 = vpop.f32.mrb[0].mxu0
    %v1743 = vadd.f32 0.0, %v1742
    %1744 = vdwg.mxu0
    %v1745 = vadd.f32 %v522, %v1741
    %v1746 = vadd.f32 %v524, %v1743
    %v1747 = vxor.u32 %v1745, 2147483648
    %v1748 = vxor.u32 %v1746, 2147483648
    %v1749 = vmul.f32 %v1747, 1.442695
    %v1750 = vpow.pop %v1749
    %v1751 = vmul.f32 %v1748, 1.442695
    %v1752 = vpow.pop %v1751
    %v1753 = vadd.f32 %v1750, 1.0
    %v1754 = vadd.f32 %v1752, 1.0
    %v1755 = vrcp.pop %v1753
    %v1756 = vmul.f32 1.0, %v1755
    %v1757 = vrcp.pop %v1754
    %v1758 = vmul.f32 1.0, %v1757
    %v1759 = vtanh.pop %v1746
    %v1761 = vrot.slane %v1656, 7
    %v1763 = vmul.f32 %v1756, %v1761
    %v1764 = vmul.f32 %v1756, %v1759
    %1766 = vrot.lane.b32.xlu0 %v1764, 64
    %v1767 = vpop.permute.xlu0 %1766
    %v1769 = vadd.f32 %v1763, %v1767
    %v1770 = vtanh.pop %v1769
    %v1771 = vmul.f32 %v1758, %v1770
    %1773 = vrot.lane.b32.xlu0 %v1771, 64
    %v1774 = vpop.permute.xlu0 %1773
    %1776 = vst.msk [vmem:[#allocation2 + $0x8] sm:$0x1] %vm672, %v1774
    %v1777 = vsel %vm565, %v1774, 0
    %1779 = vmatprep.subr.mxu0 %v527
    %1780 = vmatpush1.msra.mxu0 %v526
    %1781 = vmatprep.subr.mxu0 %v529
    %1782 = vmatpush1.msra.mxu0 %v528
    %1783 = vmatprep.subr.mxu0 %v531
    %1784 = vmatpush1.msra.mxu0 %v530
    %1785 = vmatprep.subr.mxu0 %v533
    %1786 = vmatpush1.msra.mxu0 %v532
    %1787 = vmatprep.subr.mxu0 %v535
    %1788 = vmatpush1.msra.mxu0 %v534
    %1789 = vmatprep.subr.mxu0 %v537
    %1790 = vmatpush1.msra.mxu0 %v536
    %1791 = vmatprep.subr.mxu0 %v539
    %1792 = vmatpush1.msra.mxu0 %v538
    %1793 = vmatprep.subr.mxu0 %v541
    %1794 = vmatpush1.msra.mxu0 %v540
    %1795 = vmatprep.subr.mxu0 0.0
    %1796 = vmatpush1.msra.mxu0 0.0
    %1797 = vmatprep.subr.mxu0 0.0
    %1798 = vmatpush1.msra.mxu0 0.0
    %1799 = vmatprep.subr.mxu0 0.0
    %1800 = vmatpush1.msra.mxu0 0.0
    %1801 = vmatprep.subr.mxu0 0.0
    %1802 = vmatpush1.msra.mxu0 0.0
    %1803 = vmatprep.subr.mxu0 0.0
    %1804 = vmatpush1.msra.mxu0 0.0
    %1805 = vmatprep.subr.mxu0 0.0
    %1806 = vmatpush1.msra.mxu0 0.0
    %1807 = vmatprep.subr.mxu0 0.0
    %1808 = vmatpush1.msra.mxu0 0.0
    %1809 = vmatprep.subr.mxu0 0.0
    %1810 = vmatpush1.msra.mxu0 0.0
    %1811 = vmatprep.subr.mxu0 0.0
    %1812 = vmatpush1.msra.mxu0 0.0
    %1813 = vmatprep.subr.mxu0 0.0
    %1814 = vmatpush1.msra.mxu0 0.0
    %1815 = vmatprep.subr.mxu0 0.0
    %1816 = vmatpush1.msra.mxu0 0.0
    %1817 = vmatprep.subr.mxu0 0.0
    %1818 = vmatpush1.msra.mxu0 0.0
    %1819 = vmatprep.subr.mxu0 0.0
    %1820 = vmatpush1.msra.mxu0 0.0
    %1821 = vmatprep.subr.mxu0 0.0
    %1822 = vmatpush1.msra.mxu0 0.0
    %1823 = vmatprep.subr.mxu0 0.0
    %1824 = vmatpush1.msra.mxu0 0.0
    %1825 = vmatprep.subr.mxu0 0.0
    %1826 = vmatpush1.msra.mxu0 0.0
    %1827 = vmatprep.subr.mxu0 0.0
    %1828 = vmatpush1.msra.mxu0 0.0
    %1829 = vmatprep.subr.mxu0 0.0
    %1830 = vmatpush1.msra.mxu0 0.0
    %1831 = vmatprep.subr.mxu0 0.0
    %1832 = vmatpush1.msra.mxu0 0.0
    %1833 = vmatprep.subr.mxu0 0.0
    %1834 = vmatpush1.msra.mxu0 0.0
    %1835 = vmatprep.subr.mxu0 0.0
    %1836 = vmatpush1.msra.mxu0 0.0
    %1837 = vmatprep.subr.mxu0 0.0
    %1838 = vmatpush1.msra.mxu0 0.0
    %1839 = vmatprep.subr.mxu0 0.0
    %1840 = vmatpush1.msra.mxu0 0.0
    %1841 = vmatprep.subr.mxu0 0.0
    %1842 = vmatpush1.msra.mxu0 0.0
    %1843 = vmatprep.mubr.f32.mxu0 0.0
    %1844 = vmatmul.mubr.f32.gmra.mrb[0].mxu0 %v1777
    %v1845 = vpop.f32.mrb[0].mxu0
    %v1846 = vadd.f32 0.0, %v1845
    %v1847 = vpop.f32.mrb[0].mxu0
    %v1848 = vadd.f32 0.0, %v1847
    %1849 = vdwg.mxu0
    %v1852 = vrot.slane %v1846, 7
    %v1853 = vrot.slane %v1848, 7
    %v1856 = vadd.f32 %v522, %v1852
    %v1857 = vadd.f32 %v524, %v1853
    %v1858 = vxor.u32 %v1856, 2147483648
    %v1859 = vxor.u32 %v1857, 2147483648
    %v1860 = vmul.f32 %v1858, 1.442695
    %v1861 = vpow.pop %v1860
    %v1862 = vmul.f32 %v1859, 1.442695
    %v1863 = vpow.pop %v1862
    %v1864 = vadd.f32 %v1861, 1.0
    %v1865 = vadd.f32 %v1863, 1.0
    %v1866 = vrcp.pop %v1864
    %v1867 = vmul.f32 1.0, %v1866
    %v1868 = vrcp.pop %v1865
    %v1869 = vmul.f32 1.0, %v1868
    %v1870 = vtanh.pop %v1857
    %v1872 = vrot.slane %v1769, 7
    %v1874 = vmul.f32 %v1867, %v1872
    %v1875 = vmul.f32 %v1867, %v1870
    %1877 = vrot.lane.b32.xlu0 %v1875, 64
    %v1878 = vpop.permute.xlu0 %1877
    %v1880 = vadd.f32 %v1874, %v1878
    %v1881 = vtanh.pop %v1880
    %v1882 = vmul.f32 %v1869, %v1881
    %1884 = vrot.lane.b32.xlu0 %v1882, 64
    %v1885 = vpop.permute.xlu0 %1884
    %1887 = vst.msk [vmem:[#allocation2 + $0x8] sm:$0x2] %vm811, %v1885
    %v1888 = vld [vmem:[#allocation2] sm:$0xff]
    %v1889 = vld [vmem:[#allocation2 + $0x8] sm:$0x3]
    %v1890 = vld [vmem:[#allocation3] sm:$0xff]
    %v1891 = vld [vmem:[#allocation22] sm:$0xff]
    %v1892 = vld [vmem:[#allocation22 + $0x8] sm:$0xff]
    %v1893 = vld [vmem:[#allocation22 + $0x10] sm:$0xff]
    %v1894 = vld [vmem:[#allocation22 + $0x18] sm:$0xff]
    %v1895 = vld [vmem:[#allocation24] sm:$0x1]
    %v1897 = vlaneseq
    %v1898 = vshrl.u32 %v1897, 7
    %v1899 = vsub.s32 0, %v1898
    %v1900 = vrot.slane %v1895, %v1899
    %vm1902 = vcmask 261120
    %v1904 = vsel %vm1902, %v1890, 0
    %1906 = vmatprep.subr.mxu0 0.0
    %1907 = vmatpush1.msra.mxu0 %v1891
    %1908 = vmatprep.subr.mxu0 0.0
    %1909 = vmatpush1.msra.mxu0 %v1892
    %1910 = vmatprep.subr.mxu0 0.0
    %1911 = vmatpush1.msra.mxu0 %v1893
    %1912 = vmatprep.subr.mxu0 0.0
    %1913 = vmatpush1.msra.mxu0 %v1894
    %1914 = vmatprep.subr.mxu0 0.0
    %1915 = vmatpush1.msra.mxu0 0.0
    %1916 = vmatprep.subr.mxu0 0.0
    %1917 = vmatpush1.msra.mxu0 0.0
    %1918 = vmatprep.subr.mxu0 0.0
    %1919 = vmatpush1.msra.mxu0 0.0
    %1920 = vmatprep.subr.mxu0 0.0
    %1921 = vmatpush1.msra.mxu0 0.0
    %1922 = vmatprep.subr.mxu0 0.0
    %1923 = vmatpush1.msra.mxu0 0.0
    %1924 = vmatprep.subr.mxu0 0.0
    %1925 = vmatpush1.msra.mxu0 0.0
    %1926 = vmatprep.subr.mxu0 0.0
    %1927 = vmatpush1.msra.mxu0 0.0
    %1928 = vmatprep.subr.mxu0 0.0
    %1929 = vmatpush1.msra.mxu0 0.0
    %1930 = vmatprep.subr.mxu0 0.0
    %1931 = vmatpush1.msra.mxu0 0.0
    %1932 = vmatprep.subr.mxu0 0.0
    %1933 = vmatpush1.msra.mxu0 0.0
    %1934 = vmatprep.subr.mxu0 0.0
    %1935 = vmatpush1.msra.mxu0 0.0
    %1936 = vmatprep.subr.mxu0 0.0
    %1937 = vmatpush1.msra.mxu0 0.0
    %1938 = vmatprep.subr.mxu0 0.0
    %1939 = vmatpush1.msra.mxu0 0.0
    %1940 = vmatprep.subr.mxu0 0.0
    %1941 = vmatpush1.msra.mxu0 0.0
    %1942 = vmatprep.subr.mxu0 0.0
    %1943 = vmatpush1.msra.mxu0 0.0
    %1944 = vmatprep.subr.mxu0 0.0
    %1945 = vmatpush1.msra.mxu0 0.0
    %1946 = vmatprep.subr.mxu0 0.0
    %1947 = vmatpush1.msra.mxu0 0.0
    %1948 = vmatprep.subr.mxu0 0.0
    %1949 = vmatpush1.msra.mxu0 0.0
    %1950 = vmatprep.subr.mxu0 0.0
    %1951 = vmatpush1.msra.mxu0 0.0
    %1952 = vmatprep.subr.mxu0 0.0
    %1953 = vmatpush1.msra.mxu0 0.0
    %1954 = vmatprep.subr.mxu0 0.0
    %1955 = vmatpush1.msra.mxu0 0.0
    %1956 = vmatprep.subr.mxu0 0.0
    %1957 = vmatpush1.msra.mxu0 0.0
    %1958 = vmatprep.subr.mxu0 0.0
    %1959 = vmatpush1.msra.mxu0 0.0
    %1960 = vmatprep.subr.mxu0 0.0
    %1961 = vmatpush1.msra.mxu0 0.0
    %1962 = vmatprep.subr.mxu0 0.0
    %1963 = vmatpush1.msra.mxu0 0.0
    %1964 = vmatprep.subr.mxu0 0.0
    %1965 = vmatpush1.msra.mxu0 0.0
    %1966 = vmatprep.subr.mxu0 0.0
    %1967 = vmatpush1.msra.mxu0 0.0
    %1968 = vmatprep.subr.mxu0 0.0
    %1969 = vmatpush1.msra.mxu0 0.0
    %1970 = vmatprep.mubr.f32.mxu0 0.0
    %1971 = vmatmul.mubr.f32.gmra.mrb[0].mxu0 %v1904
    %v1972 = vpop.f32.mrb[0].mxu0
    %v1973 = vadd.f32 %v1900, %v1972
    %v1974 = vpop.f32.mrb[0].mxu0
    %1975 = vdwg.mxu0
    %v1976 = vld [vmem:[%s13] sm:$0xff]
    %v1977 = vld [vmem:[%s13 + $0x8] sm:$0xff]
    %v1978 = vld [vmem:[%s13 + $0x10] sm:$0xff]
    %v1979 = vld [vmem:[%s13 + $0x18] sm:$0xff]
    %v1980 = vld [vmem:[#allocation25] sm:$0x1]
    %v1982 = vlaneseq
    %v1983 = vshrl.u32 %v1982, 7
    %v1984 = vsub.s32 0, %v1983
    %v1985 = vrot.slane %v1980, %v1984
    %v1988 = vsel %vm1902, %v1888, 0
    %v1991 = vsel %vm1902, %v1889, 0
    %1993 = vmatprep.subr.mxu0 0.0
    %1994 = vmatpush1.msra.mxu0 %v1976
    %1995 = vmatprep.subr.mxu0 0.0
    %1996 = vmatpush1.msra.mxu0 %v1977
    %1997 = vmatprep.subr.mxu0 0.0
    %1998 = vmatpush1.msra.mxu0 %v1978
    %1999 = vmatprep.subr.mxu0 0.0
    %2000 = vmatpush1.msra.mxu0 %v1979
    %2001 = vmatprep.subr.mxu0 0.0
    %2002 = vmatpush1.msra.mxu0 0.0
    %2003 = vmatprep.subr.mxu0 0.0
    %2004 = vmatpush1.msra.mxu0 0.0
    %2005 = vmatprep.subr.mxu0 0.0
    %2006 = vmatpush1.msra.mxu0 0.0
    %2007 = vmatprep.subr.mxu0 0.0
    %2008 = vmatpush1.msra.mxu0 0.0
    %2009 = vmatprep.subr.mxu0 0.0
    %2010 = vmatpush1.msra.mxu0 0.0
    %2011 = vmatprep.subr.mxu0 0.0
    %2012 = vmatpush1.msra.mxu0 0.0
    %2013 = vmatprep.subr.mxu0 0.0
    %2014 = vmatpush1.msra.mxu0 0.0
    %2015 = vmatprep.subr.mxu0 0.0
    %2016 = vmatpush1.msra.mxu0 0.0
    %2017 = vmatprep.subr.mxu0 0.0
    %2018 = vmatpush1.msra.mxu0 0.0
    %2019 = vmatprep.subr.mxu0 0.0
    %2020 = vmatpush1.msra.mxu0 0.0
    %2021 = vmatprep.subr.mxu0 0.0
    %2022 = vmatpush1.msra.mxu0 0.0
    %2023 = vmatprep.subr.mxu0 0.0
    %2024 = vmatpush1.msra.mxu0 0.0
    %2025 = vmatprep.subr.mxu0 0.0
    %2026 = vmatpush1.msra.mxu0 0.0
    %2027 = vmatprep.subr.mxu0 0.0
    %2028 = vmatpush1.msra.mxu0 0.0
    %2029 = vmatprep.subr.mxu0 0.0
    %2030 = vmatpush1.msra.mxu0 0.0
    %2031 = vmatprep.subr.mxu0 0.0
    %2032 = vmatpush1.msra.mxu0 0.0
    %2033 = vmatprep.subr.mxu0 0.0
    %2034 = vmatpush1.msra.mxu0 0.0
    %2035 = vmatprep.subr.mxu0 0.0
    %2036 = vmatpush1.msra.mxu0 0.0
    %2037 = vmatprep.subr.mxu0 0.0
    %2038 = vmatpush1.msra.mxu0 0.0
    %2039 = vmatprep.subr.mxu0 0.0
    %2040 = vmatpush1.msra.mxu0 0.0
    %2041 = vmatprep.subr.mxu0 0.0
    %2042 = vmatpush1.msra.mxu0 0.0
    %2043 = vmatprep.subr.mxu0 0.0
    %2044 = vmatpush1.msra.mxu0 0.0
    %2045 = vmatprep.subr.mxu0 0.0
    %2046 = vmatpush1.msra.mxu0 0.0
    %2047 = vmatprep.subr.mxu0 0.0
    %2048 = vmatpush1.msra.mxu0 0.0
    %2049 = vmatprep.subr.mxu0 0.0
    %2050 = vmatpush1.msra.mxu0 0.0
    %2051 = vmatprep.subr.mxu0 0.0
    %2052 = vmatpush1.msra.mxu0 0.0
    %2053 = vmatprep.subr.mxu0 0.0
    %2054 = vmatpush1.msra.mxu0 0.0
    %2055 = vmatprep.subr.mxu0 0.0
    %2056 = vmatpush1.msra.mxu0 0.0
    %2057 = vmatprep.mubr.f32.mxu0 0.0
    %2058 = vmatmul.mubr.f32.gmra.mrb[0].mxu0 %v1988
    %v2059 = vpop.f32.mrb[0].mxu0
    %v2060 = vadd.f32 %v1985, %v2059
    %v2061 = vpop.f32.mrb[0].mxu0
    %2062 = vmatprep.mubr.f32.mxu0 0.0
    %2063 = vmatmul.mubr.f32.gmra.mrb[0].mxu0 %v1991
    %v2064 = vpop.f32.mrb[0].mxu0
    %v2065 = vadd.f32 %v1985, %v2064
    %v2066 = vpop.f32.mrb[0].mxu0
    %2067 = vdwg.mxu0
    %v2069 = vcombine.high %v1973, %v1973
    %v2071 = vunpack.c.l.s4 1966171168
    %v2072 = vunpack.c.0.s8 %v2071
    %v2073 = vlaneseq
    %v2074 = vshrl.u32 %v2073, 7
    %v2075 = vsub.s32 %v2072, %v2074
    %v2076 = vrot.slane %v1973, %v2075
    %v2078 = vunpack.c.l.s4 1966171168
    %v2079 = vunpack.c.0.s8 %v2078
    %v2080 = vlaneseq
    %v2081 = vshrl.u32 %v2080, 7
    %v2082 = vsub.s32 %v2079, %v2081
    %v2083 = vrot.slane %v2069, %v2082
    %v2084 = vcombine.high %v2076, %v2076
    %v2085 = vcombine.high %v2083, %v2083
    %v2087 = vunpack.c.l.s4 1966171168
    %v2088 = vunpack.c.0.s8 %v2087
    %v2089 = vlaneseq
    %v2090 = vshrl.u32 %v2089, 7
    %v2091 = vsub.s32 %v2088, %v2090
    %v2092 = vrot.slane %v2076, %v2091
    %v2094 = vunpack.c.l.s4 1966171168
    %v2095 = vunpack.c.0.s8 %v2094
    %v2096 = vlaneseq
    %v2097 = vshrl.u32 %v2096, 7
    %v2098 = vsub.s32 %v2095, %v2097
    %v2099 = vrot.slane %v2083, %v2098
    %v2101 = vunpack.c.l.s4 1966171168
    %v2102 = vunpack.c.0.s8 %v2101
    %v2103 = vlaneseq
    %v2104 = vshrl.u32 %v2103, 7
    %v2105 = vsub.s32 %v2102, %v2104
    %v2106 = vrot.slane %v2084, %v2105
    %v2108 = vunpack.c.l.s4 1966171168
    %v2109 = vunpack.c.0.s8 %v2108
    %v2110 = vlaneseq
    %v2111 = vshrl.u32 %v2110, 7
    %v2112 = vsub.s32 %v2109, %v2111
    %v2113 = vrot.slane %v2085, %v2112
    %v2114 = vcombine.high %v2092, %v2092
    %v2115 = vcombine.high %v2099, %v2099
    %v2116 = vcombine.high %v2106, %v2106
    %v2117 = vcombine.high %v2113, %v2113
    %v2118 = vlaneseq
    %v2119 = vshrl.u32 %v2118, 7
    %v2120 = vsub.s32 0, %v2119
    %v2121 = vrot.slane %v2092, %v2120
    %v2122 = vlaneseq
    %v2123 = vshrl.u32 %v2122, 7
    %v2124 = vsub.s32 0, %v2123
    %v2125 = vrot.slane %v2106, %v2124
    %v2126 = vlaneseq
    %v2127 = vshrl.u32 %v2126, 7
    %v2128 = vsub.s32 0, %v2127
    %v2129 = vrot.slane %v2114, %v2128
    %v2130 = vlaneseq
    %v2131 = vshrl.u32 %v2130, 7
    %v2132 = vsub.s32 0, %v2131
    %v2133 = vrot.slane %v2116, %v2132
    %v2134 = vlaneseq
    %v2135 = vshrl.u32 %v2134, 7
    %v2136 = vsub.s32 0, %v2135
    %v2137 = vrot.slane %v2099, %v2136
    %v2138 = vlaneseq
    %v2139 = vshrl.u32 %v2138, 7
    %v2140 = vsub.s32 0, %v2139
    %v2141 = vrot.slane %v2113, %v2140
    %v2142 = vlaneseq
    %v2143 = vshrl.u32 %v2142, 7
    %v2144 = vsub.s32 0, %v2143
    %v2145 = vrot.slane %v2115, %v2144
    %v2146 = vlaneseq
    %v2147 = vshrl.u32 %v2146, 7
    %v2148 = vsub.s32 0, %v2147
    %v2149 = vrot.slane %v2117, %v2148
    %v2158 = vadd.f32 %v2121, %v2060
    %v2159 = vadd.f32 %v2121, %v2065
    %v2160 = vadd.f32 %v2125, %v2060
    %v2161 = vadd.f32 %v2125, %v2065
    %v2162 = vadd.f32 %v2129, %v2060
    %v2163 = vadd.f32 %v2129, %v2065
    %v2164 = vadd.f32 %v2133, %v2060
    %v2165 = vadd.f32 %v2133, %v2065
    %v2166 = vadd.f32 %v2137, %v2060
    %v2167 = vadd.f32 %v2137, %v2065
    %v2168 = vadd.f32 %v2141, %v2060
    %v2169 = vadd.f32 %v2141, %v2065
    %v2170 = vadd.f32 %v2145, %v2060
    %v2171 = vadd.f32 %v2145, %v2065
    %v2172 = vadd.f32 %v2149, %v2060
    %v2173 = vadd.f32 %v2149, %v2065
    %v2174 = vtanh.pop %v2158
    %v2175 = vtanh.pop %v2159
    %v2176 = vtanh.pop %v2160
    %v2177 = vtanh.pop %v2161
    %v2178 = vtanh.pop %v2162
    %v2179 = vtanh.pop %v2163
    %v2180 = vtanh.pop %v2164
    %v2181 = vtanh.pop %v2165
    %v2182 = vtanh.pop %v2166
    %v2183 = vtanh.pop %v2167
    %v2184 = vtanh.pop %v2168
    %v2185 = vtanh.pop %v2169
    %v2186 = vtanh.pop %v2170
    %v2187 = vtanh.pop %v2171
    %v2188 = vtanh.pop %v2172
    %v2189 = vtanh.pop %v2173
    %v2190 = vld [vmem:[#allocation27] sm:$0x1]
    %v2192 = vlaneseq
    %v2193 = vshrl.u32 %v2192, 7
    %v2194 = vsub.s32 0, %v2193
    %v2195 = vrot.slane %v2190, %v2194
    %v2197 = vmul.f32 %v2174, %v2195
    %v2198 = vmul.f32 %v2175, %v2195
    %v2199 = vmul.f32 %v2176, %v2195
    %v2200 = vmul.f32 %v2177, %v2195
    %v2201 = vmul.f32 %v2178, %v2195
    %v2202 = vmul.f32 %v2179, %v2195
    %v2203 = vmul.f32 %v2180, %v2195
    %v2204 = vmul.f32 %v2181, %v2195
    %v2205 = vmul.f32 %v2182, %v2195
    %v2206 = vmul.f32 %v2183, %v2195
    %v2207 = vmul.f32 %v2184, %v2195
    %v2208 = vmul.f32 %v2185, %v2195
    %v2209 = vmul.f32 %v2186, %v2195
    %v2210 = vmul.f32 %v2187, %v2195
    %v2211 = vmul.f32 %v2188, %v2195
    %v2212 = vmul.f32 %v2189, %v2195
    %v2213 = vsel %vm1902, %v2197, 0.0
    %2214 = vadd.xlane.f32.xlu0 %v2213
    %v2215 = vpop.xlane.xlu0 %2214
    %vm2216 = vcmask 254976
    %v2217 = vsel %vm2216, %v2198, 0.0
    %2218 = vadd.xlane.f32.xlu0 %v2217
    %v2219 = vpop.xlane.xlu0 %2218
    %v2220 = vsel %vm1902, %v2199, 0.0
    %2221 = vadd.xlane.f32.xlu0 %v2220
    %v2222 = vpop.xlane.xlu0 %2221
    %v2223 = vsel %vm2216, %v2200, 0.0
    %2224 = vadd.xlane.f32.xlu0 %v2223
    %v2225 = vpop.xlane.xlu0 %2224
    %v2226 = vsel %vm1902, %v2201, 0.0
    %2227 = vadd.xlane.f32.xlu0 %v2226
    %v2228 = vpop.xlane.xlu0 %2227
    %v2229 = vsel %vm2216, %v2202, 0.0
    %2230 = vadd.xlane.f32.xlu0 %v2229
    %v2231 = vpop.xlane.xlu0 %2230
    %v2232 = vsel %vm1902, %v2203, 0.0
    %2233 = vadd.xlane.f32.xlu0 %v2232
    %v2234 = vpop.xlane.xlu0 %2233
    %v2235 = vsel %vm2216, %v2204, 0.0
    %2236 = vadd.xlane.f32.xlu0 %v2235
    %v2237 = vpop.xlane.xlu0 %2236
    %v2238 = vsel %vm1902, %v2205, 0.0
    %2239 = vadd.xlane.f32.xlu0 %v2238
    %v2240 = vpop.xlane.xlu0 %2239
    %v2241 = vsel %vm2216, %v2206, 0.0
    %2242 = vadd.xlane.f32.xlu0 %v2241
    %v2243 = vpop.xlane.xlu0 %2242
    %v2244 = vsel %vm1902, %v2207, 0.0
    %2245 = vadd.xlane.f32.xlu0 %v2244
    %v2246 = vpop.xlane.xlu0 %2245
    %v2247 = vsel %vm2216, %v2208, 0.0
    %2248 = vadd.xlane.f32.xlu0 %v2247
    %v2249 = vpop.xlane.xlu0 %2248
    %v2250 = vsel %vm1902, %v2209, 0.0
    %2251 = vadd.xlane.f32.xlu0 %v2250
    %v2252 = vpop.xlane.xlu0 %2251
    %v2253 = vsel %vm2216, %v2210, 0.0
    %2254 = vadd.xlane.f32.xlu0 %v2253
    %v2255 = vpop.xlane.xlu0 %2254
    %v2256 = vsel %vm1902, %v2211, 0.0
    %2257 = vadd.xlane.f32.xlu0 %v2256
    %v2258 = vpop.xlane.xlu0 %2257
    %v2259 = vsel %vm2216, %v2212, 0.0
    %2260 = vadd.xlane.f32.xlu0 %v2259
    %v2261 = vpop.xlane.xlu0 %2260
    %v2262 = vld [vmem:[#allocation4] sm:$0x1]
    %v2264 = vlaneseq
    %v2265 = vshrl.u32 %v2264, 7
    %v2266 = vsub.s32 0, %v2265
    %v2267 = vrot.slane %v2262, %v2266
    %2268 = vset.pattern.permute.xlu0 0
    %2269 = vperm.xlu0 %2268, %v2267
    %v2270 = vpop.permute.xlu0 %2269
    %v2272 = vadd.f32 %v2215, %v2270
    %v2273 = vadd.f32 %v2219, %v2270
    %v2274 = vadd.f32 %v2222, %v2270
    %v2275 = vadd.f32 %v2225, %v2270
    %v2276 = vadd.f32 %v2228, %v2270
    %v2277 = vadd.f32 %v2231, %v2270
    %v2278 = vadd.f32 %v2234, %v2270
    %v2279 = vadd.f32 %v2237, %v2270
    %v2280 = vadd.f32 %v2240, %v2270
    %v2281 = vadd.f32 %v2243, %v2270
    %v2282 = vadd.f32 %v2246, %v2270
    %v2283 = vadd.f32 %v2249, %v2270
    %v2284 = vadd.f32 %v2252, %v2270
    %v2285 = vadd.f32 %v2255, %v2270
    %v2286 = vadd.f32 %v2258, %v2270
    %v2287 = vadd.f32 %v2261, %v2270
    %v2304 = vlaneseq
    %v2305 = vand.u32 %v2304, 127
    %v2306 = vlaneseq
    %v2307 = vshrl.u32 %v2306, 7
    %v2308 = vsub.s32 %v2305, %v2307
    %v2309 = vrot.slane %v2272, %v2308
    %v2310 = vadd.s32 %v2305, 4294967288
    %v2311 = vlaneseq
    %v2312 = vshrl.u32 %v2311, 7
    %v2313 = vsub.s32 %v2310, %v2312
    %v2314 = vrot.slane %v2273, %v2313
    %vm2315 = vcmask 130112
    %v2316 = vsel %vm2315, %v2314, %v2309
    %v2317 = vlaneseq
    %v2318 = vshrl.u32 %v2317, 7
    %v2319 = vsub.s32 %v2305, %v2318
    %v2320 = vrot.slane %v2274, %v2319
    %v2321 = vlaneseq
    %v2322 = vshrl.u32 %v2321, 7
    %v2323 = vsub.s32 %v2310, %v2322
    %v2324 = vrot.slane %v2275, %v2323
    %v2325 = vsel %vm2315, %v2324, %v2320
    %v2326 = vlaneseq
    %v2327 = vshrl.u32 %v2326, 7
    %v2328 = vsub.s32 %v2305, %v2327
    %v2329 = vrot.slane %v2276, %v2328
    %v2330 = vlaneseq
    %v2331 = vshrl.u32 %v2330, 7
    %v2332 = vsub.s32 %v2310, %v2331
    %v2333 = vrot.slane %v2277, %v2332
    %v2334 = vsel %vm2315, %v2333, %v2329
    %v2335 = vlaneseq
    %v2336 = vshrl.u32 %v2335, 7
    %v2337 = vsub.s32 %v2305, %v2336
    %v2338 = vrot.slane %v2278, %v2337
    %v2339 = vlaneseq
    %v2340 = vshrl.u32 %v2339, 7
    %v2341 = vsub.s32 %v2310, %v2340
    %v2342 = vrot.slane %v2279, %v2341
    %v2343 = vsel %vm2315, %v2342, %v2338
    %v2344 = vlaneseq
    %v2345 = vshrl.u32 %v2344, 7
    %v2346 = vsub.s32 %v2305, %v2345
    %v2347 = vrot.slane %v2280, %v2346
    %v2348 = vlaneseq
    %v2349 = vshrl.u32 %v2348, 7
    %v2350 = vsub.s32 %v2310, %v2349
    %v2351 = vrot.slane %v2281, %v2350
    %v2352 = vsel %vm2315, %v2351, %v2347
    %v2353 = vlaneseq
    %v2354 = vshrl.u32 %v2353, 7
    %v2355 = vsub.s32 %v2305, %v2354
    %v2356 = vrot.slane %v2282, %v2355
    %v2357 = vlaneseq
    %v2358 = vshrl.u32 %v2357, 7
    %v2359 = vsub.s32 %v2310, %v2358
    %v2360 = vrot.slane %v2283, %v2359
    %v2361 = vsel %vm2315, %v2360, %v2356
    %v2362 = vlaneseq
    %v2363 = vshrl.u32 %v2362, 7
    %v2364 = vsub.s32 %v2305, %v2363
    %v2365 = vrot.slane %v2284, %v2364
    %v2366 = vlaneseq
    %v2367 = vshrl.u32 %v2366, 7
    %v2368 = vsub.s32 %v2310, %v2367
    %v2369 = vrot.slane %v2285, %v2368
    %v2370 = vsel %vm2315, %v2369, %v2365
    %v2371 = vlaneseq
    %v2372 = vshrl.u32 %v2371, 7
    %v2373 = vsub.s32 %v2305, %v2372
    %v2374 = vrot.slane %v2286, %v2373
    %v2375 = vlaneseq
    %v2376 = vshrl.u32 %v2375, 7
    %v2377 = vsub.s32 %v2310, %v2376
    %v2378 = vrot.slane %v2287, %v2377
    %v2379 = vsel %vm2315, %v2378, %v2374
    %vm2380 = vcmask 1041409
    %v2381 = vsel %vm2380, %v2325, %v2316
    %vm2382 = vcmask 1042434
    %v2383 = vsel %vm2382, %v2334, %v2381
    %vm2384 = vcmask 1043459
    %v2385 = vsel %vm2384, %v2343, %v2383
    %vm2386 = vcmask 1044484
    %v2387 = vsel %vm2386, %v2352, %v2385
    %vm2388 = vcmask 1045509
    %v2389 = vsel %vm2388, %v2361, %v2387
    %vm2390 = vcmask 1046534
    %v2391 = vsel %vm2390, %v2370, %v2389
    %vm2392 = vcmask 1047559
    %v2393 = vsel %vm2392, %v2379, %v2391
    %vm2395 = vcmask 80896
    %v2396 = vsel %vm2395, %v2393, -inf
    %2397 = vmax.xlane.f32.xlu0 %v2396
    %v2398 = vpop.xlane.xlu0 %2397
    %v2400 = vlaneseq
    %v2401 = vshrl.u32 %v2400, 7
    %v2402 = vsub.s32 0, %v2401
    %v2403 = vrot.slane %v2398, %v2402
    %v2404 = vlaneseq
    %v2405 = vshrl.u32 %v2404, 7
    %v2406 = vsub.s32 1, %v2405
    %v2407 = vrot.slane %v2398, %v2406
    %v2408 = vlaneseq
    %v2409 = vshrl.u32 %v2408, 7
    %v2410 = vsub.s32 2, %v2409
    %v2411 = vrot.slane %v2398, %v2410
    %v2412 = vlaneseq
    %v2413 = vshrl.u32 %v2412, 7
    %v2414 = vsub.s32 3, %v2413
    %v2415 = vrot.slane %v2398, %v2414
    %v2416 = vlaneseq
    %v2417 = vshrl.u32 %v2416, 7
    %v2418 = vsub.s32 4, %v2417
    %v2419 = vrot.slane %v2398, %v2418
    %v2420 = vlaneseq
    %v2421 = vshrl.u32 %v2420, 7
    %v2422 = vsub.s32 5, %v2421
    %v2423 = vrot.slane %v2398, %v2422
    %v2424 = vlaneseq
    %v2425 = vshrl.u32 %v2424, 7
    %v2426 = vsub.s32 6, %v2425
    %v2427 = vrot.slane %v2398, %v2426
    %v2428 = vlaneseq
    %v2429 = vshrl.u32 %v2428, 7
    %v2430 = vsub.s32 7, %v2429
    %v2431 = vrot.slane %v2398, %v2430
    %v2440 = vsub.f32 %v2272, %v2403
    %v2441 = vsub.f32 %v2273, %v2403
    %v2442 = vsub.f32 %v2274, %v2407
    %v2443 = vsub.f32 %v2275, %v2407
    %v2444 = vsub.f32 %v2276, %v2411
    %v2445 = vsub.f32 %v2277, %v2411
    %v2446 = vsub.f32 %v2278, %v2415
    %v2447 = vsub.f32 %v2279, %v2415
    %v2448 = vsub.f32 %v2280, %v2419
    %v2449 = vsub.f32 %v2281, %v2419
    %v2450 = vsub.f32 %v2282, %v2423
    %v2451 = vsub.f32 %v2283, %v2423
    %v2452 = vsub.f32 %v2284, %v2427
    %v2453 = vsub.f32 %v2285, %v2427
    %v2454 = vsub.f32 %v2286, %v2431
    %v2455 = vsub.f32 %v2287, %v2431
    %v2456 = vmul.f32 %v2440, 1.442695
    %v2457 = vpow.pop %v2456
    %v2458 = vmul.f32 %v2441, 1.442695
    %v2459 = vpow.pop %v2458
    %v2460 = vmul.f32 %v2442, 1.442695
    %v2461 = vpow.pop %v2460
    %v2462 = vmul.f32 %v2443, 1.442695
    %v2463 = vpow.pop %v2462
    %v2464 = vmul.f32 %v2444, 1.442695
    %v2465 = vpow.pop %v2464
    %v2466 = vmul.f32 %v2445, 1.442695
    %v2467 = vpow.pop %v2466
    %v2468 = vmul.f32 %v2446, 1.442695
    %v2469 = vpow.pop %v2468
    %v2470 = vmul.f32 %v2447, 1.442695
    %v2471 = vpow.pop %v2470
    %v2472 = vmul.f32 %v2448, 1.442695
    %v2473 = vpow.pop %v2472
    %v2474 = vmul.f32 %v2449, 1.442695
    %v2475 = vpow.pop %v2474
    %v2476 = vmul.f32 %v2450, 1.442695
    %v2477 = vpow.pop %v2476
    %v2478 = vmul.f32 %v2451, 1.442695
    %v2479 = vpow.pop %v2478
    %v2480 = vmul.f32 %v2452, 1.442695
    %v2481 = vpow.pop %v2480
    %v2482 = vmul.f32 %v2453, 1.442695
    %v2483 = vpow.pop %v2482
    %v2484 = vmul.f32 %v2454, 1.442695
    %v2485 = vpow.pop %v2484
    %v2486 = vmul.f32 %v2455, 1.442695
    %v2487 = vpow.pop %v2486
    %2504 = vset.pattern.permute.xlu0 0
    %2505 = vperm.xlu0 %2504, %v2457
    %v2506 = vpop.permute.xlu0 %2505
    %2507 = vset.pattern.permute.xlu0 0
    %2508 = vperm.xlu0 %2507, %v2459
    %v2509 = vpop.permute.xlu0 %2508
    %2510 = vset.pattern.permute.xlu0 0
    %2511 = vperm.xlu0 %2510, %v2461
    %v2512 = vpop.permute.xlu0 %2511
    %2513 = vset.pattern.permute.xlu0 0
    %2514 = vperm.xlu0 %2513, %v2463
    %v2515 = vpop.permute.xlu0 %2514
    %2516 = vset.pattern.permute.xlu0 0
    %2517 = vperm.xlu0 %2516, %v2465
    %v2518 = vpop.permute.xlu0 %2517
    %2519 = vset.pattern.permute.xlu0 0
    %2520 = vperm.xlu0 %2519, %v2467
    %v2521 = vpop.permute.xlu0 %2520
    %2522 = vset.pattern.permute.xlu0 0
    %2523 = vperm.xlu0 %2522, %v2469
    %v2524 = vpop.permute.xlu0 %2523
    %2525 = vset.pattern.permute.xlu0 0
    %2526 = vperm.xlu0 %2525, %v2471
    %v2527 = vpop.permute.xlu0 %2526
    %2528 = vset.pattern.permute.xlu0 0
    %2529 = vperm.xlu0 %2528, %v2473
    %v2530 = vpop.permute.xlu0 %2529
    %2531 = vset.pattern.permute.xlu0 0
    %2532 = vperm.xlu0 %2531, %v2475
    %v2533 = vpop.permute.xlu0 %2532
    %2534 = vset.pattern.permute.xlu0 0
    %2535 = vperm.xlu0 %2534, %v2477
    %v2536 = vpop.permute.xlu0 %2535
    %2537 = vset.pattern.permute.xlu0 0
    %2538 = vperm.xlu0 %2537, %v2479
    %v2539 = vpop.permute.xlu0 %2538
    %2540 = vset.pattern.permute.xlu0 0
    %2541 = vperm.xlu0 %2540, %v2481
    %v2542 = vpop.permute.xlu0 %2541
    %2543 = vset.pattern.permute.xlu0 0
    %2544 = vperm.xlu0 %2543, %v2483
    %v2545 = vpop.permute.xlu0 %2544
    %2546 = vset.pattern.permute.xlu0 0
    %2547 = vperm.xlu0 %2546, %v2485
    %v2548 = vpop.permute.xlu0 %2547
    %2549 = vset.pattern.permute.xlu0 0
    %2550 = vperm.xlu0 %2549, %v2487
    %v2551 = vpop.permute.xlu0 %2550
    %v2552 = vlaneseq
    %v2553 = vshrl.u32 %v2552, 7
    %v2554 = vsub.s32 %v2305, %v2553
    %v2555 = vrot.slane %v2506, %v2554
    %v2556 = vlaneseq
    %v2557 = vshrl.u32 %v2556, 7
    %v2558 = vsub.s32 %v2310, %v2557
    %v2559 = vrot.slane %v2509, %v2558
    %v2560 = vsel %vm2315, %v2559, %v2555
    %v2561 = vlaneseq
    %v2562 = vshrl.u32 %v2561, 7
    %v2563 = vsub.s32 %v2305, %v2562
    %v2564 = vrot.slane %v2512, %v2563
    %v2565 = vlaneseq
    %v2566 = vshrl.u32 %v2565, 7
    %v2567 = vsub.s32 %v2310, %v2566
    %v2568 = vrot.slane %v2515, %v2567
    %v2569 = vsel %vm2315, %v2568, %v2564
    %v2570 = vlaneseq
    %v2571 = vshrl.u32 %v2570, 7
    %v2572 = vsub.s32 %v2305, %v2571
    %v2573 = vrot.slane %v2518, %v2572
    %v2574 = vlaneseq
    %v2575 = vshrl.u32 %v2574, 7
    %v2576 = vsub.s32 %v2310, %v2575
    %v2577 = vrot.slane %v2521, %v2576
    %v2578 = vsel %vm2315, %v2577, %v2573
    %v2579 = vlaneseq
    %v2580 = vshrl.u32 %v2579, 7
    %v2581 = vsub.s32 %v2305, %v2580
    %v2582 = vrot.slane %v2524, %v2581
    %v2583 = vlaneseq
    %v2584 = vshrl.u32 %v2583, 7
    %v2585 = vsub.s32 %v2310, %v2584
    %v2586 = vrot.slane %v2527, %v2585
    %v2587 = vsel %vm2315, %v2586, %v2582
    %v2588 = vlaneseq
    %v2589 = vshrl.u32 %v2588, 7
    %v2590 = vsub.s32 %v2305, %v2589
    %v2591 = vrot.slane %v2530, %v2590
    %v2592 = vlaneseq
    %v2593 = vshrl.u32 %v2592, 7
    %v2594 = vsub.s32 %v2310, %v2593
    %v2595 = vrot.slane %v2533, %v2594
    %v2596 = vsel %vm2315, %v2595, %v2591
    %v2597 = vlaneseq
    %v2598 = vshrl.u32 %v2597, 7
    %v2599 = vsub.s32 %v2305, %v2598
    %v2600 = vrot.slane %v2536, %v2599
    %v2601 = vlaneseq
    %v2602 = vshrl.u32 %v2601, 7
    %v2603 = vsub.s32 %v2310, %v2602
    %v2604 = vrot.slane %v2539, %v2603
    %v2605 = vsel %vm2315, %v2604, %v2600
    %v2606 = vlaneseq
    %v2607 = vshrl.u32 %v2606, 7
    %v2608 = vsub.s32 %v2305, %v2607
    %v2609 = vrot.slane %v2542, %v2608
    %v2610 = vlaneseq
    %v2611 = vshrl.u32 %v2610, 7
    %v2612 = vsub.s32 %v2310, %v2611
    %v2613 = vrot.slane %v2545, %v2612
    %v2614 = vsel %vm2315, %v2613, %v2609
    %v2615 = vlaneseq
    %v2616 = vshrl.u32 %v2615, 7
    %v2617 = vsub.s32 %v2305, %v2616
    %v2618 = vrot.slane %v2548, %v2617
    %v2619 = vlaneseq
    %v2620 = vshrl.u32 %v2619, 7
    %v2621 = vsub.s32 %v2310, %v2620
    %v2622 = vrot.slane %v2551, %v2621
    %v2623 = vsel %vm2315, %v2622, %v2618
    %v2624 = vsel %vm2380, %v2569, %v2560
    %v2625 = vsel %vm2382, %v2578, %v2624
    %v2626 = vsel %vm2384, %v2587, %v2625
    %v2627 = vsel %vm2386, %v2596, %v2626
    %v2628 = vsel %vm2388, %v2605, %v2627
    %v2629 = vsel %vm2390, %v2614, %v2628
    %v2630 = vsel %vm2392, %v2623, %v2629
    %v2632 = vsel %vm2395, %v2630, 0.0
    %2633 = vadd.xlane.f32.xlu0 %v2632
    %v2634 = vpop.xlane.xlu0 %2633
    %v2635 = vrcp.pop %v2634
    %v2637 = vlaneseq
    %v2638 = vshrl.u32 %v2637, 7
    %v2639 = vsub.s32 0, %v2638
    %v2640 = vrot.slane %v2635, %v2639
    %v2641 = vlaneseq
    %v2642 = vshrl.u32 %v2641, 7
    %v2643 = vsub.s32 1, %v2642
    %v2644 = vrot.slane %v2635, %v2643
    %v2645 = vlaneseq
    %v2646 = vshrl.u32 %v2645, 7
    %v2647 = vsub.s32 2, %v2646
    %v2648 = vrot.slane %v2635, %v2647
    %v2649 = vlaneseq
    %v2650 = vshrl.u32 %v2649, 7
    %v2651 = vsub.s32 3, %v2650
    %v2652 = vrot.slane %v2635, %v2651
    %v2653 = vlaneseq
    %v2654 = vshrl.u32 %v2653, 7
    %v2655 = vsub.s32 4, %v2654
    %v2656 = vrot.slane %v2635, %v2655
    %v2657 = vlaneseq
    %v2658 = vshrl.u32 %v2657, 7
    %v2659 = vsub.s32 5, %v2658
    %v2660 = vrot.slane %v2635, %v2659
    %v2661 = vlaneseq
    %v2662 = vshrl.u32 %v2661, 7
    %v2663 = vsub.s32 6, %v2662
    %v2664 = vrot.slane %v2635, %v2663
    %v2665 = vlaneseq
    %v2666 = vshrl.u32 %v2665, 7
    %v2667 = vsub.s32 7, %v2666
    %v2668 = vrot.slane %v2635, %v2667
    %v2677 = vmul.f32 %v2457, %v2640
    %v2678 = vmul.f32 %v2459, %v2640
    %v2679 = vmul.f32 %v2461, %v2644
    %v2680 = vmul.f32 %v2463, %v2644
    %v2681 = vmul.f32 %v2465, %v2648
    %v2682 = vmul.f32 %v2467, %v2648
    %v2683 = vmul.f32 %v2469, %v2652
    %v2684 = vmul.f32 %v2471, %v2652
    %v2685 = vmul.f32 %v2473, %v2656
    %v2686 = vmul.f32 %v2475, %v2656
    %v2687 = vmul.f32 %v2477, %v2660
    %v2688 = vmul.f32 %v2479, %v2660
    %v2689 = vmul.f32 %v2481, %v2664
    %v2690 = vmul.f32 %v2483, %v2664
    %v2691 = vmul.f32 %v2485, %v2668
    %v2692 = vmul.f32 %v2487, %v2668
    %2709 = vset.pattern.permute.xlu0 0
    %2710 = vperm.xlu0 %2709, %v2677
    %v2711 = vpop.permute.xlu0 %2710
    %2712 = vset.pattern.permute.xlu0 0
    %2713 = vperm.xlu0 %2712, %v2678
    %v2714 = vpop.permute.xlu0 %2713
    %2715 = vset.pattern.permute.xlu0 0
    %2716 = vperm.xlu0 %2715, %v2679
    %v2717 = vpop.permute.xlu0 %2716
    %2718 = vset.pattern.permute.xlu0 0
    %2719 = vperm.xlu0 %2718, %v2680
    %v2720 = vpop.permute.xlu0 %2719
    %2721 = vset.pattern.permute.xlu0 0
    %2722 = vperm.xlu0 %2721, %v2681
    %v2723 = vpop.permute.xlu0 %2722
    %2724 = vset.pattern.permute.xlu0 0
    %2725 = vperm.xlu0 %2724, %v2682
    %v2726 = vpop.permute.xlu0 %2725
    %2727 = vset.pattern.permute.xlu0 0
    %2728 = vperm.xlu0 %2727, %v2683
    %v2729 = vpop.permute.xlu0 %2728
    %2730 = vset.pattern.permute.xlu0 0
    %2731 = vperm.xlu0 %2730, %v2684
    %v2732 = vpop.permute.xlu0 %2731
    %2733 = vset.pattern.permute.xlu0 0
    %2734 = vperm.xlu0 %2733, %v2685
    %v2735 = vpop.permute.xlu0 %2734
    %2736 = vset.pattern.permute.xlu0 0
    %2737 = vperm.xlu0 %2736, %v2686
    %v2738 = vpop.permute.xlu0 %2737
    %2739 = vset.pattern.permute.xlu0 0
    %2740 = vperm.xlu0 %2739, %v2687
    %v2741 = vpop.permute.xlu0 %2740
    %2742 = vset.pattern.permute.xlu0 0
    %2743 = vperm.xlu0 %2742, %v2688
    %v2744 = vpop.permute.xlu0 %2743
    %2745 = vset.pattern.permute.xlu0 0
    %2746 = vperm.xlu0 %2745, %v2689
    %v2747 = vpop.permute.xlu0 %2746
    %2748 = vset.pattern.permute.xlu0 0
    %2749 = vperm.xlu0 %2748, %v2690
    %v2750 = vpop.permute.xlu0 %2749
    %2751 = vset.pattern.permute.xlu0 0
    %2752 = vperm.xlu0 %2751, %v2691
    %v2753 = vpop.permute.xlu0 %2752
    %2754 = vset.pattern.permute.xlu0 0
    %2755 = vperm.xlu0 %2754, %v2692
    %v2756 = vpop.permute.xlu0 %2755
    %v2757 = vlaneseq
    %v2758 = vshrl.u32 %v2757, 7
    %v2759 = vsub.s32 %v2305, %v2758
    %v2760 = vrot.slane %v2711, %v2759
    %v2761 = vlaneseq
    %v2762 = vshrl.u32 %v2761, 7
    %v2763 = vsub.s32 %v2310, %v2762
    %v2764 = vrot.slane %v2714, %v2763
    %v2765 = vsel %vm2315, %v2764, %v2760
    %v2766 = vlaneseq
    %v2767 = vshrl.u32 %v2766, 7
    %v2768 = vsub.s32 %v2305, %v2767
    %v2769 = vrot.slane %v2717, %v2768
    %v2770 = vlaneseq
    %v2771 = vshrl.u32 %v2770, 7
    %v2772 = vsub.s32 %v2310, %v2771
    %v2773 = vrot.slane %v2720, %v2772
    %v2774 = vsel %vm2315, %v2773, %v2769
    %v2775 = vlaneseq
    %v2776 = vshrl.u32 %v2775, 7
    %v2777 = vsub.s32 %v2305, %v2776
    %v2778 = vrot.slane %v2723, %v2777
    %v2779 = vlaneseq
    %v2780 = vshrl.u32 %v2779, 7
    %v2781 = vsub.s32 %v2310, %v2780
    %v2782 = vrot.slane %v2726, %v2781
    %v2783 = vsel %vm2315, %v2782, %v2778
    %v2784 = vlaneseq
    %v2785 = vshrl.u32 %v2784, 7
    %v2786 = vsub.s32 %v2305, %v2785
    %v2787 = vrot.slane %v2729, %v2786
    %v2788 = vlaneseq
    %v2789 = vshrl.u32 %v2788, 7
    %v2790 = vsub.s32 %v2310, %v2789
    %v2791 = vrot.slane %v2732, %v2790
    %v2792 = vsel %vm2315, %v2791, %v2787
    %v2793 = vlaneseq
    %v2794 = vshrl.u32 %v2793, 7
    %v2795 = vsub.s32 %v2305, %v2794
    %v2796 = vrot.slane %v2735, %v2795
    %v2797 = vlaneseq
    %v2798 = vshrl.u32 %v2797, 7
    %v2799 = vsub.s32 %v2310, %v2798
    %v2800 = vrot.slane %v2738, %v2799
    %v2801 = vsel %vm2315, %v2800, %v2796
    %v2802 = vlaneseq
    %v2803 = vshrl.u32 %v2802, 7
    %v2804 = vsub.s32 %v2305, %v2803
    %v2805 = vrot.slane %v2741, %v2804
    %v2806 = vlaneseq
    %v2807 = vshrl.u32 %v2806, 7
    %v2808 = vsub.s32 %v2310, %v2807
    %v2809 = vrot.slane %v2744, %v2808
    %v2810 = vsel %vm2315, %v2809, %v2805
    %v2811 = vlaneseq
    %v2812 = vshrl.u32 %v2811, 7
    %v2813 = vsub.s32 %v2305, %v2812
    %v2814 = vrot.slane %v2747, %v2813
    %v2815 = vlaneseq
    %v2816 = vshrl.u32 %v2815, 7
    %v2817 = vsub.s32 %v2310, %v2816
    %v2818 = vrot.slane %v2750, %v2817
    %v2819 = vsel %vm2315, %v2818, %v2814
    %v2820 = vlaneseq
    %v2821 = vshrl.u32 %v2820, 7
    %v2822 = vsub.s32 %v2305, %v2821
    %v2823 = vrot.slane %v2753, %v2822
    %v2824 = vlaneseq
    %v2825 = vshrl.u32 %v2824, 7
    %v2826 = vsub.s32 %v2310, %v2825
    %v2827 = vrot.slane %v2756, %v2826
    %v2828 = vsel %vm2315, %v2827, %v2823
    %v2829 = vsel %vm2380, %v2774, %v2765
    %v2830 = vsel %vm2382, %v2783, %v2829
    %v2831 = vsel %vm2384, %v2792, %v2830
    %v2832 = vsel %vm2386, %v2801, %v2831
    %v2833 = vsel %vm2388, %v2810, %v2832
    %v2834 = vsel %vm2390, %v2819, %v2833
    %v2835 = vsel %vm2392, %v2828, %v2834
    %v2836 = vsel %vm2395, %v2835, 0
    %v2839 = vsel %vm264, %v2065, 0
    %2841 = vmatprep.subr.mxu0 0.0
    %2842 = vmatpush1.msra.mxu0 %v2060
    %2843 = vmatprep.subr.mxu0 0.0
    %2844 = vmatpush1.msra.mxu0 %v2839
    %2845 = vmatprep.subr.mxu0 0.0
    %2846 = vmatpush1.msra.mxu0 0.0
    %2847 = vmatprep.subr.mxu0 0.0
    %2848 = vmatpush1.msra.mxu0 0.0
    %2849 = vmatprep.subr.mxu0 0.0
    %2850 = vmatpush1.msra.mxu0 0.0
    %2851 = vmatprep.subr.mxu0 0.0
    %2852 = vmatpush1.msra.mxu0 0.0
    %2853 = vmatprep.subr.mxu0 0.0
    %2854 = vmatpush1.msra.mxu0 0.0
    %2855 = vmatprep.subr.mxu0 0.0
    %2856 = vmatpush1.msra.mxu0 0.0
    %2857 = vmatprep.subr.mxu0 0.0
    %2858 = vmatpush1.msra.mxu0 0.0
    %2859 = vmatprep.subr.mxu0 0.0
    %2860 = vmatpush1.msra.mxu0 0.0
    %2861 = vmatprep.subr.mxu0 0.0
    %2862 = vmatpush1.msra.mxu0 0.0
    %2863 = vmatprep.subr.mxu0 0.0
    %2864 = vmatpush1.msra.mxu0 0.0
    %2865 = vmatprep.subr.mxu0 0.0
    %2866 = vmatpush1.msra.mxu0 0.0
    %2867 = vmatprep.subr.mxu0 0.0
    %2868 = vmatpush1.msra.mxu0 0.0
    %2869 = vmatprep.subr.mxu0 0.0
    %2870 = vmatpush1.msra.mxu0 0.0
    %2871 = vmatprep.subr.mxu0 0.0
    %2872 = vmatpush1.msra.mxu0 0.0
    %2873 = vmatprep.subr.mxu0 0.0
    %2874 = vmatpush1.msra.mxu0 0.0
    %2875 = vmatprep.subr.mxu0 0.0
    %2876 = vmatpush1.msra.mxu0 0.0
    %2877 = vmatprep.subr.mxu0 0.0
    %2878 = vmatpush1.msra.mxu0 0.0
    %2879 = vmatprep.subr.mxu0 0.0
    %2880 = vmatpush1.msra.mxu0 0.0
    %2881 = vmatprep.subr.mxu0 0.0
    %2882 = vmatpush1.msra.mxu0 0.0
    %2883 = vmatprep.subr.mxu0 0.0
    %2884 = vmatpush1.msra.mxu0 0.0
    %2885 = vmatprep.subr.mxu0 0.0
    %2886 = vmatpush1.msra.mxu0 0.0
    %2887 = vmatprep.subr.mxu0 0.0
    %2888 = vmatpush1.msra.mxu0 0.0
    %2889 = vmatprep.subr.mxu0 0.0
    %2890 = vmatpush1.msra.mxu0 0.0
    %2891 = vmatprep.subr.mxu0 0.0
    %2892 = vmatpush1.msra.mxu0 0.0
    %2893 = vmatprep.subr.mxu0 0.0
    %2894 = vmatpush1.msra.mxu0 0.0
    %2895 = vmatprep.subr.mxu0 0.0
    %2896 = vmatpush1.msra.mxu0 0.0
    %2897 = vmatprep.subr.mxu0 0.0
    %2898 = vmatpush1.msra.mxu0 0.0
    %2899 = vmatprep.subr.mxu0 0.0
    %2900 = vmatpush1.msra.mxu0 0.0
    %2901 = vmatprep.subr.mxu0 0.0
    %2902 = vmatpush1.msra.mxu0 0.0
    %2903 = vmatprep.subr.mxu0 0.0
    %2904 = vmatpush1.msra.mxu0 0.0
    %2905 = vmatprep.mubr.f32.mxu0 0.0
    %2906 = vmatmul.mubr.f32.gmra.mrb[0].mxu0 %v2836
    %v2907 = vpop.f32.mrb[0].mxu0
    %v2908 = vadd.f32 0.0, %v2907
    %v2909 = vpop.f32.mrb[0].mxu0
    %2910 = vdwg.mxu0
    %v2911 = vld [vmem:[%s19] sm:$0xff]
    %v2912 = vld [vmem:[%s19 + $0x8] sm:$0xff]
    %v2913 = vld [vmem:[%s19 + $0x10] sm:$0xff]
    %v2914 = vld [vmem:[%s19 + $0x18] sm:$0xff]
    %v2915 = vld [vmem:[%s20] sm:$0x1]
    %v2917 = vlaneseq
    %v2918 = vshrl.u32 %v2917, 7
    %v2919 = vsub.s32 0, %v2918
    %v2920 = vrot.slane %v2915, %v2919
    %v2923 = vsel %vm1902, %v2908, 0
    %2925 = vmatprep.subr.mxu0 0.0
    %2926 = vmatpush1.msra.mxu0 %v2911
    %2927 = vmatprep.subr.mxu0 0.0
    %2928 = vmatpush1.msra.mxu0 %v2912
    %2929 = vmatprep.subr.mxu0 0.0
    %2930 = vmatpush1.msra.mxu0 %v2913
    %2931 = vmatprep.subr.mxu0 0.0
    %2932 = vmatpush1.msra.mxu0 %v2914
    %2933 = vmatprep.subr.mxu0 0.0
    %2934 = vmatpush1.msra.mxu0 0.0
    %2935 = vmatprep.subr.mxu0 0.0
    %2936 = vmatpush1.msra.mxu0 0.0
    %2937 = vmatprep.subr.mxu0 0.0
    %2938 = vmatpush1.msra.mxu0 0.0
    %2939 = vmatprep.subr.mxu0 0.0
    %2940 = vmatpush1.msra.mxu0 0.0
    %2941 = vmatprep.subr.mxu0 0.0
    %2942 = vmatpush1.msra.mxu0 0.0
    %2943 = vmatprep.subr.mxu0 0.0
    %2944 = vmatpush1.msra.mxu0 0.0
    %2945 = vmatprep.subr.mxu0 0.0
    %2946 = vmatpush1.msra.mxu0 0.0
    %2947 = vmatprep.subr.mxu0 0.0
    %2948 = vmatpush1.msra.mxu0 0.0
    %2949 = vmatprep.subr.mxu0 0.0
    %2950 = vmatpush1.msra.mxu0 0.0
    %2951 = vmatprep.subr.mxu0 0.0
    %2952 = vmatpush1.msra.mxu0 0.0
    %2953 = vmatprep.subr.mxu0 0.0
    %2954 = vmatpush1.msra.mxu0 0.0
    %2955 = vmatprep.subr.mxu0 0.0
    %2956 = vmatpush1.msra.mxu0 0.0
    %2957 = vmatprep.subr.mxu0 0.0
    %2958 = vmatpush1.msra.mxu0 0.0
    %2959 = vmatprep.subr.mxu0 0.0
    %2960 = vmatpush1.msra.mxu0 0.0
    %2961 = vmatprep.subr.mxu0 0.0
    %2962 = vmatpush1.msra.mxu0 0.0
    %2963 = vmatprep.subr.mxu0 0.0
    %2964 = vmatpush1.msra.mxu0 0.0
    %2965 = vmatprep.subr.mxu0 0.0
    %2966 = vmatpush1.msra.mxu0 0.0
    %2967 = vmatprep.subr.mxu0 0.0
    %2968 = vmatpush1.msra.mxu0 0.0
    %2969 = vmatprep.subr.mxu0 0.0
    %2970 = vmatpush1.msra.mxu0 0.0
    %2971 = vmatprep.subr.mxu0 0.0
    %2972 = vmatpush1.msra.mxu0 0.0
    %2973 = vmatprep.subr.mxu0 0.0
    %2974 = vmatpush1.msra.mxu0 0.0
    %2975 = vmatprep.subr.mxu0 0.0
    %2976 = vmatpush1.msra.mxu0 0.0
    %2977 = vmatprep.subr.mxu0 0.0
    %2978 = vmatpush1.msra.mxu0 0.0
    %2979 = vmatprep.subr.mxu0 0.0
    %2980 = vmatpush1.msra.mxu0 0.0
    %2981 = vmatprep.subr.mxu0 0.0
    %2982 = vmatpush1.msra.mxu0 0.0
    %2983 = vmatprep.subr.mxu0 0.0
    %2984 = vmatpush1.msra.mxu0 0.0
    %2985 = vmatprep.subr.mxu0 0.0
    %2986 = vmatpush1.msra.mxu0 0.0
    %2987 = vmatprep.subr.mxu0 0.0
    %2988 = vmatpush1.msra.mxu0 0.0
    %2989 = vmatprep.mubr.f32.mxu0 0.0
    %2990 = vmatmul.mubr.f32.gmra.mrb[0].mxu0 %v2923
    %v2991 = vpop.f32.mrb[0].mxu0
    %v2992 = vadd.f32 %v2920, %v2991
    %v2993 = vpop.f32.mrb[0].mxu0
    %2994 = vdwg.mxu0
    %2995 = vst.msk [vmem:[#allocation31] sm:$0xff] %vm2395, %v2992
    %v2996 = vld [vmem:[#allocation28] sm:$0xff]
    %v2997 = vld [vmem:[#allocation28 + $0x8] sm:$0xff]
    %v2998 = vld [vmem:[#allocation28 + $0x10] sm:$0xff]
    %v2999 = vld [vmem:[#allocation28 + $0x18] sm:$0xff]
    %v3000 = vld [vmem:[%s18] sm:$0x1]
    %v3002 = vlaneseq
    %v3003 = vshrl.u32 %v3002, 7
    %v3004 = vsub.s32 0, %v3003
    %v3005 = vrot.slane %v3000, %v3004
    %3007 = vmatprep.subr.mxu0 0.0
    %3008 = vmatpush1.msra.mxu0 %v2996
    %3009 = vmatprep.subr.mxu0 0.0
    %3010 = vmatpush1.msra.mxu0 %v2997
    %3011 = vmatprep.subr.mxu0 0.0
    %3012 = vmatpush1.msra.mxu0 %v2998
    %3013 = vmatprep.subr.mxu0 0.0
    %3014 = vmatpush1.msra.mxu0 %v2999
    %3015 = vmatprep.subr.mxu0 0.0
    %3016 = vmatpush1.msra.mxu0 0.0
    %3017 = vmatprep.subr.mxu0 0.0
    %3018 = vmatpush1.msra.mxu0 0.0
    %3019 = vmatprep.subr.mxu0 0.0
    %3020 = vmatpush1.msra.mxu0 0.0
    %3021 = vmatprep.subr.mxu0 0.0
    %3022 = vmatpush1.msra.mxu0 0.0
    %3023 = vmatprep.subr.mxu0 0.0
    %3024 = vmatpush1.msra.mxu0 0.0
    %3025 = vmatprep.subr.mxu0 0.0
    %3026 = vmatpush1.msra.mxu0 0.0
    %3027 = vmatprep.subr.mxu0 0.0
    %3028 = vmatpush1.msra.mxu0 0.0
    %3029 = vmatprep.subr.mxu0 0.0
    %3030 = vmatpush1.msra.mxu0 0.0
    %3031 = vmatprep.subr.mxu0 0.0
    %3032 = vmatpush1.msra.mxu0 0.0
    %3033 = vmatprep.subr.mxu0 0.0
    %3034 = vmatpush1.msra.mxu0 0.0
    %3035 = vmatprep.subr.mxu0 0.0
    %3036 = vmatpush1.msra.mxu0 0.0
    %3037 = vmatprep.subr.mxu0 0.0
    %3038 = vmatpush1.msra.mxu0 0.0
    %3039 = vmatprep.subr.mxu0 0.0
    %3040 = vmatpush1.msra.mxu0 0.0
    %3041 = vmatprep.subr.mxu0 0.0
    %3042 = vmatpush1.msra.mxu0 0.0
    %3043 = vmatprep.subr.mxu0 0.0
    %3044 = vmatpush1.msra.mxu0 0.0
    %3045 = vmatprep.subr.mxu0 0.0
    %3046 = vmatpush1.msra.mxu0 0.0
    %3047 = vmatprep.subr.mxu0 0.0
    %3048 = vmatpush1.msra.mxu0 0.0
    %3049 = vmatprep.subr.mxu0 0.0
    %3050 = vmatpush1.msra.mxu0 0.0
    %3051 = vmatprep.subr.mxu0 0.0
    %3052 = vmatpush1.msra.mxu0 0.0
    %3053 = vmatprep.subr.mxu0 0.0
    %3054 = vmatpush1.msra.mxu0 0.0
    %3055 = vmatprep.subr.mxu0 0.0
    %3056 = vmatpush1.msra.mxu0 0.0
    %3057 = vmatprep.subr.mxu0 0.0
    %3058 = vmatpush1.msra.mxu0 0.0
    %3059 = vmatprep.subr.mxu0 0.0
    %3060 = vmatpush1.msra.mxu0 0.0
    %3061 = vmatprep.subr.mxu0 0.0
    %3062 = vmatpush1.msra.mxu0 0.0
    %3063 = vmatprep.subr.mxu0 0.0
    %3064 = vmatpush1.msra.mxu0 0.0
    %3065 = vmatprep.subr.mxu0 0.0
    %3066 = vmatpush1.msra.mxu0 0.0
    %3067 = vmatprep.subr.mxu0 0.0
    %3068 = vmatpush1.msra.mxu0 0.0
    %3069 = vmatprep.subr.mxu0 0.0
    %3070 = vmatpush1.msra.mxu0 0.0
    %3071 = vmatprep.mubr.f32.mxu0 0.0
    %3072 = vmatmul.mubr.f32.gmra.mrb[0].mxu0 %v1988
    %v3073 = vpop.f32.mrb[0].mxu0
    %v3074 = vadd.f32 %v3005, %v3073
    %v3075 = vpop.f32.mrb[0].mxu0
    %3076 = vmatprep.mubr.f32.mxu0 0.0
    %3077 = vmatmul.mubr.f32.gmra.mrb[0].mxu0 %v1991
    %v3078 = vpop.f32.mrb[0].mxu0
    %v3079 = vadd.f32 %v3005, %v3078
    %v3080 = vpop.f32.mrb[0].mxu0
    %3081 = vdwg.mxu0
    %3082 = vst.msk [vmem:[#allocation30] sm:$0xff] %vm435, %v3074
    %vm3083 = vcmask 238592
    %3084 = vst.msk [vmem:[#allocation30 + $0x8] sm:$0x3] %vm3083, %v3079
    // Predicated region
    $region146: #{tpu_custom_call.1} parent=1 // pred_check
      _
    $region147: #{tpu_custom_call.1} parent=1 // pred_check_branch
      %3086 = sbr.rel (0) target = $region149
    $region148: #{tpu_custom_call.1} parent=1 // pred_region
      %s3088 = ssub.s32 256, 256
      %3089 = vsyncadd [#allocation7], %s3088
      %s3090 = sshll.u32 [#allocation30], 4
      %s3091 = int_to_ptr.vmem [resolvable:$true] %s3090
      %3096 = dma.vmem_to_hbm [thread:$0]  %s3091, 256, %s21, [#allocation7], 128, 128, 8
    $region149: #{tpu_custom_call.1} parent=1 // pred_fallthru
      _
    // Predicated region
    $region150: #{tpu_custom_call.1} parent=1 // pred_check
      _
    $region151: #{tpu_custom_call.1} parent=1 // pred_check_branch
      %3098 = sbr.rel (0) target = $region153
    $region152: #{tpu_custom_call.1} parent=1 // pred_region
      %s3100 = ssub.s32 128, 128
      %3101 = vsyncadd [#allocation32], %s3100
      %s3103 = sshll.u32 [#allocation31], 4
      %s3104 = int_to_ptr.vmem [resolvable:$true] %s3103
      %3106 = dma.vmem_to_hbm [thread:$0]  %s3104, 128, %s22, [#allocation32]
    $region153: #{tpu_custom_call.1} parent=1 // pred_fallthru
      _
    // Predicated region
    $region154: #{tpu_custom_call.1} parent=1 // pred_check
      _
    $region155: #{tpu_custom_call.1} parent=1 // pred_check_branch
      %3108 = sbr.rel (0) target = $region157
    $region156: #{tpu_custom_call.1} parent=1 // pred_region
      %3109 = dma.done [#allocation7], 256
    $region157: #{tpu_custom_call.1} parent=1 // pred_fallthru
      _
    // Predicated region
    $region158: #{tpu_custom_call.1} parent=1 // pred_check
      _
    $region159: #{tpu_custom_call.1} parent=1 // pred_check_branch
      %3111 = sbr.rel (0) target = $region161
    $region160: #{tpu_custom_call.1} parent=1 // pred_region
      %3112 = dma.done [#allocation32], 128
    $region161: #{tpu_custom_call.1} parent=1 // pred_fallthru
      _
    %3113 = vsyncpa [#allocation6], 1
    %3114 = vsyncpa [#allocation10], 1
    %3115 = vsyncpa [#allocation14], 1
    %3116 = vsyncpa [#allocation17], 1
    %3117 = vsyncpa [#allocation20], 1
    %3118 = vsyncpa [#allocation23], 1
    %3119 = vsyncpa [#allocation26], 1
    %3120 = vsyncpa [#allocation29], 1
    %3121 = vsyncpa [#allocation7], 1
    %3122 = vsyncpa [#allocation32], 1
    %3123 = vsyncpa [#allocation8], 1

</llo_original>
